<compile_context>
chip_gen: v7x
topology: tpu7x:2x2x1
jax: 0.10.0
libtpu: 0.0.40
codegen_flags: <defaults>
</compile_context>

<pallas_src>
import functools
import math

import jax
import jax.numpy as jnp
from jax.experimental import pallas as pl
from jax.experimental.pallas import tpu as pltpu


# ----------------------------- fused per-layer kernel -----------------------------


def _rztx_tail(q_in, kv_proj, residual, wq, bq, wo, bo, w1, b1, w2, b2, rw,
               o_ref, *, nhead, activation):
    """Shared tail: q-proj -> per-head attention -> out_proj+ReZero -> FFN+ReZero.

    All arguments (except o_ref) are VMEM-loaded values for ONE batch slice:
      q_in/residual: (S, E), kv_proj: (S, 2E), weights pre-transposed, rw scalar.
    """
    S, E = q_in.shape
    Dh = E // nhead
    scale = 1.0 / math.sqrt(Dh)

    q = jnp.dot(q_in, wq, preferred_element_type=jnp.float32) + bq        # (S, E)
    k = kv_proj[:, :E]                                                    # (S, E)
    v = kv_proj[:, E:]                                                    # (S, E)

    # Per-head attention; heads are contiguous lane slices of width Dh.
    ctx = []
    for h in range(nhead):
        qh = q[:, h * Dh:(h + 1) * Dh]
        kh = k[:, h * Dh:(h + 1) * Dh]
        vh = v[:, h * Dh:(h + 1) * Dh]
        s = jax.lax.dot_general(qh, kh, (((1,), (1,)), ((), ())),
                                preferred_element_type=jnp.float32) * scale   # (S, S)
        m = jnp.max(s, axis=-1, keepdims=True)
        p = jnp.exp(s - m)
        p = p * pl.reciprocal(jnp.sum(p, axis=-1, keepdims=True), approx=True)
        ctx.append(jnp.dot(p, vh, preferred_element_type=jnp.float32))
    attn = jnp.concatenate(ctx, axis=-1)                                   # (S, E)

    # out_proj + ReZero residual (dropout1 = identity in eval mode).
    att_out = residual + rw * (
        jnp.dot(attn, wo, preferred_element_type=jnp.float32) + bo)

    # FFN + ReZero residual (dropout / dropout2 = identity in eval mode).
    h1 = jnp.dot(att_out, w1, preferred_element_type=jnp.float32) + b1
    if activation == "relu":
        h1 = jnp.maximum(h1, 0.0)
    else:  # 'gelu' — exact erf form, matching torch.nn.functional.gelu default
        h1 = jax.nn.gelu(h1, approximate=False)
    out = att_out + rw * (
        jnp.dot(h1, w2, preferred_element_type=jnp.float32) + b2)

    o_ref[...] = out.astype(o_ref.dtype)


def _rztx_encoder_kernel(q_ref, src_ref, wq_ref, bq_ref, wkv_ref, bkv_ref,
                         wo_ref, bo_ref, w1_ref, b1_ref, w2_ref, b2_ref, rw_ref,
                         o_ref, *, nhead, activation):
    src = src_ref[...]                                                      # (S, E)
    kv_proj = (jnp.dot(src, wkv_ref[...], preferred_element_type=jnp.float32)
               + bkv_ref[...])                                              # (S, 2E)
    _rztx_tail(q_ref[...], kv_proj, src,
               wq_ref[...], bq_ref[...], wo_ref[...], bo_ref[...],
               w1_ref[...], b1_ref[...], w2_ref[...], b2_ref[...],
               rw_ref[0, 0], o_ref, nhead=nhead, activation=activation)


def _rztx_decoder_kernel(q_ref, enc_ref, de_ref, wq_ref, bq_ref,
                         wkva_ref, wkvb_ref, bkv_ref,
                         wo_ref, bo_ref, w1_ref, b1_ref, w2_ref, b2_ref, rw_ref,
                         o_ref, *, nhead, activation):
    enc = enc_ref[...]                                                      # (S, E)
    de = de_ref[...]                                                        # (S, E)
    # k/v projection of concat([enc, de], -1) without materializing the concat.
    kv_proj = (jnp.dot(enc, wkva_ref[...], preferred_element_type=jnp.float32)
               + jnp.dot(de, wkvb_ref[...], preferred_element_type=jnp.float32)
               + bkv_ref[...])                                              # (S, 2E)
    # residual = stacked_src[..., :E] = enc
    _rztx_tail(q_ref[...], kv_proj, enc,
               wq_ref[...], bq_ref[...], wo_ref[...], bo_ref[...],
               w1_ref[...], b1_ref[...], w2_ref[...], b2_ref[...],
               rw_ref[0, 0], o_ref, nhead=nhead, activation=activation)


# ----------------------------- kernel wrappers -----------------------------


def _weight_spec(arr):
    return pl.BlockSpec(arr.shape, lambda b: (0,) * arr.ndim)


_SMEM_SPEC = pl.BlockSpec(memory_space=pltpu.MemorySpace.SMEM)


def rztx_encoder_layer(q2d, src2d, p, nhead, activation, seq_len):
    """Fused RZTX layer, kdim = E.  q2d/src2d: (B*S, E) batch-major flat."""
    M, E = q2d.shape
    B = M // seq_len
    row = pl.BlockSpec((seq_len, E), lambda b: (b, 0))
    kernel = functools.partial(_rztx_encoder_kernel, nhead=nhead, activation=activation)
    return pl.pallas_call(
        kernel,
        out_shape=jax.ShapeDtypeStruct((M, E), q2d.dtype),
        grid=(B,),
        in_specs=[
            row, row,
            _weight_spec(p["wq_t"]), _weight_spec(p["bq"]),
            _weight_spec(p["wkv_t"]), _weight_spec(p["bkv"]),
            _weight_spec(p["wo_t"]), _weight_spec(p["bo"]),
            _weight_spec(p["w1_t"]), _weight_spec(p["b1"]),
            _weight_spec(p["w2_t"]), _weight_spec(p["b2"]),
            _SMEM_SPEC,
        ],
        out_specs=row,
        compiler_params=pltpu.CompilerParams(dimension_semantics=("parallel",)),
    )(q2d, src2d, p["wq_t"], p["bq"], p["wkv_t"], p["bkv"],
      p["wo_t"], p["bo"], p["w1_t"], p["b1"], p["w2_t"], p["b2"], p["rw"])


def rztx_decoder_layer(q2d, enc2d, de2d, p, nhead, activation, seq_len):
    """Fused RZTX layer, kdim = 2E, skip-concat folded into split-weight matmuls."""
    M, E = q2d.shape
    B = M // seq_len
    row = pl.BlockSpec((seq_len, E), lambda b: (b, 0))
    kernel = functools.partial(_rztx_decoder_kernel, nhead=nhead, activation=activation)
    return pl.pallas_call(
        kernel,
        out_shape=jax.ShapeDtypeStruct((M, E), q2d.dtype),
        grid=(B,),
        in_specs=[
            row, row, row,
            _weight_spec(p["wq_t"]), _weight_spec(p["bq"]),
            _weight_spec(p["wkv_a_t"]), _weight_spec(p["wkv_b_t"]),
            _weight_spec(p["bkv"]),
            _weight_spec(p["wo_t"]), _weight_spec(p["bo"]),
            _weight_spec(p["w1_t"]), _weight_spec(p["b1"]),
            _weight_spec(p["w2_t"]), _weight_spec(p["b2"]),
            _SMEM_SPEC,
        ],
        out_specs=row,
        compiler_params=pltpu.CompilerParams(dimension_semantics=("parallel",)),
    )(q2d, enc2d, de2d, p["wq_t"], p["bq"], p["wkv_a_t"], p["wkv_b_t"], p["bkv"],
      p["wo_t"], p["bo"], p["w1_t"], p["b1"], p["w2_t"], p["b2"], p["rw"])


# ----------------------------- model (plain-JAX glue) -----------------------------


def unet_forward(src, query, params, nhead, activation="relu"):
    """UNet.forward(src, query): encoder stack, skip connections, decoder stack.

    src/query: (S, B, E) sequence-major (PyTorch batch_first=False convention).
    Internally uses a batch-major (B*S, E) flat layout so each grid step owns one
    batch's contiguous rows.
    """
    S, B, E = src.shape

    def to2d(x):   # (S, B, E) -> (B*S, E)
        return x.transpose(1, 0, 2).reshape(B * S, E)

    src2d = to2d(src)
    q2d = to2d(query)

    en_stack = []
    x = src2d
    for p in params["en"]:
        x = rztx_encoder_layer(q2d, x, p, nhead, activation, S)
        en_stack.append(x)

    de_out = q2d
    for p in params["de"]:
        enc = en_stack.pop()
        de_out = rztx_decoder_layer(q2d, enc, de_out, p, nhead, activation, S)

    return de_out.reshape(B, S, E).transpose(1, 0, 2)      # back to (S, B, E)


# ----------------------------- deterministic init -----------------------------


def init_layer_params(key, ninp, nhid, kdim):
    ks = jax.random.split(key, 6)

    def u(k, shape, scale):
        return jax.random.uniform(k, shape, jnp.float32, -scale, scale)

    initrange = math.sqrt(3.0 / ninp)          # matches UNet.init_FFN_weights
    # PyTorch orientation (out_features, in_features), then pre-transpose/fuse once.
    wq = u(ks[0], (ninp, ninp), 1.0 / math.sqrt(ninp))
    wk = u(ks[1], (ninp, kdim), 1.0 / math.sqrt(kdim))
    wv = u(ks[2], (ninp, kdim), 1.0 / math.sqrt(kdim))
    wo = u(ks[3], (ninp, ninp), 1.0 / math.sqrt(ninp))
    w1 = u(ks[4], (nhid, ninp), initrange)
    w2 = u(ks[5], (ninp, nhid), initrange)

    p = dict(
        wq_t=wq.T,                                   # (ninp, ninp)
        bq=jnp.zeros((1, ninp), jnp.float32),
        bkv=jnp.zeros((1, 2 * ninp), jnp.float32),
        wo_t=wo.T,                                   # (ninp, ninp)
        bo=jnp.zeros((1, ninp), jnp.float32),
        w1_t=w1.T,                                   # (ninp, nhid)
        b1=jnp.zeros((1, nhid), jnp.float32),
        w2_t=w2.T,                                   # (nhid, ninp)
        b2=jnp.zeros((1, ninp), jnp.float32),
        # TODO(synk): PyTorch initializes resweight to 0 (identity/passthrough net);
        # use 0.1 so the attention/FFN compute path is exercised.
        rw=jnp.full((1, 1), 0.1, jnp.float32),
    )
    wkv_t = jnp.concatenate([wk.T, wv.T], axis=1)    # (kdim, 2*ninp) fused k|v
    if kdim == ninp:
        p["wkv_t"] = wkv_t
    else:  # decoder: split along kdim so concat([enc, de_out]) is never materialized
        p["wkv_a_t"] = wkv_t[:ninp]
        p["wkv_b_t"] = wkv_t[ninp:]
    return p


def init_unet_params(key, ninp, nhid, nlayers):
    keys = jax.random.split(key, 2 * nlayers)
    en = [init_layer_params(keys[i], ninp, nhid, kdim=ninp) for i in range(nlayers)]
    de = [init_layer_params(keys[nlayers + i], ninp, nhid, kdim=2 * ninp)
          for i in range(nlayers)]
    return dict(en=en, de=de)


# ----------------------------- pure-JAX reference (correctness check) -----------------------------


def _ref_layer(query, kv_in, residual, p, wkv_t, nhead, activation):
    S, B, E = query.shape
    Dh = E // nhead
    q = query @ p["wq_t"] + p["bq"][0]
    kv = kv_in @ wkv_t + p["bkv"][0]
    k, v = kv[..., :E], kv[..., E:]

    def heads(x):  # (S, B, E) -> (B, H, S, Dh)
        return x.reshape(S, B, nhead, Dh).transpose(1, 2, 0, 3)

    qh, kh, vh = heads(q), heads(k), heads(v)
    s = jnp.einsum("bhsd,bhtd->bhst", qh, kh) / math.sqrt(Dh)
    attw = jax.nn.softmax(s, axis=-1)
    ctx = jnp.einsum("bhst,bhtd->bhsd", attw, vh)
    attn = ctx.transpose(2, 0, 1, 3).reshape(S, B, E)
    rw = p["rw"][0, 0]
    att_out = residual + rw * (attn @ p["wo_t"] + p["bo"][0])
    h = att_out @ p["w1_t"] + p["b1"][0]
    h = jnp.maximum(h, 0.0) if activation == "relu" else jax.nn.gelu(h, approximate=False)
    return att_out + rw * (h @ p["w2_t"] + p["b2"][0])


def reference_forward(src, query, params, nhead, activation="relu"):
    en_stack = []
    x = src
    for p in params["en"]:
        x = _ref_layer(query, x, x, p, p["wkv_t"], nhead, activation)
        en_stack.append(x)
    de_out = query
    for p in params["de"]:
        enc = en_stack.pop()
        kv_in = jnp.concatenate([enc, de_out], axis=-1)
        wkv_t = jnp.concatenate([p["wkv_a_t"], p["wkv_b_t"]], axis=0)
        de_out = _ref_layer(query, kv_in, enc, p, wkv_t, nhead, activation)
    return de_out


# ----------------------------- main -----------------------------


if __name__ == "__main__":
    S, B = 8, 2                 # sequence length, batch
    ninp, nhead, nhid = 32, 4, 64
    nlayers = 2

    key = jax.random.PRNGKey(0)
    k_src, k_query, k_params = jax.random.split(key, 3)
    src = jax.random.normal(k_src, (S, B, ninp), jnp.float32)
    query = jax.random.normal(k_query, (S, B, ninp), jnp.float32)
    params = init_unet_params(k_params, ninp, nhid, nlayers)

    fwd = jax.jit(functools.partial(unet_forward, nhead=nhead, activation="relu"))
    out = fwd(src, query, params)
    out = jax.block_until_ready(out)

    assert out.shape == (S, B, ninp), out.shape
    assert bool(jnp.all(jnp.isfinite(out)))

    ref = reference_forward(src, query, params, nhead, activation="relu")
    # loose tolerance: in-kernel softmax uses the approximate EUP reciprocal
    assert bool(jnp.allclose(out, ref, rtol=2e-2, atol=2e-2)), \
        float(jnp.max(jnp.abs(out - ref)))

    print("KERNEL_OK")
</pallas_src>

<mosaic_0001>
module attributes {stable_mosaic.version = 11 : i64} {
  func.func @_rztx_decoder_kernel(%arg0: i32, %arg1: memref<8x32xf32, #tpu.memory_space<vmem>>, %arg2: memref<8x32xf32, #tpu.memory_space<vmem>>, %arg3: memref<8x32xf32, #tpu.memory_space<vmem>>, %arg4: memref<32x32xf32, #tpu.memory_space<vmem>>, %arg5: memref<1x32xf32, #tpu.memory_space<vmem>>, %arg6: memref<32x64xf32, #tpu.memory_space<vmem>>, %arg7: memref<32x64xf32, #tpu.memory_space<vmem>>, %arg8: memref<1x64xf32, #tpu.memory_space<vmem>>, %arg9: memref<32x32xf32, #tpu.memory_space<vmem>>, %arg10: memref<1x32xf32, #tpu.memory_space<vmem>>, %arg11: memref<32x64xf32, #tpu.memory_space<vmem>>, %arg12: memref<1x64xf32, #tpu.memory_space<vmem>>, %arg13: memref<64x32xf32, #tpu.memory_space<vmem>>, %arg14: memref<1x32xf32, #tpu.memory_space<vmem>>, %arg15: memref<1x1xf32, #tpu.memory_space<smem>>, %arg16: memref<8x32xf32, #tpu.memory_space<vmem>>) attributes {dimension_semantics = [#tpu.dimension_semantics<parallel>], iteration_bounds = array<i64: 2>, scalar_prefetch = 0 : i64, scratch_operands = 0 : i64, tpu.core_type = #tpu.core_type<tc>, window_params = [{transform_indices = @transform_0, window_bounds = array<i64: 8, 32>}, {transform_indices = @transform_1, window_bounds = array<i64: 8, 32>}, {transform_indices = @transform_2, window_bounds = array<i64: 8, 32>}, {pipeline_mode = #tpu.pipeline_mode<synchronous>, transform_indices = @transform_3, window_bounds = array<i64: 32, 32>}, {pipeline_mode = #tpu.pipeline_mode<synchronous>, transform_indices = @transform_4, window_bounds = array<i64: 1, 32>}, {pipeline_mode = #tpu.pipeline_mode<synchronous>, transform_indices = @transform_5, window_bounds = array<i64: 32, 64>}, {pipeline_mode = #tpu.pipeline_mode<synchronous>, transform_indices = @transform_6, window_bounds = array<i64: 32, 64>}, {pipeline_mode = #tpu.pipeline_mode<synchronous>, transform_indices = @transform_7, window_bounds = array<i64: 1, 64>}, {pipeline_mode = #tpu.pipeline_mode<synchronous>, transform_indices = @transform_8, window_bounds = array<i64: 32, 32>}, {pipeline_mode = #tpu.pipeline_mode<synchronous>, transform_indices = @transform_9, window_bounds = array<i64: 1, 32>}, {pipeline_mode = #tpu.pipeline_mode<synchronous>, transform_indices = @transform_10, window_bounds = array<i64: 32, 64>}, {pipeline_mode = #tpu.pipeline_mode<synchronous>, transform_indices = @transform_11, window_bounds = array<i64: 1, 64>}, {pipeline_mode = #tpu.pipeline_mode<synchronous>, transform_indices = @transform_12, window_bounds = array<i64: 64, 32>}, {pipeline_mode = #tpu.pipeline_mode<synchronous>, transform_indices = @transform_13, window_bounds = array<i64: 1, 32>}, {transform_indices = @transform_14, window_bounds = array<i64: 1, 1>}, {transform_indices = @transform_15, window_bounds = array<i64: 8, 32>}]} {
    %c0 = arith.constant 0 : index
    %c0_0 = arith.constant 0 : index
    %0 = vector.load %arg2[%c0, %c0_0] : memref<8x32xf32, #tpu.memory_space<vmem>>, vector<8x32xf32>
    %c0_1 = arith.constant 0 : index
    %c0_2 = arith.constant 0 : index
    %1 = vector.load %arg3[%c0_1, %c0_2] : memref<8x32xf32, #tpu.memory_space<vmem>>, vector<8x32xf32>
    %c0_3 = arith.constant 0 : index
    %c0_4 = arith.constant 0 : index
    %2 = vector.load %arg6[%c0_3, %c0_4] : memref<32x64xf32, #tpu.memory_space<vmem>>, vector<32x64xf32>
    %cst = arith.constant dense<0.000000e+00> : vector<8x64xf32>
    %3 = tpu.matmul %0, %2, %cst {dimension_numbers = #tpu.dot_dimension_numbers<[1], [0], [0], [1], [0, 0, 1, 1], [], []>} : vector<8x32xf32>, vector<32x64xf32>, vector<8x64xf32> -> vector<8x64xf32>
    %c0_5 = arith.constant 0 : index
    %c0_6 = arith.constant 0 : index
    %4 = vector.load %arg7[%c0_5, %c0_6] : memref<32x64xf32, #tpu.memory_space<vmem>>, vector<32x64xf32>
    %cst_7 = arith.constant dense<0.000000e+00> : vector<8x64xf32>
    %5 = tpu.matmul %1, %4, %cst_7 {dimension_numbers = #tpu.dot_dimension_numbers<[1], [0], [0], [1], [0, 0, 1, 1], [], []>} : vector<8x32xf32>, vector<32x64xf32>, vector<8x64xf32> -> vector<8x64xf32>
    %6 = arith.addf %3, %5 : vector<8x64xf32>
    %c0_8 = arith.constant 0 : index
    %c0_9 = arith.constant 0 : index
    %7 = vector.load %arg8[%c0_8, %c0_9] : memref<1x64xf32, #tpu.memory_space<vmem>>, vector<1x64xf32>
    %8 = vector.broadcast %7 : vector<1x64xf32> to vector<8x64xf32>
    %9 = arith.addf %6, %8 : vector<8x64xf32>
    %c0_10 = arith.constant 0 : index
    %c0_11 = arith.constant 0 : index
    %10 = vector.load %arg1[%c0_10, %c0_11] : memref<8x32xf32, #tpu.memory_space<vmem>>, vector<8x32xf32>
    %c0_12 = arith.constant 0 : index
    %c0_13 = arith.constant 0 : index
    %11 = vector.load %arg4[%c0_12, %c0_13] : memref<32x32xf32, #tpu.memory_space<vmem>>, vector<32x32xf32>
    %c0_14 = arith.constant 0 : index
    %c0_15 = arith.constant 0 : index
    %12 = vector.load %arg5[%c0_14, %c0_15] : memref<1x32xf32, #tpu.memory_space<vmem>>, vector<1x32xf32>
    %c0_16 = arith.constant 0 : index
    %c0_17 = arith.constant 0 : index
    %13 = vector.load %arg9[%c0_16, %c0_17] : memref<32x32xf32, #tpu.memory_space<vmem>>, vector<32x32xf32>
    %c0_18 = arith.constant 0 : index
    %c0_19 = arith.constant 0 : index
    %14 = vector.load %arg10[%c0_18, %c0_19] : memref<1x32xf32, #tpu.memory_space<vmem>>, vector<1x32xf32>
    %c0_20 = arith.constant 0 : index
    %c0_21 = arith.constant 0 : index
    %15 = vector.load %arg11[%c0_20, %c0_21] : memref<32x64xf32, #tpu.memory_space<vmem>>, vector<32x64xf32>
    %c0_22 = arith.constant 0 : index
    %c0_23 = arith.constant 0 : index
    %16 = vector.load %arg12[%c0_22, %c0_23] : memref<1x64xf32, #tpu.memory_space<vmem>>, vector<1x64xf32>
    %c0_24 = arith.constant 0 : index
    %c0_25 = arith.constant 0 : index
    %17 = vector.load %arg13[%c0_24, %c0_25] : memref<64x32xf32, #tpu.memory_space<vmem>>, vector<64x32xf32>
    %c0_26 = arith.constant 0 : index
    %c0_27 = arith.constant 0 : index
    %18 = vector.load %arg14[%c0_26, %c0_27] : memref<1x32xf32, #tpu.memory_space<vmem>>, vector<1x32xf32>
    %c0_28 = arith.constant 0 : index
    %c0_29 = arith.constant 0 : index
    %19 = memref.load %arg15[%c0_28, %c0_29] : memref<1x1xf32, #tpu.memory_space<smem>>
    %cst_30 = arith.constant dense<0.000000e+00> : vector<8x32xf32>
    %20 = tpu.matmul %10, %11, %cst_30 {dimension_numbers = #tpu.dot_dimension_numbers<[1], [0], [0], [1], [0, 0, 1, 1], [], []>} : vector<8x32xf32>, vector<32x32xf32>, vector<8x32xf32> -> vector<8x32xf32>
    %21 = vector.broadcast %12 : vector<1x32xf32> to vector<8x32xf32>
    %22 = arith.addf %20, %21 : vector<8x32xf32>
    %23 = vector.extract_strided_slice %9 {offsets = [0, 0], sizes = [8, 32], strides = [1, 1]} : vector<8x64xf32> to vector<8x32xf32>
    %24 = vector.extract_strided_slice %9 {offsets = [0, 32], sizes = [8, 32], strides = [1, 1]} : vector<8x64xf32> to vector<8x32xf32>
    %25 = vector.extract_strided_slice %22 {offsets = [0, 0], sizes = [8, 8], strides = [1, 1]} : vector<8x32xf32> to vector<8x8xf32>
    %26 = vector.extract_strided_slice %23 {offsets = [0, 0], sizes = [8, 8], strides = [1, 1]} : vector<8x32xf32> to vector<8x8xf32>
    %27 = vector.extract_strided_slice %24 {offsets = [0, 0], sizes = [8, 8], strides = [1, 1]} : vector<8x32xf32> to vector<8x8xf32>
    %cst_31 = arith.constant dense<0.000000e+00> : vector<8x8xf32>
    %28 = tpu.matmul %25, %26, %cst_31 {dimension_numbers = #tpu.dot_dimension_numbers<[1], [1], [0], [0], [0, 0, 1, 0], [], []>} : vector<8x8xf32>, vector<8x8xf32>, vector<8x8xf32> -> vector<8x8xf32>
    %cst_32 = arith.constant 0.353553385 : f32
    %29 = vector.broadcast %cst_32 : f32 to vector<8x8xf32>
    %30 = arith.mulf %28, %29 : vector<8x8xf32>
    %cst_33 = arith.constant dense<0xFF800000> : vector<8xf32>
    %31 = vector.multi_reduction <maximumf>, %30, %cst_33 [1] : vector<8x8xf32> to vector<8xf32>
    %32 = vector.shape_cast %31 : vector<8xf32> to vector<8x1xf32>
    %33 = vector.broadcast %32 : vector<8x1xf32> to vector<8x8xf32>
    %34 = arith.subf %30, %33 : vector<8x8xf32>
    %35 = math.exp %34 : vector<8x8xf32>
    %cst_34 = arith.constant dense<0.000000e+00> : vector<8xf32>
    %36 = vector.multi_reduction <add>, %35, %cst_34 [1] : vector<8x8xf32> to vector<8xf32>
    %37 = vector.shape_cast %36 : vector<8xf32> to vector<8x1xf32>
    %38 = tpu.reciprocal %37 {approx = true} : vector<8x1xf32> -> vector<8x1xf32>
    %39 = vector.broadcast %38 : vector<8x1xf32> to vector<8x8xf32>
    %40 = arith.mulf %35, %39 : vector<8x8xf32>
    %cst_35 = arith.constant dense<0.000000e+00> : vector<8x8xf32>
    %41 = tpu.matmul %40, %27, %cst_35 {dimension_numbers = #tpu.dot_dimension_numbers<[1], [0], [0], [1], [0, 0, 1, 1], [], []>} : vector<8x8xf32>, vector<8x8xf32>, vector<8x8xf32> -> vector<8x8xf32>
    %42 = vector.extract_strided_slice %22 {offsets = [0, 8], sizes = [8, 8], strides = [1, 1]} : vector<8x32xf32> to vector<8x8xf32>
    %43 = vector.extract_strided_slice %23 {offsets = [0, 8], sizes = [8, 8], strides = [1, 1]} : vector<8x32xf32> to vector<8x8xf32>
    %44 = vector.extract_strided_slice %24 {offsets = [0, 8], sizes = [8, 8], strides = [1, 1]} : vector<8x32xf32> to vector<8x8xf32>
    %cst_36 = arith.constant dense<0.000000e+00> : vector<8x8xf32>
    %45 = tpu.matmul %42, %43, %cst_36 {dimension_numbers = #tpu.dot_dimension_numbers<[1], [1], [0], [0], [0, 0, 1, 0], [], []>} : vector<8x8xf32>, vector<8x8xf32>, vector<8x8xf32> -> vector<8x8xf32>
    %cst_37 = arith.constant 0.353553385 : f32
    %46 = vector.broadcast %cst_37 : f32 to vector<8x8xf32>
    %47 = arith.mulf %45, %46 : vector<8x8xf32>
    %cst_38 = arith.constant dense<0xFF800000> : vector<8xf32>
    %48 = vector.multi_reduction <maximumf>, %47, %cst_38 [1] : vector<8x8xf32> to vector<8xf32>
    %49 = vector.shape_cast %48 : vector<8xf32> to vector<8x1xf32>
    %50 = vector.broadcast %49 : vector<8x1xf32> to vector<8x8xf32>
    %51 = arith.subf %47, %50 : vector<8x8xf32>
    %52 = math.exp %51 : vector<8x8xf32>
    %cst_39 = arith.constant dense<0.000000e+00> : vector<8xf32>
    %53 = vector.multi_reduction <add>, %52, %cst_39 [1] : vector<8x8xf32> to vector<8xf32>
    %54 = vector.shape_cast %53 : vector<8xf32> to vector<8x1xf32>
    %55 = tpu.reciprocal %54 {approx = true} : vector<8x1xf32> -> vector<8x1xf32>
    %56 = vector.broadcast %55 : vector<8x1xf32> to vector<8x8xf32>
    %57 = arith.mulf %52, %56 : vector<8x8xf32>
    %cst_40 = arith.constant dense<0.000000e+00> : vector<8x8xf32>
    %58 = tpu.matmul %57, %44, %cst_40 {dimension_numbers = #tpu.dot_dimension_numbers<[1], [0], [0], [1], [0, 0, 1, 1], [], []>} : vector<8x8xf32>, vector<8x8xf32>, vector<8x8xf32> -> vector<8x8xf32>
    %59 = vector.extract_strided_slice %22 {offsets = [0, 16], sizes = [8, 8], strides = [1, 1]} : vector<8x32xf32> to vector<8x8xf32>
    %60 = vector.extract_strided_slice %23 {offsets = [0, 16], sizes = [8, 8], strides = [1, 1]} : vector<8x32xf32> to vector<8x8xf32>
    %61 = vector.extract_strided_slice %24 {offsets = [0, 16], sizes = [8, 8], strides = [1, 1]} : vector<8x32xf32> to vector<8x8xf32>
    %cst_41 = arith.constant dense<0.000000e+00> : vector<8x8xf32>
    %62 = tpu.matmul %59, %60, %cst_41 {dimension_numbers = #tpu.dot_dimension_numbers<[1], [1], [0], [0], [0, 0, 1, 0], [], []>} : vector<8x8xf32>, vector<8x8xf32>, vector<8x8xf32> -> vector<8x8xf32>
    %cst_42 = arith.constant 0.353553385 : f32
    %63 = vector.broadcast %cst_42 : f32 to vector<8x8xf32>
    %64 = arith.mulf %62, %63 : vector<8x8xf32>
    %cst_43 = arith.constant dense<0xFF800000> : vector<8xf32>
    %65 = vector.multi_reduction <maximumf>, %64, %cst_43 [1] : vector<8x8xf32> to vector<8xf32>
    %66 = vector.shape_cast %65 : vector<8xf32> to vector<8x1xf32>
    %67 = vector.broadcast %66 : vector<8x1xf32> to vector<8x8xf32>
    %68 = arith.subf %64, %67 : vector<8x8xf32>
    %69 = math.exp %68 : vector<8x8xf32>
    %cst_44 = arith.constant dense<0.000000e+00> : vector<8xf32>
    %70 = vector.multi_reduction <add>, %69, %cst_44 [1] : vector<8x8xf32> to vector<8xf32>
    %71 = vector.shape_cast %70 : vector<8xf32> to vector<8x1xf32>
    %72 = tpu.reciprocal %71 {approx = true} : vector<8x1xf32> -> vector<8x1xf32>
    %73 = vector.broadcast %72 : vector<8x1xf32> to vector<8x8xf32>
    %74 = arith.mulf %69, %73 : vector<8x8xf32>
    %cst_45 = arith.constant dense<0.000000e+00> : vector<8x8xf32>
    %75 = tpu.matmul %74, %61, %cst_45 {dimension_numbers = #tpu.dot_dimension_numbers<[1], [0], [0], [1], [0, 0, 1, 1], [], []>} : vector<8x8xf32>, vector<8x8xf32>, vector<8x8xf32> -> vector<8x8xf32>
    %76 = vector.extract_strided_slice %22 {offsets = [0, 24], sizes = [8, 8], strides = [1, 1]} : vector<8x32xf32> to vector<8x8xf32>
    %77 = vector.extract_strided_slice %23 {offsets = [0, 24], sizes = [8, 8], strides = [1, 1]} : vector<8x32xf32> to vector<8x8xf32>
    %78 = vector.extract_strided_slice %24 {offsets = [0, 24], sizes = [8, 8], strides = [1, 1]} : vector<8x32xf32> to vector<8x8xf32>
    %cst_46 = arith.constant dense<0.000000e+00> : vector<8x8xf32>
    %79 = tpu.matmul %76, %77, %cst_46 {dimension_numbers = #tpu.dot_dimension_numbers<[1], [1], [0], [0], [0, 0, 1, 0], [], []>} : vector<8x8xf32>, vector<8x8xf32>, vector<8x8xf32> -> vector<8x8xf32>
    %cst_47 = arith.constant 0.353553385 : f32
    %80 = vector.broadcast %cst_47 : f32 to vector<8x8xf32>
    %81 = arith.mulf %79, %80 : vector<8x8xf32>
    %cst_48 = arith.constant dense<0xFF800000> : vector<8xf32>
    %82 = vector.multi_reduction <maximumf>, %81, %cst_48 [1] : vector<8x8xf32> to vector<8xf32>
    %83 = vector.shape_cast %82 : vector<8xf32> to vector<8x1xf32>
    %84 = vector.broadcast %83 : vector<8x1xf32> to vector<8x8xf32>
    %85 = arith.subf %81, %84 : vector<8x8xf32>
    %86 = math.exp %85 : vector<8x8xf32>
    %cst_49 = arith.constant dense<0.000000e+00> : vector<8xf32>
    %87 = vector.multi_reduction <add>, %86, %cst_49 [1] : vector<8x8xf32> to vector<8xf32>
    %88 = vector.shape_cast %87 : vector<8xf32> to vector<8x1xf32>
    %89 = tpu.reciprocal %88 {approx = true} : vector<8x1xf32> -> vector<8x1xf32>
    %90 = vector.broadcast %89 : vector<8x1xf32> to vector<8x8xf32>
    %91 = arith.mulf %86, %90 : vector<8x8xf32>
    %cst_50 = arith.constant dense<0.000000e+00> : vector<8x8xf32>
    %92 = tpu.matmul %91, %78, %cst_50 {dimension_numbers = #tpu.dot_dimension_numbers<[1], [0], [0], [1], [0, 0, 1, 1], [], []>} : vector<8x8xf32>, vector<8x8xf32>, vector<8x8xf32> -> vector<8x8xf32>
    %93 = tpu.concatenate %41, %58, %75, %92 in 1 : vector<8x8xf32>, vector<8x8xf32>, vector<8x8xf32>, vector<8x8xf32> -> vector<8x32xf32>
    %cst_51 = arith.constant dense<0.000000e+00> : vector<8x32xf32>
    %94 = tpu.matmul %93, %13, %cst_51 {dimension_numbers = #tpu.dot_dimension_numbers<[1], [0], [0], [1], [0, 0, 1, 1], [], []>} : vector<8x32xf32>, vector<32x32xf32>, vector<8x32xf32> -> vector<8x32xf32>
    %95 = vector.broadcast %14 : vector<1x32xf32> to vector<8x32xf32>
    %96 = arith.addf %94, %95 : vector<8x32xf32>
    %97 = vector.broadcast %19 : f32 to vector<8x32xf32>
    %98 = arith.mulf %97, %96 : vector<8x32xf32>
    %99 = arith.addf %0, %98 : vector<8x32xf32>
    %cst_52 = arith.constant dense<0.000000e+00> : vector<8x64xf32>
    %100 = tpu.matmul %99, %15, %cst_52 {dimension_numbers = #tpu.dot_dimension_numbers<[1], [0], [0], [1], [0, 0, 1, 1], [], []>} : vector<8x32xf32>, vector<32x64xf32>, vector<8x64xf32> -> vector<8x64xf32>
    %101 = vector.broadcast %16 : vector<1x64xf32> to vector<8x64xf32>
    %102 = arith.addf %100, %101 : vector<8x64xf32>
    %cst_53 = arith.constant 0.000000e+00 : f32
    %103 = vector.broadcast %cst_53 : f32 to vector<8x64xf32>
    %104 = arith.maximumf %102, %103 : vector<8x64xf32>
    %cst_54 = arith.constant dense<0.000000e+00> : vector<8x32xf32>
    %105 = tpu.matmul %104, %17, %cst_54 {dimension_numbers = #tpu.dot_dimension_numbers<[1], [0], [0], [1], [0, 0, 1, 1], [], []>} : vector<8x64xf32>, vector<64x32xf32>, vector<8x32xf32> -> vector<8x32xf32>
    %106 = vector.broadcast %18 : vector<1x32xf32> to vector<8x32xf32>
    %107 = arith.addf %105, %106 : vector<8x32xf32>
    %108 = vector.broadcast %19 : f32 to vector<8x32xf32>
    %109 = arith.mulf %108, %107 : vector<8x32xf32>
    %110 = arith.addf %99, %109 : vector<8x32xf32>
    %c0_55 = arith.constant 0 : index
    %c0_56 = arith.constant 0 : index
    %111 = vector.load %arg16[%c0_55, %c0_56] : memref<8x32xf32, #tpu.memory_space<vmem>>, vector<8x32xf32>
    tpu.vector_store %arg16[%c0_55, %c0_56], %110 {strides = array<i32>} : memref<8x32xf32, #tpu.memory_space<vmem>>, vector<8x32xf32>,
    return
  }
  func.func @transform_0(%arg0: i32) -> (i32, i32) {
    %c0_i32 = arith.constant 0 : i32
    %c0_i32_0 = arith.constant 0 : i32
    return %arg0, %c0_i32 : i32, i32
  }
  func.func @transform_1(%arg0: i32) -> (i32, i32) {
    %c0_i32 = arith.constant 0 : i32
    %c0_i32_0 = arith.constant 0 : i32
    return %arg0, %c0_i32 : i32, i32
  }
  func.func @transform_2(%arg0: i32) -> (i32, i32) {
    %c0_i32 = arith.constant 0 : i32
    %c0_i32_0 = arith.constant 0 : i32
    return %arg0, %c0_i32 : i32, i32
  }
  func.func @transform_3(%arg0: i32) -> (i32, i32) {
    %c0_i32 = arith.constant 0 : i32
    %c0_i32_0 = arith.constant 0 : i32
    %c0_i32_1 = arith.constant 0 : i32
    return %c0_i32, %c0_i32_0 : i32, i32
  }
  func.func @transform_4(%arg0: i32) -> (i32, i32) {
    %c0_i32 = arith.constant 0 : i32
    %c0_i32_0 = arith.constant 0 : i32
    %c0_i32_1 = arith.constant 0 : i32
    return %c0_i32, %c0_i32_0 : i32, i32
  }
  func.func @transform_5(%arg0: i32) -> (i32, i32) {
    %c0_i32 = arith.constant 0 : i32
    %c0_i32_0 = arith.constant 0 : i32
    %c0_i32_1 = arith.constant 0 : i32
    return %c0_i32, %c0_i32_0 : i32, i32
  }
  func.func @transform_6(%arg0: i32) -> (i32, i32) {
    %c0_i32 = arith.constant 0 : i32
    %c0_i32_0 = arith.constant 0 : i32
    %c0_i32_1 = arith.constant 0 : i32
    return %c0_i32, %c0_i32_0 : i32, i32
  }
  func.func @transform_7(%arg0: i32) -> (i32, i32) {
    %c0_i32 = arith.constant 0 : i32
    %c0_i32_0 = arith.constant 0 : i32
    %c0_i32_1 = arith.constant 0 : i32
    return %c0_i32, %c0_i32_0 : i32, i32
  }
  func.func @transform_8(%arg0: i32) -> (i32, i32) {
    %c0_i32 = arith.constant 0 : i32
    %c0_i32_0 = arith.constant 0 : i32
    %c0_i32_1 = arith.constant 0 : i32
    return %c0_i32, %c0_i32_0 : i32, i32
  }
  func.func @transform_9(%arg0: i32) -> (i32, i32) {
    %c0_i32 = arith.constant 0 : i32
    %c0_i32_0 = arith.constant 0 : i32
    %c0_i32_1 = arith.constant 0 : i32
    return %c0_i32, %c0_i32_0 : i32, i32
  }
  func.func @transform_10(%arg0: i32) -> (i32, i32) {
    %c0_i32 = arith.constant 0 : i32
    %c0_i32_0 = arith.constant 0 : i32
    %c0_i32_1 = arith.constant 0 : i32
    return %c0_i32, %c0_i32_0 : i32, i32
  }
  func.func @transform_11(%arg0: i32) -> (i32, i32) {
    %c0_i32 = arith.constant 0 : i32
    %c0_i32_0 = arith.constant 0 : i32
    %c0_i32_1 = arith.constant 0 : i32
    return %c0_i32, %c0_i32_0 : i32, i32
  }
  func.func @transform_12(%arg0: i32) -> (i32, i32) {
    %c0_i32 = arith.constant 0 : i32
    %c0_i32_0 = arith.constant 0 : i32
    %c0_i32_1 = arith.constant 0 : i32
    return %c0_i32, %c0_i32_0 : i32, i32
  }
  func.func @transform_13(%arg0: i32) -> (i32, i32) {
    %c0_i32 = arith.constant 0 : i32
    %c0_i32_0 = arith.constant 0 : i32
    %c0_i32_1 = arith.constant 0 : i32
    return %c0_i32, %c0_i32_0 : i32, i32
  }
  func.func @transform_14(%arg0: i32) -> (i32, i32) {
    %c0_i32 = arith.constant 0 : i32
    %c0_i32_0 = arith.constant 0 : i32
    %c0_i32_1 = arith.constant 0 : i32
    return %c0_i32, %c0_i32_0 : i32, i32
  }
  func.func @transform_15(%arg0: i32) -> (i32, i32) {
    %c0_i32 = arith.constant 0 : i32
    %c0_i32_0 = arith.constant 0 : i32
    return %arg0, %c0_i32 : i32, i32
  }
}

module attributes {stable_mosaic.version = 11 : i64} {
  func.func @_rztx_encoder_kernel(%arg0: i32, %arg1: memref<8x32xf32, #tpu.memory_space<vmem>>, %arg2: memref<8x32xf32, #tpu.memory_space<vmem>>, %arg3: memref<32x32xf32, #tpu.memory_space<vmem>>, %arg4: memref<1x32xf32, #tpu.memory_space<vmem>>, %arg5: memref<32x64xf32, #tpu.memory_space<vmem>>, %arg6: memref<1x64xf32, #tpu.memory_space<vmem>>, %arg7: memref<32x32xf32, #tpu.memory_space<vmem>>, %arg8: memref<1x32xf32, #tpu.memory_space<vmem>>, %arg9: memref<32x64xf32, #tpu.memory_space<vmem>>, %arg10: memref<1x64xf32, #tpu.memory_space<vmem>>, %arg11: memref<64x32xf32, #tpu.memory_space<vmem>>, %arg12: memref<1x32xf32, #tpu.memory_space<vmem>>, %arg13: memref<1x1xf32, #tpu.memory_space<smem>>, %arg14: memref<8x32xf32, #tpu.memory_space<vmem>>) attributes {dimension_semantics = [#tpu.dimension_semantics<parallel>], iteration_bounds = array<i64: 2>, scalar_prefetch = 0 : i64, scratch_operands = 0 : i64, tpu.core_type = #tpu.core_type<tc>, window_params = [{transform_indices = @transform_0, window_bounds = array<i64: 8, 32>}, {transform_indices = @transform_1, window_bounds = array<i64: 8, 32>}, {pipeline_mode = #tpu.pipeline_mode<synchronous>, transform_indices = @transform_2, window_bounds = array<i64: 32, 32>}, {pipeline_mode = #tpu.pipeline_mode<synchronous>, transform_indices = @transform_3, window_bounds = array<i64: 1, 32>}, {pipeline_mode = #tpu.pipeline_mode<synchronous>, transform_indices = @transform_4, window_bounds = array<i64: 32, 64>}, {pipeline_mode = #tpu.pipeline_mode<synchronous>, transform_indices = @transform_5, window_bounds = array<i64: 1, 64>}, {pipeline_mode = #tpu.pipeline_mode<synchronous>, transform_indices = @transform_6, window_bounds = array<i64: 32, 32>}, {pipeline_mode = #tpu.pipeline_mode<synchronous>, transform_indices = @transform_7, window_bounds = array<i64: 1, 32>}, {pipeline_mode = #tpu.pipeline_mode<synchronous>, transform_indices = @transform_8, window_bounds = array<i64: 32, 64>}, {pipeline_mode = #tpu.pipeline_mode<synchronous>, transform_indices = @transform_9, window_bounds = array<i64: 1, 64>}, {pipeline_mode = #tpu.pipeline_mode<synchronous>, transform_indices = @transform_10, window_bounds = array<i64: 64, 32>}, {pipeline_mode = #tpu.pipeline_mode<synchronous>, transform_indices = @transform_11, window_bounds = array<i64: 1, 32>}, {transform_indices = @transform_12, window_bounds = array<i64: 1, 1>}, {transform_indices = @transform_13, window_bounds = array<i64: 8, 32>}]} {
    %c0 = arith.constant 0 : index
    %c0_0 = arith.constant 0 : index
    %0 = vector.load %arg2[%c0, %c0_0] : memref<8x32xf32, #tpu.memory_space<vmem>>, vector<8x32xf32>
    %c0_1 = arith.constant 0 : index
    %c0_2 = arith.constant 0 : index
    %1 = vector.load %arg5[%c0_1, %c0_2] : memref<32x64xf32, #tpu.memory_space<vmem>>, vector<32x64xf32>
    %cst = arith.constant dense<0.000000e+00> : vector<8x64xf32>
    %2 = tpu.matmul %0, %1, %cst {dimension_numbers = #tpu.dot_dimension_numbers<[1], [0], [0], [1], [0, 0, 1, 1], [], []>} : vector<8x32xf32>, vector<32x64xf32>, vector<8x64xf32> -> vector<8x64xf32>
    %c0_3 = arith.constant 0 : index
    %c0_4 = arith.constant 0 : index
    %3 = vector.load %arg6[%c0_3, %c0_4] : memref<1x64xf32, #tpu.memory_space<vmem>>, vector<1x64xf32>
    %4 = vector.broadcast %3 : vector<1x64xf32> to vector<8x64xf32>
    %5 = arith.addf %2, %4 : vector<8x64xf32>
    %c0_5 = arith.constant 0 : index
    %c0_6 = arith.constant 0 : index
    %6 = vector.load %arg1[%c0_5, %c0_6] : memref<8x32xf32, #tpu.memory_space<vmem>>, vector<8x32xf32>
    %c0_7 = arith.constant 0 : index
    %c0_8 = arith.constant 0 : index
    %7 = vector.load %arg3[%c0_7, %c0_8] : memref<32x32xf32, #tpu.memory_space<vmem>>, vector<32x32xf32>
    %c0_9 = arith.constant 0 : index
    %c0_10 = arith.constant 0 : index
    %8 = vector.load %arg4[%c0_9, %c0_10] : memref<1x32xf32, #tpu.memory_space<vmem>>, vector<1x32xf32>
    %c0_11 = arith.constant 0 : index
    %c0_12 = arith.constant 0 : index
    %9 = vector.load %arg7[%c0_11, %c0_12] : memref<32x32xf32, #tpu.memory_space<vmem>>, vector<32x32xf32>
    %c0_13 = arith.constant 0 : index
    %c0_14 = arith.constant 0 : index
    %10 = vector.load %arg8[%c0_13, %c0_14] : memref<1x32xf32, #tpu.memory_space<vmem>>, vector<1x32xf32>
    %c0_15 = arith.constant 0 : index
    %c0_16 = arith.constant 0 : index
    %11 = vector.load %arg9[%c0_15, %c0_16] : memref<32x64xf32, #tpu.memory_space<vmem>>, vector<32x64xf32>
    %c0_17 = arith.constant 0 : index
    %c0_18 = arith.constant 0 : index
    %12 = vector.load %arg10[%c0_17, %c0_18] : memref<1x64xf32, #tpu.memory_space<vmem>>, vector<1x64xf32>
    %c0_19 = arith.constant 0 : index
    %c0_20 = arith.constant 0 : index
    %13 = vector.load %arg11[%c0_19, %c0_20] : memref<64x32xf32, #tpu.memory_space<vmem>>, vector<64x32xf32>
    %c0_21 = arith.constant 0 : index
    %c0_22 = arith.constant 0 : index
    %14 = vector.load %arg12[%c0_21, %c0_22] : memref<1x32xf32, #tpu.memory_space<vmem>>, vector<1x32xf32>
    %c0_23 = arith.constant 0 : index
    %c0_24 = arith.constant 0 : index
    %15 = memref.load %arg13[%c0_23, %c0_24] : memref<1x1xf32, #tpu.memory_space<smem>>
    %cst_25 = arith.constant dense<0.000000e+00> : vector<8x32xf32>
    %16 = tpu.matmul %6, %7, %cst_25 {dimension_numbers = #tpu.dot_dimension_numbers<[1], [0], [0], [1], [0, 0, 1, 1], [], []>} : vector<8x32xf32>, vector<32x32xf32>, vector<8x32xf32> -> vector<8x32xf32>
    %17 = vector.broadcast %8 : vector<1x32xf32> to vector<8x32xf32>
    %18 = arith.addf %16, %17 : vector<8x32xf32>
    %19 = vector.extract_strided_slice %5 {offsets = [0, 0], sizes = [8, 32], strides = [1, 1]} : vector<8x64xf32> to vector<8x32xf32>
    %20 = vector.extract_strided_slice %5 {offsets = [0, 32], sizes = [8, 32], strides = [1, 1]} : vector<8x64xf32> to vector<8x32xf32>
    %21 = vector.extract_strided_slice %18 {offsets = [0, 0], sizes = [8, 8], strides = [1, 1]} : vector<8x32xf32> to vector<8x8xf32>
    %22 = vector.extract_strided_slice %19 {offsets = [0, 0], sizes = [8, 8], strides = [1, 1]} : vector<8x32xf32> to vector<8x8xf32>
    %23 = vector.extract_strided_slice %20 {offsets = [0, 0], sizes = [8, 8], strides = [1, 1]} : vector<8x32xf32> to vector<8x8xf32>
    %cst_26 = arith.constant dense<0.000000e+00> : vector<8x8xf32>
    %24 = tpu.matmul %21, %22, %cst_26 {dimension_numbers = #tpu.dot_dimension_numbers<[1], [1], [0], [0], [0, 0, 1, 0], [], []>} : vector<8x8xf32>, vector<8x8xf32>, vector<8x8xf32> -> vector<8x8xf32>
    %cst_27 = arith.constant 0.353553385 : f32
    %25 = vector.broadcast %cst_27 : f32 to vector<8x8xf32>
    %26 = arith.mulf %24, %25 : vector<8x8xf32>
    %cst_28 = arith.constant dense<0xFF800000> : vector<8xf32>
    %27 = vector.multi_reduction <maximumf>, %26, %cst_28 [1] : vector<8x8xf32> to vector<8xf32>
    %28 = vector.shape_cast %27 : vector<8xf32> to vector<8x1xf32>
    %29 = vector.broadcast %28 : vector<8x1xf32> to vector<8x8xf32>
    %30 = arith.subf %26, %29 : vector<8x8xf32>
    %31 = math.exp %30 : vector<8x8xf32>
    %cst_29 = arith.constant dense<0.000000e+00> : vector<8xf32>
    %32 = vector.multi_reduction <add>, %31, %cst_29 [1] : vector<8x8xf32> to vector<8xf32>
    %33 = vector.shape_cast %32 : vector<8xf32> to vector<8x1xf32>
    %34 = tpu.reciprocal %33 {approx = true} : vector<8x1xf32> -> vector<8x1xf32>
    %35 = vector.broadcast %34 : vector<8x1xf32> to vector<8x8xf32>
    %36 = arith.mulf %31, %35 : vector<8x8xf32>
    %cst_30 = arith.constant dense<0.000000e+00> : vector<8x8xf32>
    %37 = tpu.matmul %36, %23, %cst_30 {dimension_numbers = #tpu.dot_dimension_numbers<[1], [0], [0], [1], [0, 0, 1, 1], [], []>} : vector<8x8xf32>, vector<8x8xf32>, vector<8x8xf32> -> vector<8x8xf32>
    %38 = vector.extract_strided_slice %18 {offsets = [0, 8], sizes = [8, 8], strides = [1, 1]} : vector<8x32xf32> to vector<8x8xf32>
    %39 = vector.extract_strided_slice %19 {offsets = [0, 8], sizes = [8, 8], strides = [1, 1]} : vector<8x32xf32> to vector<8x8xf32>
    %40 = vector.extract_strided_slice %20 {offsets = [0, 8], sizes = [8, 8], strides = [1, 1]} : vector<8x32xf32> to vector<8x8xf32>
    %cst_31 = arith.constant dense<0.000000e+00> : vector<8x8xf32>
    %41 = tpu.matmul %38, %39, %cst_31 {dimension_numbers = #tpu.dot_dimension_numbers<[1], [1], [0], [0], [0, 0, 1, 0], [], []>} : vector<8x8xf32>, vector<8x8xf32>, vector<8x8xf32> -> vector<8x8xf32>
    %cst_32 = arith.constant 0.353553385 : f32
    %42 = vector.broadcast %cst_32 : f32 to vector<8x8xf32>
    %43 = arith.mulf %41, %42 : vector<8x8xf32>
    %cst_33 = arith.constant dense<0xFF800000> : vector<8xf32>
    %44 = vector.multi_reduction <maximumf>, %43, %cst_33 [1] : vector<8x8xf32> to vector<8xf32>
    %45 = vector.shape_cast %44 : vector<8xf32> to vector<8x1xf32>
    %46 = vector.broadcast %45 : vector<8x1xf32> to vector<8x8xf32>
    %47 = arith.subf %43, %46 : vector<8x8xf32>
    %48 = math.exp %47 : vector<8x8xf32>
    %cst_34 = arith.constant dense<0.000000e+00> : vector<8xf32>
    %49 = vector.multi_reduction <add>, %48, %cst_34 [1] : vector<8x8xf32> to vector<8xf32>
    %50 = vector.shape_cast %49 : vector<8xf32> to vector<8x1xf32>
    %51 = tpu.reciprocal %50 {approx = true} : vector<8x1xf32> -> vector<8x1xf32>
    %52 = vector.broadcast %51 : vector<8x1xf32> to vector<8x8xf32>
    %53 = arith.mulf %48, %52 : vector<8x8xf32>
    %cst_35 = arith.constant dense<0.000000e+00> : vector<8x8xf32>
    %54 = tpu.matmul %53, %40, %cst_35 {dimension_numbers = #tpu.dot_dimension_numbers<[1], [0], [0], [1], [0, 0, 1, 1], [], []>} : vector<8x8xf32>, vector<8x8xf32>, vector<8x8xf32> -> vector<8x8xf32>
    %55 = vector.extract_strided_slice %18 {offsets = [0, 16], sizes = [8, 8], strides = [1, 1]} : vector<8x32xf32> to vector<8x8xf32>
    %56 = vector.extract_strided_slice %19 {offsets = [0, 16], sizes = [8, 8], strides = [1, 1]} : vector<8x32xf32> to vector<8x8xf32>
    %57 = vector.extract_strided_slice %20 {offsets = [0, 16], sizes = [8, 8], strides = [1, 1]} : vector<8x32xf32> to vector<8x8xf32>
    %cst_36 = arith.constant dense<0.000000e+00> : vector<8x8xf32>
    %58 = tpu.matmul %55, %56, %cst_36 {dimension_numbers = #tpu.dot_dimension_numbers<[1], [1], [0], [0], [0, 0, 1, 0], [], []>} : vector<8x8xf32>, vector<8x8xf32>, vector<8x8xf32> -> vector<8x8xf32>
    %cst_37 = arith.constant 0.353553385 : f32
    %59 = vector.broadcast %cst_37 : f32 to vector<8x8xf32>
    %60 = arith.mulf %58, %59 : vector<8x8xf32>
    %cst_38 = arith.constant dense<0xFF800000> : vector<8xf32>
    %61 = vector.multi_reduction <maximumf>, %60, %cst_38 [1] : vector<8x8xf32> to vector<8xf32>
    %62 = vector.shape_cast %61 : vector<8xf32> to vector<8x1xf32>
    %63 = vector.broadcast %62 : vector<8x1xf32> to vector<8x8xf32>
    %64 = arith.subf %60, %63 : vector<8x8xf32>
    %65 = math.exp %64 : vector<8x8xf32>
    %cst_39 = arith.constant dense<0.000000e+00> : vector<8xf32>
    %66 = vector.multi_reduction <add>, %65, %cst_39 [1] : vector<8x8xf32> to vector<8xf32>
    %67 = vector.shape_cast %66 : vector<8xf32> to vector<8x1xf32>
    %68 = tpu.reciprocal %67 {approx = true} : vector<8x1xf32> -> vector<8x1xf32>
    %69 = vector.broadcast %68 : vector<8x1xf32> to vector<8x8xf32>
    %70 = arith.mulf %65, %69 : vector<8x8xf32>
    %cst_40 = arith.constant dense<0.000000e+00> : vector<8x8xf32>
    %71 = tpu.matmul %70, %57, %cst_40 {dimension_numbers = #tpu.dot_dimension_numbers<[1], [0], [0], [1], [0, 0, 1, 1], [], []>} : vector<8x8xf32>, vector<8x8xf32>, vector<8x8xf32> -> vector<8x8xf32>
    %72 = vector.extract_strided_slice %18 {offsets = [0, 24], sizes = [8, 8], strides = [1, 1]} : vector<8x32xf32> to vector<8x8xf32>
    %73 = vector.extract_strided_slice %19 {offsets = [0, 24], sizes = [8, 8], strides = [1, 1]} : vector<8x32xf32> to vector<8x8xf32>
    %74 = vector.extract_strided_slice %20 {offsets = [0, 24], sizes = [8, 8], strides = [1, 1]} : vector<8x32xf32> to vector<8x8xf32>
    %cst_41 = arith.constant dense<0.000000e+00> : vector<8x8xf32>
    %75 = tpu.matmul %72, %73, %cst_41 {dimension_numbers = #tpu.dot_dimension_numbers<[1], [1], [0], [0], [0, 0, 1, 0], [], []>} : vector<8x8xf32>, vector<8x8xf32>, vector<8x8xf32> -> vector<8x8xf32>
    %cst_42 = arith.constant 0.353553385 : f32
    %76 = vector.broadcast %cst_42 : f32 to vector<8x8xf32>
    %77 = arith.mulf %75, %76 : vector<8x8xf32>
    %cst_43 = arith.constant dense<0xFF800000> : vector<8xf32>
    %78 = vector.multi_reduction <maximumf>, %77, %cst_43 [1] : vector<8x8xf32> to vector<8xf32>
    %79 = vector.shape_cast %78 : vector<8xf32> to vector<8x1xf32>
    %80 = vector.broadcast %79 : vector<8x1xf32> to vector<8x8xf32>
    %81 = arith.subf %77, %80 : vector<8x8xf32>
    %82 = math.exp %81 : vector<8x8xf32>
    %cst_44 = arith.constant dense<0.000000e+00> : vector<8xf32>
    %83 = vector.multi_reduction <add>, %82, %cst_44 [1] : vector<8x8xf32> to vector<8xf32>
    %84 = vector.shape_cast %83 : vector<8xf32> to vector<8x1xf32>
    %85 = tpu.reciprocal %84 {approx = true} : vector<8x1xf32> -> vector<8x1xf32>
    %86 = vector.broadcast %85 : vector<8x1xf32> to vector<8x8xf32>
    %87 = arith.mulf %82, %86 : vector<8x8xf32>
    %cst_45 = arith.constant dense<0.000000e+00> : vector<8x8xf32>
    %88 = tpu.matmul %87, %74, %cst_45 {dimension_numbers = #tpu.dot_dimension_numbers<[1], [0], [0], [1], [0, 0, 1, 1], [], []>} : vector<8x8xf32>, vector<8x8xf32>, vector<8x8xf32> -> vector<8x8xf32>
    %89 = tpu.concatenate %37, %54, %71, %88 in 1 : vector<8x8xf32>, vector<8x8xf32>, vector<8x8xf32>, vector<8x8xf32> -> vector<8x32xf32>
    %cst_46 = arith.constant dense<0.000000e+00> : vector<8x32xf32>
    %90 = tpu.matmul %89, %9, %cst_46 {dimension_numbers = #tpu.dot_dimension_numbers<[1], [0], [0], [1], [0, 0, 1, 1], [], []>} : vector<8x32xf32>, vector<32x32xf32>, vector<8x32xf32> -> vector<8x32xf32>
    %91 = vector.broadcast %10 : vector<1x32xf32> to vector<8x32xf32>
    %92 = arith.addf %90, %91 : vector<8x32xf32>
    %93 = vector.broadcast %15 : f32 to vector<8x32xf32>
    %94 = arith.mulf %93, %92 : vector<8x32xf32>
    %95 = arith.addf %0, %94 : vector<8x32xf32>
    %cst_47 = arith.constant dense<0.000000e+00> : vector<8x64xf32>
    %96 = tpu.matmul %95, %11, %cst_47 {dimension_numbers = #tpu.dot_dimension_numbers<[1], [0], [0], [1], [0, 0, 1, 1], [], []>} : vector<8x32xf32>, vector<32x64xf32>, vector<8x64xf32> -> vector<8x64xf32>
    %97 = vector.broadcast %12 : vector<1x64xf32> to vector<8x64xf32>
    %98 = arith.addf %96, %97 : vector<8x64xf32>
    %cst_48 = arith.constant 0.000000e+00 : f32
    %99 = vector.broadcast %cst_48 : f32 to vector<8x64xf32>
    %100 = arith.maximumf %98, %99 : vector<8x64xf32>
    %cst_49 = arith.constant dense<0.000000e+00> : vector<8x32xf32>
    %101 = tpu.matmul %100, %13, %cst_49 {dimension_numbers = #tpu.dot_dimension_numbers<[1], [0], [0], [1], [0, 0, 1, 1], [], []>} : vector<8x64xf32>, vector<64x32xf32>, vector<8x32xf32> -> vector<8x32xf32>
    %102 = vector.broadcast %14 : vector<1x32xf32> to vector<8x32xf32>
    %103 = arith.addf %101, %102 : vector<8x32xf32>
    %104 = vector.broadcast %15 : f32 to vector<8x32xf32>
    %105 = arith.mulf %104, %103 : vector<8x32xf32>
    %106 = arith.addf %95, %105 : vector<8x32xf32>
    %c0_50 = arith.constant 0 : index
    %c0_51 = arith.constant 0 : index
    %107 = vector.load %arg14[%c0_50, %c0_51] : memref<8x32xf32, #tpu.memory_space<vmem>>, vector<8x32xf32>
    tpu.vector_store %arg14[%c0_50, %c0_51], %106 {strides = array<i32>} : memref<8x32xf32, #tpu.memory_space<vmem>>, vector<8x32xf32>,
    return
  }
  func.func @transform_0(%arg0: i32) -> (i32, i32) {
    %c0_i32 = arith.constant 0 : i32
    %c0_i32_0 = arith.constant 0 : i32
    return %arg0, %c0_i32 : i32, i32
  }
  func.func @transform_1(%arg0: i32) -> (i32, i32) {
    %c0_i32 = arith.constant 0 : i32
    %c0_i32_0 = arith.constant 0 : i32
    return %arg0, %c0_i32 : i32, i32
  }
  func.func @transform_2(%arg0: i32) -> (i32, i32) {
    %c0_i32 = arith.constant 0 : i32
    %c0_i32_0 = arith.constant 0 : i32
    %c0_i32_1 = arith.constant 0 : i32
    return %c0_i32, %c0_i32_0 : i32, i32
  }
  func.func @transform_3(%arg0: i32) -> (i32, i32) {
    %c0_i32 = arith.constant 0 : i32
    %c0_i32_0 = arith.constant 0 : i32
    %c0_i32_1 = arith.constant 0 : i32
    return %c0_i32, %c0_i32_0 : i32, i32
  }
  func.func @transform_4(%arg0: i32) -> (i32, i32) {
    %c0_i32 = arith.constant 0 : i32
    %c0_i32_0 = arith.constant 0 : i32
    %c0_i32_1 = arith.constant 0 : i32
    return %c0_i32, %c0_i32_0 : i32, i32
  }
  func.func @transform_5(%arg0: i32) -> (i32, i32) {
    %c0_i32 = arith.constant 0 : i32
    %c0_i32_0 = arith.constant 0 : i32
    %c0_i32_1 = arith.constant 0 : i32
    return %c0_i32, %c0_i32_0 : i32, i32
  }
  func.func @transform_6(%arg0: i32) -> (i32, i32) {
    %c0_i32 = arith.constant 0 : i32
    %c0_i32_0 = arith.constant 0 : i32
    %c0_i32_1 = arith.constant 0 : i32
    return %c0_i32, %c0_i32_0 : i32, i32
  }
  func.func @transform_7(%arg0: i32) -> (i32, i32) {
    %c0_i32 = arith.constant 0 : i32
    %c0_i32_0 = arith.constant 0 : i32
    %c0_i32_1 = arith.constant 0 : i32
    return %c0_i32, %c0_i32_0 : i32, i32
  }
  func.func @transform_8(%arg0: i32) -> (i32, i32) {
    %c0_i32 = arith.constant 0 : i32
    %c0_i32_0 = arith.constant 0 : i32
    %c0_i32_1 = arith.constant 0 : i32
    return %c0_i32, %c0_i32_0 : i32, i32
  }
  func.func @transform_9(%arg0: i32) -> (i32, i32) {
    %c0_i32 = arith.constant 0 : i32
    %c0_i32_0 = arith.constant 0 : i32
    %c0_i32_1 = arith.constant 0 : i32
    return %c0_i32, %c0_i32_0 : i32, i32
  }
  func.func @transform_10(%arg0: i32) -> (i32, i32) {
    %c0_i32 = arith.constant 0 : i32
    %c0_i32_0 = arith.constant 0 : i32
    %c0_i32_1 = arith.constant 0 : i32
    return %c0_i32, %c0_i32_0 : i32, i32
  }
  func.func @transform_11(%arg0: i32) -> (i32, i32) {
    %c0_i32 = arith.constant 0 : i32
    %c0_i32_0 = arith.constant 0 : i32
    %c0_i32_1 = arith.constant 0 : i32
    return %c0_i32, %c0_i32_0 : i32, i32
  }
  func.func @transform_12(%arg0: i32) -> (i32, i32) {
    %c0_i32 = arith.constant 0 : i32
    %c0_i32_0 = arith.constant 0 : i32
    %c0_i32_1 = arith.constant 0 : i32
    return %c0_i32, %c0_i32_0 : i32, i32
  }
  func.func @transform_13(%arg0: i32) -> (i32, i32) {
    %c0_i32 = arith.constant 0 : i32
    %c0_i32_0 = arith.constant 0 : i32
    return %arg0, %c0_i32 : i32, i32
  }
}

</mosaic_0001>

<llo_original>
// kernel: unet_forward.6
$region0: #{unet_forward.6}
  #allocation0 [shape = 'u32[]', space=smem, size = 0x4, offset = 0x4, fixed_abs, tag = 'smem constant byte address 0x4 - core index']
  #allocation1 [shape = 'u32[144,128]{1,0:T(1,128)}', space=vmem, size = 0x12000, scoped, tag = 'internal scratch']
  #allocation2 [shape = 'f32[1,1]{1,0:T(1,128)S(6)}', space=smem, size = 0x200, scoped, tag = 'scoped memory for unet_forward.6']
  %s0 = inlined_call_operand.vmem [shape: f32[16,32], index: 0, kind: input, shape index: {}, may-alias: {0,2}]
  %s1 = inlined_call_operand.vmem [shape: f32[16,32], index: 1, kind: input, shape index: {}]
  %s2 = inlined_call_operand.vmem [shape: f32[16,32], index: 2, kind: input, shape index: {}, may-alias: {0,2}]
  %s3 = inlined_call_operand.vmem [shape: f32[32,32], index: 3, kind: input, shape index: {}]
  %s4 = inlined_call_operand.vmem [shape: f32[1,32], index: 4, kind: input, shape index: {}]
  %s5 = inlined_call_operand.vmem [shape: f32[32,64], index: 5, kind: input, shape index: {}]
  %s6 = inlined_call_operand.vmem [shape: f32[32,64], index: 6, kind: input, shape index: {}]
  %s7 = inlined_call_operand.vmem [shape: f32[1,64], index: 7, kind: input, shape index: {}]
  %s8 = inlined_call_operand.vmem [shape: f32[32,32], index: 8, kind: input, shape index: {}]
  %s9 = inlined_call_operand.vmem [shape: f32[1,32], index: 9, kind: input, shape index: {}]
  %s10 = inlined_call_operand.vmem [shape: f32[32,64], index: 10, kind: input, shape index: {}]
  %s11 = inlined_call_operand.vmem [shape: f32[1,64], index: 11, kind: input, shape index: {}]
  %s12 = inlined_call_operand.vmem [shape: f32[64,32], index: 12, kind: input, shape index: {}]
  %s13 = inlined_call_operand.vmem [shape: f32[1,32], index: 13, kind: input, shape index: {}]
  %s14 = inlined_call_operand.<no memory space> [shape: f32[1,1], index: 14, kind: input, shape index: {}]
  %s15 = inlined_call_operand.vmem [shape: f32[16,32], index: 15, kind: output, shape index: {}]
  %s16 = sld [smem:[#allocation0]]
  $region93: #{unet_forward.6} parent=0
    _
  %s18 = ssub.s32 1, %s16
  %s19 = scalar_select 0, %s18, %s16
  %20 = sst [smem:[#allocation2]] %s14
  loop: start=0, step=1, limit=4
  $region2: #{unet_forward.6} parent=0 // loop_pre_header
    _
  $region3: #{unet_forward.6} parent=0 // loop_header
    %s22 = sphi 0, %s26
    %p23 = scmp.ge.s32.totalorder %s22, 4
    %s32 = sphi 0, %s34
    %s35 = sphi 0, %s32
    %s36 = sphi 0, %s35
    %s52 = sphi 0, %s36
    %s58 = sphi 0, %s60
    %s61 = sphi 0, %s58
    %s62 = sphi 0, %s61
    %s78 = sphi 0, %s62
    %s84 = sphi 0, %s86
    %s87 = sphi 0, %s84
    %s88 = sphi 0, %s87
    %s104 = sphi 0, %s88
    %s108 = sphi 0, %s108
    %s110 = sphi 0, %s108
    %s111 = sphi 0, %s110
    %s125 = sphi 0, %s111
    %s129 = sphi 0, %s129
    %s131 = sphi 0, %s129
    %s132 = sphi 0, %s131
    %s146 = sphi 0, %s132
    %s150 = sphi 0, %s150
    %s152 = sphi 0, %s150
    %s153 = sphi 0, %s152
    %s167 = sphi 0, %s153
    %s171 = sphi 0, %s171
    %s173 = sphi 0, %s171
    %s174 = sphi 0, %s173
    %s188 = sphi 0, %s174
    %s192 = sphi 0, %s192
    %s194 = sphi 0, %s192
    %s195 = sphi 0, %s194
    %s209 = sphi 0, %s195
    %s213 = sphi 0, %s213
    %s215 = sphi 0, %s213
    %s216 = sphi 0, %s215
    %s230 = sphi 0, %s216
    %s234 = sphi 0, %s234
    %s236 = sphi 0, %s234
    %s237 = sphi 0, %s236
    %s251 = sphi 0, %s237
    %s255 = sphi 0, %s255
    %s257 = sphi 0, %s255
    %s258 = sphi 0, %s257
    %s272 = sphi 0, %s258
    %s276 = sphi 0, %s276
    %s278 = sphi 0, %s276
    %s279 = sphi 0, %s278
    %s293 = sphi 0, %s279
    %s297 = sphi 0, %s297
    %s299 = sphi 0, %s297
    %s300 = sphi 0, %s299
    %s314 = sphi 0, %s300
    %s318 = sphi 0, %s318
    %s320 = sphi 0, %s318
    %s321 = sphi 0, %s320
    %s335 = sphi 0, %s321
    %s339 = sphi 0, %s339
    %s341 = sphi 0, %s339
    %s342 = sphi 0, %s341
    %s356 = sphi 0, %s342
    %s362 = sphi 0, %s364
    %s365 = sphi 0, %s362
    %s366 = sphi 0, %s365
    %s382 = sphi 0, %s366
  $region4: #{unet_forward.6} parent=0 // loop_header_branch
    %25 = sbr.rel (%p23) target = $region8
  $region5: #{unet_forward.6} parent=0 // loop_body
    %s27 = ssub.s32 %s22, 1
    %s28 = ssub.s32 %s22, 2
    %s29 = sadd.s32 %s22, 1
    %s30 = ssub.s32 %s22, %s29
    %p31 = scmp.eq.s32.totalorder %s30, 0
    %s33 = sadd.s32 %s32, 1
    %s34 = scalar_select %p31, %s32, %s33
    %p37 = pneg %p31
    %p38 = scmp.eq.s32.totalorder %s22, 1
    %p39 = por %p37, %p38
    %p40 = scmp.ne.s32.totalorder %s32, %s35
    %p41 = scmp.eq.s32.totalorder %s22, 0
    %p42 = por %p40, %p41
    %p43 = scmp.ne.s32.totalorder %s32, %s35
    %p44 = scmp.eq.s32.totalorder %s27, 1
    %p45 = por %p43, %p44
    %p46 = scmp.ne.s32.totalorder %s35, %s36
    %p47 = scmp.eq.s32.totalorder %s27, 0
    %p48 = por %p46, %p47
    %p49 = scmp.ne.s32.totalorder %s35, %s36
    %p50 = scmp.eq.s32.totalorder %s28, 1
    %p51 = por %p49, %p50
    %p53 = scmp.ne.s32.totalorder %s36, %s52
    %p54 = scmp.eq.s32.totalorder %s28, 0
    %p55 = por %p53, %p54
    %s56 = ssub.s32 %s22, %s29
    %p57 = scmp.eq.s32.totalorder %s56, 0
    %s59 = sadd.s32 %s58, 1
    %s60 = scalar_select %p57, %s58, %s59
    %p63 = pneg %p57
    %p64 = scmp.eq.s32.totalorder %s22, 1
    %p65 = por %p63, %p64
    %p66 = scmp.ne.s32.totalorder %s58, %s61
    %p67 = scmp.eq.s32.totalorder %s22, 0
    %p68 = por %p66, %p67
    %p69 = scmp.ne.s32.totalorder %s58, %s61
    %p70 = scmp.eq.s32.totalorder %s27, 1
    %p71 = por %p69, %p70
    %p72 = scmp.ne.s32.totalorder %s61, %s62
    %p73 = scmp.eq.s32.totalorder %s27, 0
    %p74 = por %p72, %p73
    %p75 = scmp.ne.s32.totalorder %s61, %s62
    %p76 = scmp.eq.s32.totalorder %s28, 1
    %p77 = por %p75, %p76
    %p79 = scmp.ne.s32.totalorder %s62, %s78
    %p80 = scmp.eq.s32.totalorder %s28, 0
    %p81 = por %p79, %p80
    %s82 = ssub.s32 %s22, %s29
    %p83 = scmp.eq.s32.totalorder %s82, 0
    %s85 = sadd.s32 %s84, 1
    %s86 = scalar_select %p83, %s84, %s85
    %p89 = pneg %p83
    %p90 = scmp.eq.s32.totalorder %s22, 1
    %p91 = por %p89, %p90
    %p92 = scmp.ne.s32.totalorder %s84, %s87
    %p93 = scmp.eq.s32.totalorder %s22, 0
    %p94 = por %p92, %p93
    %p95 = scmp.ne.s32.totalorder %s84, %s87
    %p96 = scmp.eq.s32.totalorder %s27, 1
    %p97 = por %p95, %p96
    %p98 = scmp.ne.s32.totalorder %s87, %s88
    %p99 = scmp.eq.s32.totalorder %s27, 0
    %p100 = por %p98, %p99
    %p101 = scmp.ne.s32.totalorder %s87, %s88
    %p102 = scmp.eq.s32.totalorder %s28, 1
    %p103 = por %p101, %p102
    %p105 = scmp.ne.s32.totalorder %s88, %s104
    %p106 = scmp.eq.s32.totalorder %s28, 0
    %p107 = por %p105, %p106
    %s109 = sadd.s32 %s108, 1
    %p112 = scmp.eq.s32.totalorder %s22, 1
    %p113 = scmp.ne.s32.totalorder %s108, %s110
    %p114 = scmp.eq.s32.totalorder %s22, 0
    %p115 = por %p113, %p114
    %p116 = scmp.ne.s32.totalorder %s108, %s110
    %p117 = scmp.eq.s32.totalorder %s27, 1
    %p118 = por %p116, %p117
    %p119 = scmp.ne.s32.totalorder %s110, %s111
    %p120 = scmp.eq.s32.totalorder %s27, 0
    %p121 = por %p119, %p120
    %p122 = scmp.ne.s32.totalorder %s110, %s111
    %p123 = scmp.eq.s32.totalorder %s28, 1
    %p124 = por %p122, %p123
    %p126 = scmp.ne.s32.totalorder %s111, %s125
    %p127 = scmp.eq.s32.totalorder %s28, 0
    %p128 = por %p126, %p127
    %s130 = sadd.s32 %s129, 1
    %p133 = scmp.eq.s32.totalorder %s22, 1
    %p134 = scmp.ne.s32.totalorder %s129, %s131
    %p135 = scmp.eq.s32.totalorder %s22, 0
    %p136 = por %p134, %p135
    %p137 = scmp.ne.s32.totalorder %s129, %s131
    %p138 = scmp.eq.s32.totalorder %s27, 1
    %p139 = por %p137, %p138
    %p140 = scmp.ne.s32.totalorder %s131, %s132
    %p141 = scmp.eq.s32.totalorder %s27, 0
    %p142 = por %p140, %p141
    %p143 = scmp.ne.s32.totalorder %s131, %s132
    %p144 = scmp.eq.s32.totalorder %s28, 1
    %p145 = por %p143, %p144
    %p147 = scmp.ne.s32.totalorder %s132, %s146
    %p148 = scmp.eq.s32.totalorder %s28, 0
    %p149 = por %p147, %p148
    %s151 = sadd.s32 %s150, 1
    %p154 = scmp.eq.s32.totalorder %s22, 1
    %p155 = scmp.ne.s32.totalorder %s150, %s152
    %p156 = scmp.eq.s32.totalorder %s22, 0
    %p157 = por %p155, %p156
    %p158 = scmp.ne.s32.totalorder %s150, %s152
    %p159 = scmp.eq.s32.totalorder %s27, 1
    %p160 = por %p158, %p159
    %p161 = scmp.ne.s32.totalorder %s152, %s153
    %p162 = scmp.eq.s32.totalorder %s27, 0
    %p163 = por %p161, %p162
    %p164 = scmp.ne.s32.totalorder %s152, %s153
    %p165 = scmp.eq.s32.totalorder %s28, 1
    %p166 = por %p164, %p165
    %p168 = scmp.ne.s32.totalorder %s153, %s167
    %p169 = scmp.eq.s32.totalorder %s28, 0
    %p170 = por %p168, %p169
    %s172 = sadd.s32 %s171, 1
    %p175 = scmp.eq.s32.totalorder %s22, 1
    %p176 = scmp.ne.s32.totalorder %s171, %s173
    %p177 = scmp.eq.s32.totalorder %s22, 0
    %p178 = por %p176, %p177
    %p179 = scmp.ne.s32.totalorder %s171, %s173
    %p180 = scmp.eq.s32.totalorder %s27, 1
    %p181 = por %p179, %p180
    %p182 = scmp.ne.s32.totalorder %s173, %s174
    %p183 = scmp.eq.s32.totalorder %s27, 0
    %p184 = por %p182, %p183
    %p185 = scmp.ne.s32.totalorder %s173, %s174
    %p186 = scmp.eq.s32.totalorder %s28, 1
    %p187 = por %p185, %p186
    %p189 = scmp.ne.s32.totalorder %s174, %s188
    %p190 = scmp.eq.s32.totalorder %s28, 0
    %p191 = por %p189, %p190
    %s193 = sadd.s32 %s192, 1
    %p196 = scmp.eq.s32.totalorder %s22, 1
    %p197 = scmp.ne.s32.totalorder %s192, %s194
    %p198 = scmp.eq.s32.totalorder %s22, 0
    %p199 = por %p197, %p198
    %p200 = scmp.ne.s32.totalorder %s192, %s194
    %p201 = scmp.eq.s32.totalorder %s27, 1
    %p202 = por %p200, %p201
    %p203 = scmp.ne.s32.totalorder %s194, %s195
    %p204 = scmp.eq.s32.totalorder %s27, 0
    %p205 = por %p203, %p204
    %p206 = scmp.ne.s32.totalorder %s194, %s195
    %p207 = scmp.eq.s32.totalorder %s28, 1
    %p208 = por %p206, %p207
    %p210 = scmp.ne.s32.totalorder %s195, %s209
    %p211 = scmp.eq.s32.totalorder %s28, 0
    %p212 = por %p210, %p211
    %s214 = sadd.s32 %s213, 1
    %p217 = scmp.eq.s32.totalorder %s22, 1
    %p218 = scmp.ne.s32.totalorder %s213, %s215
    %p219 = scmp.eq.s32.totalorder %s22, 0
    %p220 = por %p218, %p219
    %p221 = scmp.ne.s32.totalorder %s213, %s215
    %p222 = scmp.eq.s32.totalorder %s27, 1
    %p223 = por %p221, %p222
    %p224 = scmp.ne.s32.totalorder %s215, %s216
    %p225 = scmp.eq.s32.totalorder %s27, 0
    %p226 = por %p224, %p225
    %p227 = scmp.ne.s32.totalorder %s215, %s216
    %p228 = scmp.eq.s32.totalorder %s28, 1
    %p229 = por %p227, %p228
    %p231 = scmp.ne.s32.totalorder %s216, %s230
    %p232 = scmp.eq.s32.totalorder %s28, 0
    %p233 = por %p231, %p232
    %s235 = sadd.s32 %s234, 1
    %p238 = scmp.eq.s32.totalorder %s22, 1
    %p239 = scmp.ne.s32.totalorder %s234, %s236
    %p240 = scmp.eq.s32.totalorder %s22, 0
    %p241 = por %p239, %p240
    %p242 = scmp.ne.s32.totalorder %s234, %s236
    %p243 = scmp.eq.s32.totalorder %s27, 1
    %p244 = por %p242, %p243
    %p245 = scmp.ne.s32.totalorder %s236, %s237
    %p246 = scmp.eq.s32.totalorder %s27, 0
    %p247 = por %p245, %p246
    %p248 = scmp.ne.s32.totalorder %s236, %s237
    %p249 = scmp.eq.s32.totalorder %s28, 1
    %p250 = por %p248, %p249
    %p252 = scmp.ne.s32.totalorder %s237, %s251
    %p253 = scmp.eq.s32.totalorder %s28, 0
    %p254 = por %p252, %p253
    %s256 = sadd.s32 %s255, 1
    %p259 = scmp.eq.s32.totalorder %s22, 1
    %p260 = scmp.ne.s32.totalorder %s255, %s257
    %p261 = scmp.eq.s32.totalorder %s22, 0
    %p262 = por %p260, %p261
    %p263 = scmp.ne.s32.totalorder %s255, %s257
    %p264 = scmp.eq.s32.totalorder %s27, 1
    %p265 = por %p263, %p264
    %p266 = scmp.ne.s32.totalorder %s257, %s258
    %p267 = scmp.eq.s32.totalorder %s27, 0
    %p268 = por %p266, %p267
    %p269 = scmp.ne.s32.totalorder %s257, %s258
    %p270 = scmp.eq.s32.totalorder %s28, 1
    %p271 = por %p269, %p270
    %p273 = scmp.ne.s32.totalorder %s258, %s272
    %p274 = scmp.eq.s32.totalorder %s28, 0
    %p275 = por %p273, %p274
    %s277 = sadd.s32 %s276, 1
    %p280 = scmp.eq.s32.totalorder %s22, 1
    %p281 = scmp.ne.s32.totalorder %s276, %s278
    %p282 = scmp.eq.s32.totalorder %s22, 0
    %p283 = por %p281, %p282
    %p284 = scmp.ne.s32.totalorder %s276, %s278
    %p285 = scmp.eq.s32.totalorder %s27, 1
    %p286 = por %p284, %p285
    %p287 = scmp.ne.s32.totalorder %s278, %s279
    %p288 = scmp.eq.s32.totalorder %s27, 0
    %p289 = por %p287, %p288
    %p290 = scmp.ne.s32.totalorder %s278, %s279
    %p291 = scmp.eq.s32.totalorder %s28, 1
    %p292 = por %p290, %p291
    %p294 = scmp.ne.s32.totalorder %s279, %s293
    %p295 = scmp.eq.s32.totalorder %s28, 0
    %p296 = por %p294, %p295
    %s298 = sadd.s32 %s297, 1
    %p301 = scmp.eq.s32.totalorder %s22, 1
    %p302 = scmp.ne.s32.totalorder %s297, %s299
    %p303 = scmp.eq.s32.totalorder %s22, 0
    %p304 = por %p302, %p303
    %p305 = scmp.ne.s32.totalorder %s297, %s299
    %p306 = scmp.eq.s32.totalorder %s27, 1
    %p307 = por %p305, %p306
    %p308 = scmp.ne.s32.totalorder %s299, %s300
    %p309 = scmp.eq.s32.totalorder %s27, 0
    %p310 = por %p308, %p309
    %p311 = scmp.ne.s32.totalorder %s299, %s300
    %p312 = scmp.eq.s32.totalorder %s28, 1
    %p313 = por %p311, %p312
    %p315 = scmp.ne.s32.totalorder %s300, %s314
    %p316 = scmp.eq.s32.totalorder %s28, 0
    %p317 = por %p315, %p316
    %s319 = sadd.s32 %s318, 1
    %p322 = scmp.eq.s32.totalorder %s22, 1
    %p323 = scmp.ne.s32.totalorder %s318, %s320
    %p324 = scmp.eq.s32.totalorder %s22, 0
    %p325 = por %p323, %p324
    %p326 = scmp.ne.s32.totalorder %s318, %s320
    %p327 = scmp.eq.s32.totalorder %s27, 1
    %p328 = por %p326, %p327
    %p329 = scmp.ne.s32.totalorder %s320, %s321
    %p330 = scmp.eq.s32.totalorder %s27, 0
    %p331 = por %p329, %p330
    %p332 = scmp.ne.s32.totalorder %s320, %s321
    %p333 = scmp.eq.s32.totalorder %s28, 1
    %p334 = por %p332, %p333
    %p336 = scmp.ne.s32.totalorder %s321, %s335
    %p337 = scmp.eq.s32.totalorder %s28, 0
    %p338 = por %p336, %p337
    %s340 = sadd.s32 %s339, 1
    %p343 = scmp.eq.s32.totalorder %s22, 1
    %p344 = scmp.ne.s32.totalorder %s339, %s341
    %p345 = scmp.eq.s32.totalorder %s22, 0
    %p346 = por %p344, %p345
    %p347 = scmp.ne.s32.totalorder %s339, %s341
    %p348 = scmp.eq.s32.totalorder %s27, 1
    %p349 = por %p347, %p348
    %p350 = scmp.ne.s32.totalorder %s341, %s342
    %p351 = scmp.eq.s32.totalorder %s27, 0
    %p352 = por %p350, %p351
    %p353 = scmp.ne.s32.totalorder %s341, %s342
    %p354 = scmp.eq.s32.totalorder %s28, 1
    %p355 = por %p353, %p354
    %p357 = scmp.ne.s32.totalorder %s342, %s356
    %p358 = scmp.eq.s32.totalorder %s28, 0
    %p359 = por %p357, %p358
    %s360 = ssub.s32 %s22, %s29
    %p361 = scmp.eq.s32.totalorder %s360, 0
    %s363 = sadd.s32 %s362, 1
    %s364 = scalar_select %p361, %s362, %s363
    %p367 = pneg %p361
    %p368 = scmp.eq.s32.totalorder %s22, 1
    %p369 = por %p367, %p368
    %p370 = scmp.ne.s32.totalorder %s362, %s365
    %p371 = scmp.eq.s32.totalorder %s22, 0
    %p372 = por %p370, %p371
    %p373 = scmp.ne.s32.totalorder %s362, %s365
    %p374 = scmp.eq.s32.totalorder %s27, 1
    %p375 = por %p373, %p374
    %p376 = scmp.ne.s32.totalorder %s365, %s366
    %p377 = scmp.eq.s32.totalorder %s27, 0
    %p378 = por %p376, %p377
    %p379 = scmp.ne.s32.totalorder %s365, %s366
    %p380 = scmp.eq.s32.totalorder %s28, 1
    %p381 = por %p379, %p380
    %p383 = scmp.ne.s32.totalorder %s366, %s382
    %p384 = scmp.eq.s32.totalorder %s28, 0
    %p385 = por %p383, %p384
    %p386 = scmp.le.s32.totalorder 1, %s22
    %p387 = scmp.lt.s32.totalorder %s22, 3
    %p388 = pnand %p386, %p387
    %p389 = pneg %p388
    // Predicated region
    $region9: #{unet_forward.6} parent=5 // pred_check
      _
    $region10: #{unet_forward.6} parent=5 // pred_check_branch
      %391 = sbr.rel (%p388) target = $region12
    $region11: #{unet_forward.6} parent=5 // pred_region
      %s392 = ssub.s32 %s22, 1
      // Predicated region
      $region13: #{unet_forward.6} parent=11 // pred_check
        %p393 = pneg %p121
      $region14: #{unet_forward.6} parent=11 // pred_check_branch
        %395 = sbr.rel (%p393) target = $region16
      $region15: #{unet_forward.6} parent=11 // pred_region
        _
      $region16: #{unet_forward.6} parent=11 // pred_fallthru
        _
      // Predicated region
      $region17: #{unet_forward.6} parent=11 // pred_check
        %p396 = pneg %p142
      $region18: #{unet_forward.6} parent=11 // pred_check_branch
        %398 = sbr.rel (%p396) target = $region20
      $region19: #{unet_forward.6} parent=11 // pred_region
        _
      $region20: #{unet_forward.6} parent=11 // pred_fallthru
        _
      // Predicated region
      $region21: #{unet_forward.6} parent=11 // pred_check
        %p399 = pneg %p163
      $region22: #{unet_forward.6} parent=11 // pred_check_branch
        %401 = sbr.rel (%p399) target = $region24
      $region23: #{unet_forward.6} parent=11 // pred_region
        _
      $region24: #{unet_forward.6} parent=11 // pred_fallthru
        _
      // Predicated region
      $region25: #{unet_forward.6} parent=11 // pred_check
        %p402 = pneg %p184
      $region26: #{unet_forward.6} parent=11 // pred_check_branch
        %404 = sbr.rel (%p402) target = $region28
      $region27: #{unet_forward.6} parent=11 // pred_region
        _
      $region28: #{unet_forward.6} parent=11 // pred_fallthru
        _
      // Predicated region
      $region29: #{unet_forward.6} parent=11 // pred_check
        %p405 = pneg %p205
      $region30: #{unet_forward.6} parent=11 // pred_check_branch
        %407 = sbr.rel (%p405) target = $region32
      $region31: #{unet_forward.6} parent=11 // pred_region
        _
      $region32: #{unet_forward.6} parent=11 // pred_fallthru
        _
      // Predicated region
      $region33: #{unet_forward.6} parent=11 // pred_check
        %p408 = pneg %p226
      $region34: #{unet_forward.6} parent=11 // pred_check_branch
        %410 = sbr.rel (%p408) target = $region36
      $region35: #{unet_forward.6} parent=11 // pred_region
        _
      $region36: #{unet_forward.6} parent=11 // pred_fallthru
        _
      // Predicated region
      $region37: #{unet_forward.6} parent=11 // pred_check
        %p411 = pneg %p247
      $region38: #{unet_forward.6} parent=11 // pred_check_branch
        %413 = sbr.rel (%p411) target = $region40
      $region39: #{unet_forward.6} parent=11 // pred_region
        _
      $region40: #{unet_forward.6} parent=11 // pred_fallthru
        _
      // Predicated region
      $region41: #{unet_forward.6} parent=11 // pred_check
        %p414 = pneg %p268
      $region42: #{unet_forward.6} parent=11 // pred_check_branch
        %416 = sbr.rel (%p414) target = $region44
      $region43: #{unet_forward.6} parent=11 // pred_region
        _
      $region44: #{unet_forward.6} parent=11 // pred_fallthru
        _
      // Predicated region
      $region45: #{unet_forward.6} parent=11 // pred_check
        %p417 = pneg %p289
      $region46: #{unet_forward.6} parent=11 // pred_check_branch
        %419 = sbr.rel (%p417) target = $region48
      $region47: #{unet_forward.6} parent=11 // pred_region
        _
      $region48: #{unet_forward.6} parent=11 // pred_fallthru
        _
      // Predicated region
      $region49: #{unet_forward.6} parent=11 // pred_check
        %p420 = pneg %p310
      $region50: #{unet_forward.6} parent=11 // pred_check_branch
        %422 = sbr.rel (%p420) target = $region52
      $region51: #{unet_forward.6} parent=11 // pred_region
        _
      $region52: #{unet_forward.6} parent=11 // pred_fallthru
        _
      // Predicated region
      $region53: #{unet_forward.6} parent=11 // pred_check
        %p423 = pneg %p331
      $region54: #{unet_forward.6} parent=11 // pred_check_branch
        %425 = sbr.rel (%p423) target = $region56
      $region55: #{unet_forward.6} parent=11 // pred_region
        _
      $region56: #{unet_forward.6} parent=11 // pred_fallthru
        _
      // Predicated region
      $region57: #{unet_forward.6} parent=11 // pred_check
        %p426 = pneg %p352
      $region58: #{unet_forward.6} parent=11 // pred_check_branch
        %428 = sbr.rel (%p426) target = $region60
      $region59: #{unet_forward.6} parent=11 // pred_region
        _
      $region60: #{unet_forward.6} parent=11 // pred_fallthru
        _
    $region12: #{unet_forward.6} parent=5 // pred_fallthru
      _
    %p429 = scmp.lt.s32.totalorder %s22, 2
    // Predicated region
    $region61: #{unet_forward.6} parent=5 // pred_check
      %p430 = pneg %p429
    $region62: #{unet_forward.6} parent=5 // pred_check_branch
      %432 = sbr.rel (%p430) target = $region64
    $region63: #{unet_forward.6} parent=5 // pred_region
      // Predicated region
      $region65: #{unet_forward.6} parent=63 // pred_check
        %p433 = pneg %p42
      $region66: #{unet_forward.6} parent=63 // pred_check_branch
        %435 = sbr.rel (%p433) target = $region68
      $region67: #{unet_forward.6} parent=63 // pred_region
        %p436 = scmp.lt.s32.totalorder %s22, 1
        %s437 = scalar_select %p436, %s22, 1
        %s438 = smul.addr %s437, 8
        %s439 = scalar_lea.vmem %s0, %s438
      $region68: #{unet_forward.6} parent=63 // pred_fallthru
        _
      // Predicated region
      $region69: #{unet_forward.6} parent=63 // pred_check
        %p440 = pneg %p68
      $region70: #{unet_forward.6} parent=63 // pred_check_branch
        %442 = sbr.rel (%p440) target = $region72
      $region71: #{unet_forward.6} parent=63 // pred_region
        %p443 = scmp.lt.s32.totalorder %s22, 1
        %s444 = scalar_select %p443, %s22, 1
        %s445 = smul.addr %s444, 8
        %s446 = scalar_lea.vmem %s1, %s445
      $region72: #{unet_forward.6} parent=63 // pred_fallthru
        _
      // Predicated region
      $region73: #{unet_forward.6} parent=63 // pred_check
        %p447 = pneg %p94
      $region74: #{unet_forward.6} parent=63 // pred_check_branch
        %449 = sbr.rel (%p447) target = $region76
      $region75: #{unet_forward.6} parent=63 // pred_region
        %p450 = scmp.lt.s32.totalorder %s22, 1
        %s451 = scalar_select %p450, %s22, 1
        %s452 = smul.addr %s451, 8
        %s453 = scalar_lea.vmem %s2, %s452
      $region76: #{unet_forward.6} parent=63 // pred_fallthru
        _
    $region64: #{unet_forward.6} parent=5 // pred_fallthru
      _
    %p454 = scmp.le.s32.totalorder 1, %s22
    %p455 = scmp.lt.s32.totalorder %s22, 3
    %p456 = pnand %p454, %p455
    %p457 = pneg %p456
    // Predicated region
    $region77: #{unet_forward.6} parent=5 // pred_check
      _
    $region78: #{unet_forward.6} parent=5 // pred_check_branch
      %459 = sbr.rel (%p456) target = $region80
    $region79: #{unet_forward.6} parent=5 // pred_region
      %s460 = ssub.s32 %s22, 1
      %p461 = scmp.lt.s32.totalorder %s27, 1
      %s462 = scalar_select %p461, %s27, 1
      %s463 = smul.addr %s462, 8
      %s464 = scalar_lea.vmem %s0, %s463
      %p465 = pneg %p48
      %p466 = pneg %p45
      %p467 = scmp.lt.s32.totalorder %s27, 1
      %s468 = scalar_select %p467, %s27, 1
      %s469 = smul.addr %s468, 8
      %s470 = scalar_lea.vmem %s1, %s469
      %p471 = pneg %p74
      %p472 = pneg %p71
      %p473 = scmp.lt.s32.totalorder %s27, 1
      %s474 = scalar_select %p473, %s27, 1
      %s475 = smul.addr %s474, 8
      %s476 = scalar_lea.vmem %s2, %s475
      %p477 = pneg %p100
      %p478 = pneg %p97
      %p479 = pneg %p121
      %p480 = pneg %p118
      %p481 = pneg %p142
      %p482 = pneg %p139
      %p483 = pneg %p163
      %p484 = pneg %p160
      %p485 = pneg %p184
      %p486 = pneg %p181
      %p487 = pneg %p205
      %p488 = pneg %p202
      %p489 = pneg %p226
      %p490 = pneg %p223
      %p491 = pneg %p247
      %p492 = pneg %p244
      %p493 = pneg %p268
      %p494 = pneg %p265
      %p495 = pneg %p289
      %p496 = pneg %p286
      %p497 = pneg %p310
      %p498 = pneg %p307
      %p499 = pneg %p331
      %p500 = pneg %p328
      %p501 = pneg %p352
      %p502 = pneg %p349
      %p503 = pneg %p378
      %p504 = pneg %p375
      %p505 = scmp.lt.s32.totalorder %s27, 1
      %s506 = scalar_select %p505, %s27, 1
      %s507 = smul.addr %s506, 8
      %s508 = scalar_lea.vmem %s15, %s507
      %p509 = scmp.lt.s32.totalorder %s27, 1
      %s510 = scalar_select %p509, %s27, 1
      %s511 = smul.addr %s510, 8
      %s512 = scalar_lea.vmem %s0, %s511
      %p513 = scmp.lt.s32.totalorder %s27, 1
      %s514 = scalar_select %p513, %s27, 1
      %s515 = smul.addr %s514, 8
      %s516 = scalar_lea.vmem %s1, %s515
      %p517 = scmp.lt.s32.totalorder %s27, 1
      %s518 = scalar_select %p517, %s27, 1
      %s519 = smul.addr %s518, 8
      %s520 = scalar_lea.vmem %s2, %s519
      %p521 = scmp.lt.s32.totalorder %s27, 1
      %s522 = scalar_select %p521, %s27, 1
      %s523 = smul.addr %s522, 8
      %s524 = scalar_lea.vmem %s15, %s523
      %v525 = vld [vmem:[%s516] sm:$0xff]
      %v526 = vld [vmem:[%s520] sm:$0xff]
      %v527 = vld [vmem:[%s5] sm:$0xff]
      %v528 = vld [vmem:[%s5 + $0x8] sm:$0xff]
      %v529 = vld [vmem:[%s5 + $0x10] sm:$0xff]
      %v530 = vld [vmem:[%s5 + $0x18] sm:$0xff]
      %v531 = vld [vmem:[%s6] sm:$0xff]
      %v532 = vld [vmem:[%s6 + $0x8] sm:$0xff]
      %v533 = vld [vmem:[%s6 + $0x10] sm:$0xff]
      %v534 = vld [vmem:[%s6 + $0x18] sm:$0xff]
      %vm535 = vcmask 261120
      %v537 = vsel %vm535, %v526, 0
      %539 = vmatprep.subr.mxu0 0.0
      %540 = vmatpush1.msra.mxu0 %v531
      %541 = vmatprep.subr.mxu0 0.0
      %542 = vmatpush1.msra.mxu0 %v532
      %543 = vmatprep.subr.mxu0 0.0
      %544 = vmatpush1.msra.mxu0 %v533
      %545 = vmatprep.subr.mxu0 0.0
      %546 = vmatpush1.msra.mxu0 %v534
      %547 = vmatprep.subr.mxu0 0.0
      %548 = vmatpush1.msra.mxu0 0.0
      %549 = vmatprep.subr.mxu0 0.0
      %550 = vmatpush1.msra.mxu0 0.0
      %551 = vmatprep.subr.mxu0 0.0
      %552 = vmatpush1.msra.mxu0 0.0
      %553 = vmatprep.subr.mxu0 0.0
      %554 = vmatpush1.msra.mxu0 0.0
      %555 = vmatprep.subr.mxu0 0.0
      %556 = vmatpush1.msra.mxu0 0.0
      %557 = vmatprep.subr.mxu0 0.0
      %558 = vmatpush1.msra.mxu0 0.0
      %559 = vmatprep.subr.mxu0 0.0
      %560 = vmatpush1.msra.mxu0 0.0
      %561 = vmatprep.subr.mxu0 0.0
      %562 = vmatpush1.msra.mxu0 0.0
      %563 = vmatprep.subr.mxu0 0.0
      %564 = vmatpush1.msra.mxu0 0.0
      %565 = vmatprep.subr.mxu0 0.0
      %566 = vmatpush1.msra.mxu0 0.0
      %567 = vmatprep.subr.mxu0 0.0
      %568 = vmatpush1.msra.mxu0 0.0
      %569 = vmatprep.subr.mxu0 0.0
      %570 = vmatpush1.msra.mxu0 0.0
      %571 = vmatprep.subr.mxu0 0.0
      %572 = vmatpush1.msra.mxu0 0.0
      %573 = vmatprep.subr.mxu0 0.0
      %574 = vmatpush1.msra.mxu0 0.0
      %575 = vmatprep.subr.mxu0 0.0
      %576 = vmatpush1.msra.mxu0 0.0
      %577 = vmatprep.subr.mxu0 0.0
      %578 = vmatpush1.msra.mxu0 0.0
      %579 = vmatprep.subr.mxu0 0.0
      %580 = vmatpush1.msra.mxu0 0.0
      %581 = vmatprep.subr.mxu0 0.0
      %582 = vmatpush1.msra.mxu0 0.0
      %583 = vmatprep.subr.mxu0 0.0
      %584 = vmatpush1.msra.mxu0 0.0
      %585 = vmatprep.subr.mxu0 0.0
      %586 = vmatpush1.msra.mxu0 0.0
      %587 = vmatprep.subr.mxu0 0.0
      %588 = vmatpush1.msra.mxu0 0.0
      %589 = vmatprep.subr.mxu0 0.0
      %590 = vmatpush1.msra.mxu0 0.0
      %591 = vmatprep.subr.mxu0 0.0
      %592 = vmatpush1.msra.mxu0 0.0
      %593 = vmatprep.subr.mxu0 0.0
      %594 = vmatpush1.msra.mxu0 0.0
      %595 = vmatprep.subr.mxu0 0.0
      %596 = vmatpush1.msra.mxu0 0.0
      %597 = vmatprep.subr.mxu0 0.0
      %598 = vmatpush1.msra.mxu0 0.0
      %599 = vmatprep.subr.mxu0 0.0
      %600 = vmatpush1.msra.mxu0 0.0
      %601 = vmatprep.subr.mxu0 0.0
      %602 = vmatpush1.msra.mxu0 0.0
      %603 = vmatprep.mubr.f32.mxu0 0.0
      %604 = vmatmul.mubr.f32.gmra.mrb[0].mxu0 %v537
      %v605 = vpop.f32.mrb[0].mxu0
      %v606 = vadd.f32 0.0, %v605
      %v607 = vpop.f32.mrb[0].mxu0
      %608 = vdwg.mxu0
      %v610 = vsel %vm535, %v525, 0
      %612 = vmatprep.subr.mxu0 0.0
      %613 = vmatpush1.msra.mxu0 %v527
      %614 = vmatprep.subr.mxu0 0.0
      %615 = vmatpush1.msra.mxu0 %v528
      %616 = vmatprep.subr.mxu0 0.0
      %617 = vmatpush1.msra.mxu0 %v529
      %618 = vmatprep.subr.mxu0 0.0
      %619 = vmatpush1.msra.mxu0 %v530
      %620 = vmatprep.subr.mxu0 0.0
      %621 = vmatpush1.msra.mxu0 0.0
      %622 = vmatprep.subr.mxu0 0.0
      %623 = vmatpush1.msra.mxu0 0.0
      %624 = vmatprep.subr.mxu0 0.0
      %625 = vmatpush1.msra.mxu0 0.0
      %626 = vmatprep.subr.mxu0 0.0
      %627 = vmatpush1.msra.mxu0 0.0
      %628 = vmatprep.subr.mxu0 0.0
      %629 = vmatpush1.msra.mxu0 0.0
      %630 = vmatprep.subr.mxu0 0.0
      %631 = vmatpush1.msra.mxu0 0.0
      %632 = vmatprep.subr.mxu0 0.0
      %633 = vmatpush1.msra.mxu0 0.0
      %634 = vmatprep.subr.mxu0 0.0
      %635 = vmatpush1.msra.mxu0 0.0
      %636 = vmatprep.subr.mxu0 0.0
      %637 = vmatpush1.msra.mxu0 0.0
      %638 = vmatprep.subr.mxu0 0.0
      %639 = vmatpush1.msra.mxu0 0.0
      %640 = vmatprep.subr.mxu0 0.0
      %641 = vmatpush1.msra.mxu0 0.0
      %642 = vmatprep.subr.mxu0 0.0
      %643 = vmatpush1.msra.mxu0 0.0
      %644 = vmatprep.subr.mxu0 0.0
      %645 = vmatpush1.msra.mxu0 0.0
      %646 = vmatprep.subr.mxu0 0.0
      %647 = vmatpush1.msra.mxu0 0.0
      %648 = vmatprep.subr.mxu0 0.0
      %649 = vmatpush1.msra.mxu0 0.0
      %650 = vmatprep.subr.mxu0 0.0
      %651 = vmatpush1.msra.mxu0 0.0
      %652 = vmatprep.subr.mxu0 0.0
      %653 = vmatpush1.msra.mxu0 0.0
      %654 = vmatprep.subr.mxu0 0.0
      %655 = vmatpush1.msra.mxu0 0.0
      %656 = vmatprep.subr.mxu0 0.0
      %657 = vmatpush1.msra.mxu0 0.0
      %658 = vmatprep.subr.mxu0 0.0
      %659 = vmatpush1.msra.mxu0 0.0
      %660 = vmatprep.subr.mxu0 0.0
      %661 = vmatpush1.msra.mxu0 0.0
      %662 = vmatprep.subr.mxu0 0.0
      %663 = vmatpush1.msra.mxu0 0.0
      %664 = vmatprep.subr.mxu0 0.0
      %665 = vmatpush1.msra.mxu0 0.0
      %666 = vmatprep.subr.mxu0 0.0
      %667 = vmatpush1.msra.mxu0 0.0
      %668 = vmatprep.subr.mxu0 0.0
      %669 = vmatpush1.msra.mxu0 0.0
      %670 = vmatprep.subr.mxu0 0.0
      %671 = vmatpush1.msra.mxu0 0.0
      %672 = vmatprep.subr.mxu0 0.0
      %673 = vmatpush1.msra.mxu0 0.0
      %674 = vmatprep.subr.mxu0 0.0
      %675 = vmatpush1.msra.mxu0 0.0
      %676 = vmatprep.mubr.f32.mxu0 0.0
      %677 = vmatmul.mubr.f32.gmra.mrb[0].mxu0 %v610
      %v678 = vpop.f32.mrb[0].mxu0
      %v679 = vadd.f32 %v606, %v678
      %v680 = vpop.f32.mrb[0].mxu0
      %681 = vdwg.mxu0
      %v682 = vld [vmem:[%s7] sm:$0x1]
      %v684 = vlaneseq
      %v685 = vshrl.u32 %v684, 7
      %v686 = vsub.s32 0, %v685
      %v687 = vrot.slane %v682, %v686
      %v689 = vadd.f32 %v679, %v687
      %v690 = vld [vmem:[%s512] sm:$0xff]
      %v691 = vld [vmem:[%s3] sm:$0xff]
      %v692 = vld [vmem:[%s3 + $0x8] sm:$0xff]
      %v693 = vld [vmem:[%s3 + $0x10] sm:$0xff]
      %v694 = vld [vmem:[%s3 + $0x18] sm:$0xff]
      %v695 = vld [vmem:[%s4] sm:$0x1]
      %v696 = vld [vmem:[%s8] sm:$0xff]
      %v697 = vld [vmem:[%s8 + $0x8] sm:$0xff]
      %v698 = vld [vmem:[%s8 + $0x10] sm:$0xff]
      %v699 = vld [vmem:[%s8 + $0x18] sm:$0xff]
      %v700 = vld [vmem:[%s9] sm:$0x1]
      %v701 = vld [vmem:[%s10] sm:$0xff]
      %v702 = vld [vmem:[%s10 + $0x8] sm:$0xff]
      %v703 = vld [vmem:[%s10 + $0x10] sm:$0xff]
      %v704 = vld [vmem:[%s10 + $0x18] sm:$0xff]
      %v705 = vld [vmem:[%s11] sm:$0x1]
      %v706 = vld [vmem:[%s12] sm:$0xff]
      %v707 = vld [vmem:[%s12 + $0x8] sm:$0xff]
      %v708 = vld [vmem:[%s12 + $0x10] sm:$0xff]
      %v709 = vld [vmem:[%s12 + $0x18] sm:$0xff]
      %v710 = vld [vmem:[%s12 + $0x20] sm:$0xff]
      %v711 = vld [vmem:[%s12 + $0x28] sm:$0xff]
      %v712 = vld [vmem:[%s12 + $0x30] sm:$0xff]
      %v713 = vld [vmem:[%s12 + $0x38] sm:$0xff]
      %v714 = vld [vmem:[%s13] sm:$0x1]
      %s715 = sld [smem:[#allocation2]]
      %v717 = vlaneseq
      %v718 = vshrl.u32 %v717, 7
      %v719 = vsub.s32 0, %v718
      %v720 = vrot.slane %v695, %v719
      %v723 = vsel %vm535, %v690, 0
      %725 = vmatprep.subr.mxu0 0.0
      %726 = vmatpush1.msra.mxu0 %v691
      %727 = vmatprep.subr.mxu0 0.0
      %728 = vmatpush1.msra.mxu0 %v692
      %729 = vmatprep.subr.mxu0 0.0
      %730 = vmatpush1.msra.mxu0 %v693
      %731 = vmatprep.subr.mxu0 0.0
      %732 = vmatpush1.msra.mxu0 %v694
      %733 = vmatprep.subr.mxu0 0.0
      %734 = vmatpush1.msra.mxu0 0.0
      %735 = vmatprep.subr.mxu0 0.0
      %736 = vmatpush1.msra.mxu0 0.0
      %737 = vmatprep.subr.mxu0 0.0
      %738 = vmatpush1.msra.mxu0 0.0
      %739 = vmatprep.subr.mxu0 0.0
      %740 = vmatpush1.msra.mxu0 0.0
      %741 = vmatprep.subr.mxu0 0.0
      %742 = vmatpush1.msra.mxu0 0.0
      %743 = vmatprep.subr.mxu0 0.0
      %744 = vmatpush1.msra.mxu0 0.0
      %745 = vmatprep.subr.mxu0 0.0
      %746 = vmatpush1.msra.mxu0 0.0
      %747 = vmatprep.subr.mxu0 0.0
      %748 = vmatpush1.msra.mxu0 0.0
      %749 = vmatprep.subr.mxu0 0.0
      %750 = vmatpush1.msra.mxu0 0.0
      %751 = vmatprep.subr.mxu0 0.0
      %752 = vmatpush1.msra.mxu0 0.0
      %753 = vmatprep.subr.mxu0 0.0
      %754 = vmatpush1.msra.mxu0 0.0
      %755 = vmatprep.subr.mxu0 0.0
      %756 = vmatpush1.msra.mxu0 0.0
      %757 = vmatprep.subr.mxu0 0.0
      %758 = vmatpush1.msra.mxu0 0.0
      %759 = vmatprep.subr.mxu0 0.0
      %760 = vmatpush1.msra.mxu0 0.0
      %761 = vmatprep.subr.mxu0 0.0
      %762 = vmatpush1.msra.mxu0 0.0
      %763 = vmatprep.subr.mxu0 0.0
      %764 = vmatpush1.msra.mxu0 0.0
      %765 = vmatprep.subr.mxu0 0.0
      %766 = vmatpush1.msra.mxu0 0.0
      %767 = vmatprep.subr.mxu0 0.0
      %768 = vmatpush1.msra.mxu0 0.0
      %769 = vmatprep.subr.mxu0 0.0
      %770 = vmatpush1.msra.mxu0 0.0
      %771 = vmatprep.subr.mxu0 0.0
      %772 = vmatpush1.msra.mxu0 0.0
      %773 = vmatprep.subr.mxu0 0.0
      %774 = vmatpush1.msra.mxu0 0.0
      %775 = vmatprep.subr.mxu0 0.0
      %776 = vmatpush1.msra.mxu0 0.0
      %777 = vmatprep.subr.mxu0 0.0
      %778 = vmatpush1.msra.mxu0 0.0
      %779 = vmatprep.subr.mxu0 0.0
      %780 = vmatpush1.msra.mxu0 0.0
      %781 = vmatprep.subr.mxu0 0.0
      %782 = vmatpush1.msra.mxu0 0.0
      %783 = vmatprep.subr.mxu0 0.0
      %784 = vmatpush1.msra.mxu0 0.0
      %785 = vmatprep.subr.mxu0 0.0
      %786 = vmatpush1.msra.mxu0 0.0
      %787 = vmatprep.subr.mxu0 0.0
      %788 = vmatpush1.msra.mxu0 0.0
      %789 = vmatprep.mubr.f32.mxu0 0.0
      %790 = vmatmul.mubr.f32.gmra.mrb[0].mxu0 %v723
      %v791 = vpop.f32.mrb[0].mxu0
      %v792 = vadd.f32 %v720, %v791
      %v793 = vpop.f32.mrb[0].mxu0
      %794 = vdwg.mxu0
      %vm795 = vcmask 64512
      %v797 = vsel %vm795, %v792, 0
      %v800 = vsel %vm795, %v689, 0
      %802 = vmatprep.subr.mxu0 0.0
      %803 = vmatpush1.xpose.msra.mxu0 %v800
      %804 = vmatprep.subr.mxu0 0.0
      %805 = vmatpush1.xpose.msra.mxu0 0.0
      %806 = vmatprep.subr.mxu0 0.0
      %807 = vmatpush1.xpose.msra.mxu0 0.0
      %808 = vmatprep.subr.mxu0 0.0
      %809 = vmatpush1.xpose.msra.mxu0 0.0
      %810 = vmatprep.subr.mxu0 0.0
      %811 = vmatpush1.xpose.msra.mxu0 0.0
      %812 = vmatprep.subr.mxu0 0.0
      %813 = vmatpush1.xpose.msra.mxu0 0.0
      %814 = vmatprep.subr.mxu0 0.0
      %815 = vmatpush1.xpose.msra.mxu0 0.0
      %816 = vmatprep.subr.mxu0 0.0
      %817 = vmatpush1.xpose.msra.mxu0 0.0
      %818 = vmatprep.subr.mxu0 0.0
      %819 = vmatpush1.xpose.msra.mxu0 0.0
      %820 = vmatprep.subr.mxu0 0.0
      %821 = vmatpush1.xpose.msra.mxu0 0.0
      %822 = vmatprep.subr.mxu0 0.0
      %823 = vmatpush1.xpose.msra.mxu0 0.0
      %824 = vmatprep.subr.mxu0 0.0
      %825 = vmatpush1.xpose.msra.mxu0 0.0
      %826 = vmatprep.subr.mxu0 0.0
      %827 = vmatpush1.xpose.msra.mxu0 0.0
      %828 = vmatprep.subr.mxu0 0.0
      %829 = vmatpush1.xpose.msra.mxu0 0.0
      %830 = vmatprep.subr.mxu0 0.0
      %831 = vmatpush1.xpose.msra.mxu0 0.0
      %832 = vmatprep.subr.mxu0 0.0
      %833 = vmatpush1.xpose.msra.mxu0 0.0
      %834 = vmatprep.subr.mxu0 0.0
      %835 = vmatpush1.xpose.msra.mxu0 0.0
      %836 = vmatprep.subr.mxu0 0.0
      %837 = vmatpush1.xpose.msra.mxu0 0.0
      %838 = vmatprep.subr.mxu0 0.0
      %839 = vmatpush1.xpose.msra.mxu0 0.0
      %840 = vmatprep.subr.mxu0 0.0
      %841 = vmatpush1.xpose.msra.mxu0 0.0
      %842 = vmatprep.subr.mxu0 0.0
      %843 = vmatpush1.xpose.msra.mxu0 0.0
      %844 = vmatprep.subr.mxu0 0.0
      %845 = vmatpush1.xpose.msra.mxu0 0.0
      %846 = vmatprep.subr.mxu0 0.0
      %847 = vmatpush1.xpose.msra.mxu0 0.0
      %848 = vmatprep.subr.mxu0 0.0
      %849 = vmatpush1.xpose.msra.mxu0 0.0
      %850 = vmatprep.subr.mxu0 0.0
      %851 = vmatpush1.xpose.msra.mxu0 0.0
      %852 = vmatprep.subr.mxu0 0.0
      %853 = vmatpush1.xpose.msra.mxu0 0.0
      %854 = vmatprep.subr.mxu0 0.0
      %855 = vmatpush1.xpose.msra.mxu0 0.0
      %856 = vmatprep.subr.mxu0 0.0
      %857 = vmatpush1.xpose.msra.mxu0 0.0
      %858 = vmatprep.subr.mxu0 0.0
      %859 = vmatpush1.xpose.msra.mxu0 0.0
      %860 = vmatprep.subr.mxu0 0.0
      %861 = vmatpush1.xpose.msra.mxu0 0.0
      %862 = vmatprep.subr.mxu0 0.0
      %863 = vmatpush1.xpose.msra.mxu0 0.0
      %864 = vmatprep.subr.mxu0 0.0
      %865 = vmatpush1.xpose.msra.mxu0 0.0
      %866 = vmatprep.mubr.f32.mxu0 0.0
      %867 = vmatmul.mubr.f32.gmra.mrb[0].mxu0 %v797
      %v868 = vpop.f32.mrb[0].mxu0
      %v869 = vadd.f32 0.0, %v868
      %v870 = vpop.f32.mrb[0].mxu0
      %871 = vdwg.mxu0
      %v872 = vmul.f32 %v869, 0.35355338
      %v873 = vsel %vm795, %v872, -inf
      %874 = vmax.xlane.f32.xlu0 %v873
      %v875 = vpop.xlane.xlu0 %874
      %v876 = vsub.f32 %v872, %v875
      %v877 = vmul.f32 %v876, 1.442695
      %v878 = vpow.pop %v877
      %v879 = vsel %vm795, %v878, 0.0
      %880 = vadd.xlane.f32.xlu0 %v879
      %v881 = vpop.xlane.xlu0 %880
      %v882 = vrcp.pop %v881
      %v883 = vmul.f32 %v878, %v882
      %884 = vrot.lane.b32.xlu0 %v689, 96
      %v885 = vpop.permute.xlu0 %884
      %v888 = vsel %vm795, %v883, 0
      %890 = vmatprep.subr.mxu0 0.0
      %891 = vmatpush1.msra.mxu0 %v885
      %892 = vmatprep.subr.mxu0 0.0
      %893 = vmatpush1.msra.mxu0 0.0
      %894 = vmatprep.subr.mxu0 0.0
      %895 = vmatpush1.msra.mxu0 0.0
      %896 = vmatprep.subr.mxu0 0.0
      %897 = vmatpush1.msra.mxu0 0.0
      %898 = vmatprep.subr.mxu0 0.0
      %899 = vmatpush1.msra.mxu0 0.0
      %900 = vmatprep.subr.mxu0 0.0
      %901 = vmatpush1.msra.mxu0 0.0
      %902 = vmatprep.subr.mxu0 0.0
      %903 = vmatpush1.msra.mxu0 0.0
      %904 = vmatprep.subr.mxu0 0.0
      %905 = vmatpush1.msra.mxu0 0.0
      %906 = vmatprep.subr.mxu0 0.0
      %907 = vmatpush1.msra.mxu0 0.0
      %908 = vmatprep.subr.mxu0 0.0
      %909 = vmatpush1.msra.mxu0 0.0
      %910 = vmatprep.subr.mxu0 0.0
      %911 = vmatpush1.msra.mxu0 0.0
      %912 = vmatprep.subr.mxu0 0.0
      %913 = vmatpush1.msra.mxu0 0.0
      %914 = vmatprep.subr.mxu0 0.0
      %915 = vmatpush1.msra.mxu0 0.0
      %916 = vmatprep.subr.mxu0 0.0
      %917 = vmatpush1.msra.mxu0 0.0
      %918 = vmatprep.subr.mxu0 0.0
      %919 = vmatpush1.msra.mxu0 0.0
      %920 = vmatprep.subr.mxu0 0.0
      %921 = vmatpush1.msra.mxu0 0.0
      %922 = vmatprep.subr.mxu0 0.0
      %923 = vmatpush1.msra.mxu0 0.0
      %924 = vmatprep.subr.mxu0 0.0
      %925 = vmatpush1.msra.mxu0 0.0
      %926 = vmatprep.subr.mxu0 0.0
      %927 = vmatpush1.msra.mxu0 0.0
      %928 = vmatprep.subr.mxu0 0.0
      %929 = vmatpush1.msra.mxu0 0.0
      %930 = vmatprep.subr.mxu0 0.0
      %931 = vmatpush1.msra.mxu0 0.0
      %932 = vmatprep.subr.mxu0 0.0
      %933 = vmatpush1.msra.mxu0 0.0
      %934 = vmatprep.subr.mxu0 0.0
      %935 = vmatpush1.msra.mxu0 0.0
      %936 = vmatprep.subr.mxu0 0.0
      %937 = vmatpush1.msra.mxu0 0.0
      %938 = vmatprep.subr.mxu0 0.0
      %939 = vmatpush1.msra.mxu0 0.0
      %940 = vmatprep.subr.mxu0 0.0
      %941 = vmatpush1.msra.mxu0 0.0
      %942 = vmatprep.subr.mxu0 0.0
      %943 = vmatpush1.msra.mxu0 0.0
      %944 = vmatprep.subr.mxu0 0.0
      %945 = vmatpush1.msra.mxu0 0.0
      %946 = vmatprep.subr.mxu0 0.0
      %947 = vmatpush1.msra.mxu0 0.0
      %948 = vmatprep.subr.mxu0 0.0
      %949 = vmatpush1.msra.mxu0 0.0
      %950 = vmatprep.subr.mxu0 0.0
      %951 = vmatpush1.msra.mxu0 0.0
      %952 = vmatprep.subr.mxu0 0.0
      %953 = vmatpush1.msra.mxu0 0.0
      %954 = vmatprep.mubr.f32.mxu0 0.0
      %955 = vmatmul.mubr.f32.gmra.mrb[0].mxu0 %v888
      %v956 = vpop.f32.mrb[0].mxu0
      %v957 = vadd.f32 0.0, %v956
      %v958 = vpop.f32.mrb[0].mxu0
      %959 = vdwg.mxu0
      %960 = vrot.lane.b32.xlu0 %v792, 120
      %v961 = vpop.permute.xlu0 %960
      %962 = vrot.lane.b32.xlu0 %v689, 120
      %v963 = vpop.permute.xlu0 %962
      %v964 = vsel %vm795, %v961, 0
      %v966 = vsel %vm795, %v963, 0
      %968 = vmatprep.subr.mxu0 0.0
      %969 = vmatpush1.xpose.msra.mxu0 %v966
      %970 = vmatprep.subr.mxu0 0.0
      %971 = vmatpush1.xpose.msra.mxu0 0.0
      %972 = vmatprep.subr.mxu0 0.0
      %973 = vmatpush1.xpose.msra.mxu0 0.0
      %974 = vmatprep.subr.mxu0 0.0
      %975 = vmatpush1.xpose.msra.mxu0 0.0
      %976 = vmatprep.subr.mxu0 0.0
      %977 = vmatpush1.xpose.msra.mxu0 0.0
      %978 = vmatprep.subr.mxu0 0.0
      %979 = vmatpush1.xpose.msra.mxu0 0.0
      %980 = vmatprep.subr.mxu0 0.0
      %981 = vmatpush1.xpose.msra.mxu0 0.0
      %982 = vmatprep.subr.mxu0 0.0
      %983 = vmatpush1.xpose.msra.mxu0 0.0
      %984 = vmatprep.subr.mxu0 0.0
      %985 = vmatpush1.xpose.msra.mxu0 0.0
      %986 = vmatprep.subr.mxu0 0.0
      %987 = vmatpush1.xpose.msra.mxu0 0.0
      %988 = vmatprep.subr.mxu0 0.0
      %989 = vmatpush1.xpose.msra.mxu0 0.0
      %990 = vmatprep.subr.mxu0 0.0
      %991 = vmatpush1.xpose.msra.mxu0 0.0
      %992 = vmatprep.subr.mxu0 0.0
      %993 = vmatpush1.xpose.msra.mxu0 0.0
      %994 = vmatprep.subr.mxu0 0.0
      %995 = vmatpush1.xpose.msra.mxu0 0.0
      %996 = vmatprep.subr.mxu0 0.0
      %997 = vmatpush1.xpose.msra.mxu0 0.0
      %998 = vmatprep.subr.mxu0 0.0
      %999 = vmatpush1.xpose.msra.mxu0 0.0
      %1000 = vmatprep.subr.mxu0 0.0
      %1001 = vmatpush1.xpose.msra.mxu0 0.0
      %1002 = vmatprep.subr.mxu0 0.0
      %1003 = vmatpush1.xpose.msra.mxu0 0.0
      %1004 = vmatprep.subr.mxu0 0.0
      %1005 = vmatpush1.xpose.msra.mxu0 0.0
      %1006 = vmatprep.subr.mxu0 0.0
      %1007 = vmatpush1.xpose.msra.mxu0 0.0
      %1008 = vmatprep.subr.mxu0 0.0
      %1009 = vmatpush1.xpose.msra.mxu0 0.0
      %1010 = vmatprep.subr.mxu0 0.0
      %1011 = vmatpush1.xpose.msra.mxu0 0.0
      %1012 = vmatprep.subr.mxu0 0.0
      %1013 = vmatpush1.xpose.msra.mxu0 0.0
      %1014 = vmatprep.subr.mxu0 0.0
      %1015 = vmatpush1.xpose.msra.mxu0 0.0
      %1016 = vmatprep.subr.mxu0 0.0
      %1017 = vmatpush1.xpose.msra.mxu0 0.0
      %1018 = vmatprep.subr.mxu0 0.0
      %1019 = vmatpush1.xpose.msra.mxu0 0.0
      %1020 = vmatprep.subr.mxu0 0.0
      %1021 = vmatpush1.xpose.msra.mxu0 0.0
      %1022 = vmatprep.subr.mxu0 0.0
      %1023 = vmatpush1.xpose.msra.mxu0 0.0
      %1024 = vmatprep.subr.mxu0 0.0
      %1025 = vmatpush1.xpose.msra.mxu0 0.0
      %1026 = vmatprep.subr.mxu0 0.0
      %1027 = vmatpush1.xpose.msra.mxu0 0.0
      %1028 = vmatprep.subr.mxu0 0.0
      %1029 = vmatpush1.xpose.msra.mxu0 0.0
      %1030 = vmatprep.subr.mxu0 0.0
      %1031 = vmatpush1.xpose.msra.mxu0 0.0
      %1032 = vmatprep.mubr.f32.mxu0 0.0
      %1033 = vmatmul.mubr.f32.gmra.mrb[0].mxu0 %v964
      %v1034 = vpop.f32.mrb[0].mxu0
      %v1035 = vadd.f32 0.0, %v1034
      %v1036 = vpop.f32.mrb[0].mxu0
      %1037 = vdwg.mxu0
      %v1038 = vmul.f32 %v1035, 0.35355338
      %v1039 = vsel %vm795, %v1038, -inf
      %1040 = vmax.xlane.f32.xlu0 %v1039
      %v1041 = vpop.xlane.xlu0 %1040
      %v1042 = vsub.f32 %v1038, %v1041
      %v1043 = vmul.f32 %v1042, 1.442695
      %v1044 = vpow.pop %v1043
      %v1045 = vsel %vm795, %v1044, 0.0
      %1046 = vadd.xlane.f32.xlu0 %v1045
      %v1047 = vpop.xlane.xlu0 %1046
      %v1048 = vrcp.pop %v1047
      %v1049 = vmul.f32 %v1044, %v1048
      %1050 = vrot.lane.b32.xlu0 %v689, 88
      %v1051 = vpop.permute.xlu0 %1050
      %v1054 = vsel %vm795, %v1049, 0
      %1056 = vmatprep.subr.mxu0 0.0
      %1057 = vmatpush1.msra.mxu0 %v1051
      %1058 = vmatprep.subr.mxu0 0.0
      %1059 = vmatpush1.msra.mxu0 0.0
      %1060 = vmatprep.subr.mxu0 0.0
      %1061 = vmatpush1.msra.mxu0 0.0
      %1062 = vmatprep.subr.mxu0 0.0
      %1063 = vmatpush1.msra.mxu0 0.0
      %1064 = vmatprep.subr.mxu0 0.0
      %1065 = vmatpush1.msra.mxu0 0.0
      %1066 = vmatprep.subr.mxu0 0.0
      %1067 = vmatpush1.msra.mxu0 0.0
      %1068 = vmatprep.subr.mxu0 0.0
      %1069 = vmatpush1.msra.mxu0 0.0
      %1070 = vmatprep.subr.mxu0 0.0
      %1071 = vmatpush1.msra.mxu0 0.0
      %1072 = vmatprep.subr.mxu0 0.0
      %1073 = vmatpush1.msra.mxu0 0.0
      %1074 = vmatprep.subr.mxu0 0.0
      %1075 = vmatpush1.msra.mxu0 0.0
      %1076 = vmatprep.subr.mxu0 0.0
      %1077 = vmatpush1.msra.mxu0 0.0
      %1078 = vmatprep.subr.mxu0 0.0
      %1079 = vmatpush1.msra.mxu0 0.0
      %1080 = vmatprep.subr.mxu0 0.0
      %1081 = vmatpush1.msra.mxu0 0.0
      %1082 = vmatprep.subr.mxu0 0.0
      %1083 = vmatpush1.msra.mxu0 0.0
      %1084 = vmatprep.subr.mxu0 0.0
      %1085 = vmatpush1.msra.mxu0 0.0
      %1086 = vmatprep.subr.mxu0 0.0
      %1087 = vmatpush1.msra.mxu0 0.0
      %1088 = vmatprep.subr.mxu0 0.0
      %1089 = vmatpush1.msra.mxu0 0.0
      %1090 = vmatprep.subr.mxu0 0.0
      %1091 = vmatpush1.msra.mxu0 0.0
      %1092 = vmatprep.subr.mxu0 0.0
      %1093 = vmatpush1.msra.mxu0 0.0
      %1094 = vmatprep.subr.mxu0 0.0
      %1095 = vmatpush1.msra.mxu0 0.0
      %1096 = vmatprep.subr.mxu0 0.0
      %1097 = vmatpush1.msra.mxu0 0.0
      %1098 = vmatprep.subr.mxu0 0.0
      %1099 = vmatpush1.msra.mxu0 0.0
      %1100 = vmatprep.subr.mxu0 0.0
      %1101 = vmatpush1.msra.mxu0 0.0
      %1102 = vmatprep.subr.mxu0 0.0
      %1103 = vmatpush1.msra.mxu0 0.0
      %1104 = vmatprep.subr.mxu0 0.0
      %1105 = vmatpush1.msra.mxu0 0.0
      %1106 = vmatprep.subr.mxu0 0.0
      %1107 = vmatpush1.msra.mxu0 0.0
      %1108 = vmatprep.subr.mxu0 0.0
      %1109 = vmatpush1.msra.mxu0 0.0
      %1110 = vmatprep.subr.mxu0 0.0
      %1111 = vmatpush1.msra.mxu0 0.0
      %1112 = vmatprep.subr.mxu0 0.0
      %1113 = vmatpush1.msra.mxu0 0.0
      %1114 = vmatprep.subr.mxu0 0.0
      %1115 = vmatpush1.msra.mxu0 0.0
      %1116 = vmatprep.subr.mxu0 0.0
      %1117 = vmatpush1.msra.mxu0 0.0
      %1118 = vmatprep.subr.mxu0 0.0
      %1119 = vmatpush1.msra.mxu0 0.0
      %1120 = vmatprep.mubr.f32.mxu0 0.0
      %1121 = vmatmul.mubr.f32.gmra.mrb[0].mxu0 %v1054
      %v1122 = vpop.f32.mrb[0].mxu0
      %v1123 = vadd.f32 0.0, %v1122
      %v1124 = vpop.f32.mrb[0].mxu0
      %1125 = vdwg.mxu0
      %1126 = vrot.lane.b32.xlu0 %v792, 112
      %v1127 = vpop.permute.xlu0 %1126
      %1128 = vrot.lane.b32.xlu0 %v689, 112
      %v1129 = vpop.permute.xlu0 %1128
      %v1130 = vsel %vm795, %v1127, 0
      %v1132 = vsel %vm795, %v1129, 0
      %1134 = vmatprep.subr.mxu0 0.0
      %1135 = vmatpush1.xpose.msra.mxu0 %v1132
      %1136 = vmatprep.subr.mxu0 0.0
      %1137 = vmatpush1.xpose.msra.mxu0 0.0
      %1138 = vmatprep.subr.mxu0 0.0
      %1139 = vmatpush1.xpose.msra.mxu0 0.0
      %1140 = vmatprep.subr.mxu0 0.0
      %1141 = vmatpush1.xpose.msra.mxu0 0.0
      %1142 = vmatprep.subr.mxu0 0.0
      %1143 = vmatpush1.xpose.msra.mxu0 0.0
      %1144 = vmatprep.subr.mxu0 0.0
      %1145 = vmatpush1.xpose.msra.mxu0 0.0
      %1146 = vmatprep.subr.mxu0 0.0
      %1147 = vmatpush1.xpose.msra.mxu0 0.0
      %1148 = vmatprep.subr.mxu0 0.0
      %1149 = vmatpush1.xpose.msra.mxu0 0.0
      %1150 = vmatprep.subr.mxu0 0.0
      %1151 = vmatpush1.xpose.msra.mxu0 0.0
      %1152 = vmatprep.subr.mxu0 0.0
      %1153 = vmatpush1.xpose.msra.mxu0 0.0
      %1154 = vmatprep.subr.mxu0 0.0
      %1155 = vmatpush1.xpose.msra.mxu0 0.0
      %1156 = vmatprep.subr.mxu0 0.0
      %1157 = vmatpush1.xpose.msra.mxu0 0.0
      %1158 = vmatprep.subr.mxu0 0.0
      %1159 = vmatpush1.xpose.msra.mxu0 0.0
      %1160 = vmatprep.subr.mxu0 0.0
      %1161 = vmatpush1.xpose.msra.mxu0 0.0
      %1162 = vmatprep.subr.mxu0 0.0
      %1163 = vmatpush1.xpose.msra.mxu0 0.0
      %1164 = vmatprep.subr.mxu0 0.0
      %1165 = vmatpush1.xpose.msra.mxu0 0.0
      %1166 = vmatprep.subr.mxu0 0.0
      %1167 = vmatpush1.xpose.msra.mxu0 0.0
      %1168 = vmatprep.subr.mxu0 0.0
      %1169 = vmatpush1.xpose.msra.mxu0 0.0
      %1170 = vmatprep.subr.mxu0 0.0
      %1171 = vmatpush1.xpose.msra.mxu0 0.0
      %1172 = vmatprep.subr.mxu0 0.0
      %1173 = vmatpush1.xpose.msra.mxu0 0.0
      %1174 = vmatprep.subr.mxu0 0.0
      %1175 = vmatpush1.xpose.msra.mxu0 0.0
      %1176 = vmatprep.subr.mxu0 0.0
      %1177 = vmatpush1.xpose.msra.mxu0 0.0
      %1178 = vmatprep.subr.mxu0 0.0
      %1179 = vmatpush1.xpose.msra.mxu0 0.0
      %1180 = vmatprep.subr.mxu0 0.0
      %1181 = vmatpush1.xpose.msra.mxu0 0.0
      %1182 = vmatprep.subr.mxu0 0.0
      %1183 = vmatpush1.xpose.msra.mxu0 0.0
      %1184 = vmatprep.subr.mxu0 0.0
      %1185 = vmatpush1.xpose.msra.mxu0 0.0
      %1186 = vmatprep.subr.mxu0 0.0
      %1187 = vmatpush1.xpose.msra.mxu0 0.0
      %1188 = vmatprep.subr.mxu0 0.0
      %1189 = vmatpush1.xpose.msra.mxu0 0.0
      %1190 = vmatprep.subr.mxu0 0.0
      %1191 = vmatpush1.xpose.msra.mxu0 0.0
      %1192 = vmatprep.subr.mxu0 0.0
      %1193 = vmatpush1.xpose.msra.mxu0 0.0
      %1194 = vmatprep.subr.mxu0 0.0
      %1195 = vmatpush1.xpose.msra.mxu0 0.0
      %1196 = vmatprep.subr.mxu0 0.0
      %1197 = vmatpush1.xpose.msra.mxu0 0.0
      %1198 = vmatprep.mubr.f32.mxu0 0.0
      %1199 = vmatmul.mubr.f32.gmra.mrb[0].mxu0 %v1130
      %v1200 = vpop.f32.mrb[0].mxu0
      %v1201 = vadd.f32 0.0, %v1200
      %v1202 = vpop.f32.mrb[0].mxu0
      %1203 = vdwg.mxu0
      %v1204 = vmul.f32 %v1201, 0.35355338
      %v1205 = vsel %vm795, %v1204, -inf
      %1206 = vmax.xlane.f32.xlu0 %v1205
      %v1207 = vpop.xlane.xlu0 %1206
      %v1208 = vsub.f32 %v1204, %v1207
      %v1209 = vmul.f32 %v1208, 1.442695
      %v1210 = vpow.pop %v1209
      %v1211 = vsel %vm795, %v1210, 0.0
      %1212 = vadd.xlane.f32.xlu0 %v1211
      %v1213 = vpop.xlane.xlu0 %1212
      %v1214 = vrcp.pop %v1213
      %v1215 = vmul.f32 %v1210, %v1214
      %1216 = vrot.lane.b32.xlu0 %v689, 80
      %v1217 = vpop.permute.xlu0 %1216
      %v1220 = vsel %vm795, %v1215, 0
      %1222 = vmatprep.subr.mxu0 0.0
      %1223 = vmatpush1.msra.mxu0 %v1217
      %1224 = vmatprep.subr.mxu0 0.0
      %1225 = vmatpush1.msra.mxu0 0.0
      %1226 = vmatprep.subr.mxu0 0.0
      %1227 = vmatpush1.msra.mxu0 0.0
      %1228 = vmatprep.subr.mxu0 0.0
      %1229 = vmatpush1.msra.mxu0 0.0
      %1230 = vmatprep.subr.mxu0 0.0
      %1231 = vmatpush1.msra.mxu0 0.0
      %1232 = vmatprep.subr.mxu0 0.0
      %1233 = vmatpush1.msra.mxu0 0.0
      %1234 = vmatprep.subr.mxu0 0.0
      %1235 = vmatpush1.msra.mxu0 0.0
      %1236 = vmatprep.subr.mxu0 0.0
      %1237 = vmatpush1.msra.mxu0 0.0
      %1238 = vmatprep.subr.mxu0 0.0
      %1239 = vmatpush1.msra.mxu0 0.0
      %1240 = vmatprep.subr.mxu0 0.0
      %1241 = vmatpush1.msra.mxu0 0.0
      %1242 = vmatprep.subr.mxu0 0.0
      %1243 = vmatpush1.msra.mxu0 0.0
      %1244 = vmatprep.subr.mxu0 0.0
      %1245 = vmatpush1.msra.mxu0 0.0
      %1246 = vmatprep.subr.mxu0 0.0
      %1247 = vmatpush1.msra.mxu0 0.0
      %1248 = vmatprep.subr.mxu0 0.0
      %1249 = vmatpush1.msra.mxu0 0.0
      %1250 = vmatprep.subr.mxu0 0.0
      %1251 = vmatpush1.msra.mxu0 0.0
      %1252 = vmatprep.subr.mxu0 0.0
      %1253 = vmatpush1.msra.mxu0 0.0
      %1254 = vmatprep.subr.mxu0 0.0
      %1255 = vmatpush1.msra.mxu0 0.0
      %1256 = vmatprep.subr.mxu0 0.0
      %1257 = vmatpush1.msra.mxu0 0.0
      %1258 = vmatprep.subr.mxu0 0.0
      %1259 = vmatpush1.msra.mxu0 0.0
      %1260 = vmatprep.subr.mxu0 0.0
      %1261 = vmatpush1.msra.mxu0 0.0
      %1262 = vmatprep.subr.mxu0 0.0
      %1263 = vmatpush1.msra.mxu0 0.0
      %1264 = vmatprep.subr.mxu0 0.0
      %1265 = vmatpush1.msra.mxu0 0.0
      %1266 = vmatprep.subr.mxu0 0.0
      %1267 = vmatpush1.msra.mxu0 0.0
      %1268 = vmatprep.subr.mxu0 0.0
      %1269 = vmatpush1.msra.mxu0 0.0
      %1270 = vmatprep.subr.mxu0 0.0
      %1271 = vmatpush1.msra.mxu0 0.0
      %1272 = vmatprep.subr.mxu0 0.0
      %1273 = vmatpush1.msra.mxu0 0.0
      %1274 = vmatprep.subr.mxu0 0.0
      %1275 = vmatpush1.msra.mxu0 0.0
      %1276 = vmatprep.subr.mxu0 0.0
      %1277 = vmatpush1.msra.mxu0 0.0
      %1278 = vmatprep.subr.mxu0 0.0
      %1279 = vmatpush1.msra.mxu0 0.0
      %1280 = vmatprep.subr.mxu0 0.0
      %1281 = vmatpush1.msra.mxu0 0.0
      %1282 = vmatprep.subr.mxu0 0.0
      %1283 = vmatpush1.msra.mxu0 0.0
      %1284 = vmatprep.subr.mxu0 0.0
      %1285 = vmatpush1.msra.mxu0 0.0
      %1286 = vmatprep.mubr.f32.mxu0 0.0
      %1287 = vmatmul.mubr.f32.gmra.mrb[0].mxu0 %v1220
      %v1288 = vpop.f32.mrb[0].mxu0
      %v1289 = vadd.f32 0.0, %v1288
      %v1290 = vpop.f32.mrb[0].mxu0
      %1291 = vdwg.mxu0
      %1292 = vrot.lane.b32.xlu0 %v792, 104
      %v1293 = vpop.permute.xlu0 %1292
      %1294 = vrot.lane.b32.xlu0 %v689, 104
      %v1295 = vpop.permute.xlu0 %1294
      %v1296 = vsel %vm795, %v1293, 0
      %v1298 = vsel %vm795, %v1295, 0
      %1300 = vmatprep.subr.mxu0 0.0
      %1301 = vmatpush1.xpose.msra.mxu0 %v1298
      %1302 = vmatprep.subr.mxu0 0.0
      %1303 = vmatpush1.xpose.msra.mxu0 0.0
      %1304 = vmatprep.subr.mxu0 0.0
      %1305 = vmatpush1.xpose.msra.mxu0 0.0
      %1306 = vmatprep.subr.mxu0 0.0
      %1307 = vmatpush1.xpose.msra.mxu0 0.0
      %1308 = vmatprep.subr.mxu0 0.0
      %1309 = vmatpush1.xpose.msra.mxu0 0.0
      %1310 = vmatprep.subr.mxu0 0.0
      %1311 = vmatpush1.xpose.msra.mxu0 0.0
      %1312 = vmatprep.subr.mxu0 0.0
      %1313 = vmatpush1.xpose.msra.mxu0 0.0
      %1314 = vmatprep.subr.mxu0 0.0
      %1315 = vmatpush1.xpose.msra.mxu0 0.0
      %1316 = vmatprep.subr.mxu0 0.0
      %1317 = vmatpush1.xpose.msra.mxu0 0.0
      %1318 = vmatprep.subr.mxu0 0.0
      %1319 = vmatpush1.xpose.msra.mxu0 0.0
      %1320 = vmatprep.subr.mxu0 0.0
      %1321 = vmatpush1.xpose.msra.mxu0 0.0
      %1322 = vmatprep.subr.mxu0 0.0
      %1323 = vmatpush1.xpose.msra.mxu0 0.0
      %1324 = vmatprep.subr.mxu0 0.0
      %1325 = vmatpush1.xpose.msra.mxu0 0.0
      %1326 = vmatprep.subr.mxu0 0.0
      %1327 = vmatpush1.xpose.msra.mxu0 0.0
      %1328 = vmatprep.subr.mxu0 0.0
      %1329 = vmatpush1.xpose.msra.mxu0 0.0
      %1330 = vmatprep.subr.mxu0 0.0
      %1331 = vmatpush1.xpose.msra.mxu0 0.0
      %1332 = vmatprep.subr.mxu0 0.0
      %1333 = vmatpush1.xpose.msra.mxu0 0.0
      %1334 = vmatprep.subr.mxu0 0.0
      %1335 = vmatpush1.xpose.msra.mxu0 0.0
      %1336 = vmatprep.subr.mxu0 0.0
      %1337 = vmatpush1.xpose.msra.mxu0 0.0
      %1338 = vmatprep.subr.mxu0 0.0
      %1339 = vmatpush1.xpose.msra.mxu0 0.0
      %1340 = vmatprep.subr.mxu0 0.0
      %1341 = vmatpush1.xpose.msra.mxu0 0.0
      %1342 = vmatprep.subr.mxu0 0.0
      %1343 = vmatpush1.xpose.msra.mxu0 0.0
      %1344 = vmatprep.subr.mxu0 0.0
      %1345 = vmatpush1.xpose.msra.mxu0 0.0
      %1346 = vmatprep.subr.mxu0 0.0
      %1347 = vmatpush1.xpose.msra.mxu0 0.0
      %1348 = vmatprep.subr.mxu0 0.0
      %1349 = vmatpush1.xpose.msra.mxu0 0.0
      %1350 = vmatprep.subr.mxu0 0.0
      %1351 = vmatpush1.xpose.msra.mxu0 0.0
      %1352 = vmatprep.subr.mxu0 0.0
      %1353 = vmatpush1.xpose.msra.mxu0 0.0
      %1354 = vmatprep.subr.mxu0 0.0
      %1355 = vmatpush1.xpose.msra.mxu0 0.0
      %1356 = vmatprep.subr.mxu0 0.0
      %1357 = vmatpush1.xpose.msra.mxu0 0.0
      %1358 = vmatprep.subr.mxu0 0.0
      %1359 = vmatpush1.xpose.msra.mxu0 0.0
      %1360 = vmatprep.subr.mxu0 0.0
      %1361 = vmatpush1.xpose.msra.mxu0 0.0
      %1362 = vmatprep.subr.mxu0 0.0
      %1363 = vmatpush1.xpose.msra.mxu0 0.0
      %1364 = vmatprep.mubr.f32.mxu0 0.0
      %1365 = vmatmul.mubr.f32.gmra.mrb[0].mxu0 %v1296
      %v1366 = vpop.f32.mrb[0].mxu0
      %v1367 = vadd.f32 0.0, %v1366
      %v1368 = vpop.f32.mrb[0].mxu0
      %1369 = vdwg.mxu0
      %v1370 = vmul.f32 %v1367, 0.35355338
      %v1371 = vsel %vm795, %v1370, -inf
      %1372 = vmax.xlane.f32.xlu0 %v1371
      %v1373 = vpop.xlane.xlu0 %1372
      %v1374 = vsub.f32 %v1370, %v1373
      %v1375 = vmul.f32 %v1374, 1.442695
      %v1376 = vpow.pop %v1375
      %v1377 = vsel %vm795, %v1376, 0.0
      %1378 = vadd.xlane.f32.xlu0 %v1377
      %v1379 = vpop.xlane.xlu0 %1378
      %v1380 = vrcp.pop %v1379
      %v1381 = vmul.f32 %v1376, %v1380
      %1382 = vrot.lane.b32.xlu0 %v689, 72
      %v1383 = vpop.permute.xlu0 %1382
      %v1386 = vsel %vm795, %v1381, 0
      %1388 = vmatprep.subr.mxu0 0.0
      %1389 = vmatpush1.msra.mxu0 %v1383
      %1390 = vmatprep.subr.mxu0 0.0
      %1391 = vmatpush1.msra.mxu0 0.0
      %1392 = vmatprep.subr.mxu0 0.0
      %1393 = vmatpush1.msra.mxu0 0.0
      %1394 = vmatprep.subr.mxu0 0.0
      %1395 = vmatpush1.msra.mxu0 0.0
      %1396 = vmatprep.subr.mxu0 0.0
      %1397 = vmatpush1.msra.mxu0 0.0
      %1398 = vmatprep.subr.mxu0 0.0
      %1399 = vmatpush1.msra.mxu0 0.0
      %1400 = vmatprep.subr.mxu0 0.0
      %1401 = vmatpush1.msra.mxu0 0.0
      %1402 = vmatprep.subr.mxu0 0.0
      %1403 = vmatpush1.msra.mxu0 0.0
      %1404 = vmatprep.subr.mxu0 0.0
      %1405 = vmatpush1.msra.mxu0 0.0
      %1406 = vmatprep.subr.mxu0 0.0
      %1407 = vmatpush1.msra.mxu0 0.0
      %1408 = vmatprep.subr.mxu0 0.0
      %1409 = vmatpush1.msra.mxu0 0.0
      %1410 = vmatprep.subr.mxu0 0.0
      %1411 = vmatpush1.msra.mxu0 0.0
      %1412 = vmatprep.subr.mxu0 0.0
      %1413 = vmatpush1.msra.mxu0 0.0
      %1414 = vmatprep.subr.mxu0 0.0
      %1415 = vmatpush1.msra.mxu0 0.0
      %1416 = vmatprep.subr.mxu0 0.0
      %1417 = vmatpush1.msra.mxu0 0.0
      %1418 = vmatprep.subr.mxu0 0.0
      %1419 = vmatpush1.msra.mxu0 0.0
      %1420 = vmatprep.subr.mxu0 0.0
      %1421 = vmatpush1.msra.mxu0 0.0
      %1422 = vmatprep.subr.mxu0 0.0
      %1423 = vmatpush1.msra.mxu0 0.0
      %1424 = vmatprep.subr.mxu0 0.0
      %1425 = vmatpush1.msra.mxu0 0.0
      %1426 = vmatprep.subr.mxu0 0.0
      %1427 = vmatpush1.msra.mxu0 0.0
      %1428 = vmatprep.subr.mxu0 0.0
      %1429 = vmatpush1.msra.mxu0 0.0
      %1430 = vmatprep.subr.mxu0 0.0
      %1431 = vmatpush1.msra.mxu0 0.0
      %1432 = vmatprep.subr.mxu0 0.0
      %1433 = vmatpush1.msra.mxu0 0.0
      %1434 = vmatprep.subr.mxu0 0.0
      %1435 = vmatpush1.msra.mxu0 0.0
      %1436 = vmatprep.subr.mxu0 0.0
      %1437 = vmatpush1.msra.mxu0 0.0
      %1438 = vmatprep.subr.mxu0 0.0
      %1439 = vmatpush1.msra.mxu0 0.0
      %1440 = vmatprep.subr.mxu0 0.0
      %1441 = vmatpush1.msra.mxu0 0.0
      %1442 = vmatprep.subr.mxu0 0.0
      %1443 = vmatpush1.msra.mxu0 0.0
      %1444 = vmatprep.subr.mxu0 0.0
      %1445 = vmatpush1.msra.mxu0 0.0
      %1446 = vmatprep.subr.mxu0 0.0
      %1447 = vmatpush1.msra.mxu0 0.0
      %1448 = vmatprep.subr.mxu0 0.0
      %1449 = vmatpush1.msra.mxu0 0.0
      %1450 = vmatprep.subr.mxu0 0.0
      %1451 = vmatpush1.msra.mxu0 0.0
      %1452 = vmatprep.mubr.f32.mxu0 0.0
      %1453 = vmatmul.mubr.f32.gmra.mrb[0].mxu0 %v1386
      %v1454 = vpop.f32.mrb[0].mxu0
      %v1455 = vadd.f32 0.0, %v1454
      %v1456 = vpop.f32.mrb[0].mxu0
      %1457 = vdwg.mxu0
      %1459 = vrot.lane.b32.xlu0 %v1123, 8
      %v1460 = vpop.permute.xlu0 %1459
      %1463 = vrot.lane.b32.xlu0 %v1289, 16
      %v1464 = vpop.permute.xlu0 %1463
      %1467 = vrot.lane.b32.xlu0 %v1455, 24
      %v1468 = vpop.permute.xlu0 %1467
      %v1470 = vsel %vm795, %v957, %v1460
      %vm1471 = vcmask 130048
      %v1472 = vsel %vm1471, %v1470, %v1464
      %vm1473 = vcmask 195584
      %v1474 = vsel %vm1473, %v1472, %v1468
      %v1476 = vlaneseq
      %v1477 = vshrl.u32 %v1476, 7
      %v1478 = vsub.s32 0, %v1477
      %v1479 = vrot.slane %v700, %v1478
      %v1482 = vsel %vm535, %v1474, 0
      %1484 = vmatprep.subr.mxu0 0.0
      %1485 = vmatpush1.msra.mxu0 %v696
      %1486 = vmatprep.subr.mxu0 0.0
      %1487 = vmatpush1.msra.mxu0 %v697
      %1488 = vmatprep.subr.mxu0 0.0
      %1489 = vmatpush1.msra.mxu0 %v698
      %1490 = vmatprep.subr.mxu0 0.0
      %1491 = vmatpush1.msra.mxu0 %v699
      %1492 = vmatprep.subr.mxu0 0.0
      %1493 = vmatpush1.msra.mxu0 0.0
      %1494 = vmatprep.subr.mxu0 0.0
      %1495 = vmatpush1.msra.mxu0 0.0
      %1496 = vmatprep.subr.mxu0 0.0
      %1497 = vmatpush1.msra.mxu0 0.0
      %1498 = vmatprep.subr.mxu0 0.0
      %1499 = vmatpush1.msra.mxu0 0.0
      %1500 = vmatprep.subr.mxu0 0.0
      %1501 = vmatpush1.msra.mxu0 0.0
      %1502 = vmatprep.subr.mxu0 0.0
      %1503 = vmatpush1.msra.mxu0 0.0
      %1504 = vmatprep.subr.mxu0 0.0
      %1505 = vmatpush1.msra.mxu0 0.0
      %1506 = vmatprep.subr.mxu0 0.0
      %1507 = vmatpush1.msra.mxu0 0.0
      %1508 = vmatprep.subr.mxu0 0.0
      %1509 = vmatpush1.msra.mxu0 0.0
      %1510 = vmatprep.subr.mxu0 0.0
      %1511 = vmatpush1.msra.mxu0 0.0
      %1512 = vmatprep.subr.mxu0 0.0
      %1513 = vmatpush1.msra.mxu0 0.0
      %1514 = vmatprep.subr.mxu0 0.0
      %1515 = vmatpush1.msra.mxu0 0.0
      %1516 = vmatprep.subr.mxu0 0.0
      %1517 = vmatpush1.msra.mxu0 0.0
      %1518 = vmatprep.subr.mxu0 0.0
      %1519 = vmatpush1.msra.mxu0 0.0
      %1520 = vmatprep.subr.mxu0 0.0
      %1521 = vmatpush1.msra.mxu0 0.0
      %1522 = vmatprep.subr.mxu0 0.0
      %1523 = vmatpush1.msra.mxu0 0.0
      %1524 = vmatprep.subr.mxu0 0.0
      %1525 = vmatpush1.msra.mxu0 0.0
      %1526 = vmatprep.subr.mxu0 0.0
      %1527 = vmatpush1.msra.mxu0 0.0
      %1528 = vmatprep.subr.mxu0 0.0
      %1529 = vmatpush1.msra.mxu0 0.0
      %1530 = vmatprep.subr.mxu0 0.0
      %1531 = vmatpush1.msra.mxu0 0.0
      %1532 = vmatprep.subr.mxu0 0.0
      %1533 = vmatpush1.msra.mxu0 0.0
      %1534 = vmatprep.subr.mxu0 0.0
      %1535 = vmatpush1.msra.mxu0 0.0
      %1536 = vmatprep.subr.mxu0 0.0
      %1537 = vmatpush1.msra.mxu0 0.0
      %1538 = vmatprep.subr.mxu0 0.0
      %1539 = vmatpush1.msra.mxu0 0.0
      %1540 = vmatprep.subr.mxu0 0.0
      %1541 = vmatpush1.msra.mxu0 0.0
      %1542 = vmatprep.subr.mxu0 0.0
      %1543 = vmatpush1.msra.mxu0 0.0
      %1544 = vmatprep.subr.mxu0 0.0
      %1545 = vmatpush1.msra.mxu0 0.0
      %1546 = vmatprep.subr.mxu0 0.0
      %1547 = vmatpush1.msra.mxu0 0.0
      %1548 = vmatprep.mubr.f32.mxu0 0.0
      %1549 = vmatmul.mubr.f32.gmra.mrb[0].mxu0 %v1482
      %v1550 = vpop.f32.mrb[0].mxu0
      %v1551 = vadd.f32 %v1479, %v1550
      %v1552 = vpop.f32.mrb[0].mxu0
      %1553 = vdwg.mxu0
      %v1554 = vstv %s715
      %v1555 = vmul.f32 %v1554, %v1551
      %v1556 = vadd.f32 %v525, %v1555
      %v1558 = vlaneseq
      %v1559 = vshrl.u32 %v1558, 7
      %v1560 = vsub.s32 0, %v1559
      %v1561 = vrot.slane %v705, %v1560
      %v1564 = vsel %vm535, %v1556, 0
      %1566 = vmatprep.subr.mxu0 0.0
      %1567 = vmatpush1.msra.mxu0 %v701
      %1568 = vmatprep.subr.mxu0 0.0
      %1569 = vmatpush1.msra.mxu0 %v702
      %1570 = vmatprep.subr.mxu0 0.0
      %1571 = vmatpush1.msra.mxu0 %v703
      %1572 = vmatprep.subr.mxu0 0.0
      %1573 = vmatpush1.msra.mxu0 %v704
      %1574 = vmatprep.subr.mxu0 0.0
      %1575 = vmatpush1.msra.mxu0 0.0
      %1576 = vmatprep.subr.mxu0 0.0
      %1577 = vmatpush1.msra.mxu0 0.0
      %1578 = vmatprep.subr.mxu0 0.0
      %1579 = vmatpush1.msra.mxu0 0.0
      %1580 = vmatprep.subr.mxu0 0.0
      %1581 = vmatpush1.msra.mxu0 0.0
      %1582 = vmatprep.subr.mxu0 0.0
      %1583 = vmatpush1.msra.mxu0 0.0
      %1584 = vmatprep.subr.mxu0 0.0
      %1585 = vmatpush1.msra.mxu0 0.0
      %1586 = vmatprep.subr.mxu0 0.0
      %1587 = vmatpush1.msra.mxu0 0.0
      %1588 = vmatprep.subr.mxu0 0.0
      %1589 = vmatpush1.msra.mxu0 0.0
      %1590 = vmatprep.subr.mxu0 0.0
      %1591 = vmatpush1.msra.mxu0 0.0
      %1592 = vmatprep.subr.mxu0 0.0
      %1593 = vmatpush1.msra.mxu0 0.0
      %1594 = vmatprep.subr.mxu0 0.0
      %1595 = vmatpush1.msra.mxu0 0.0
      %1596 = vmatprep.subr.mxu0 0.0
      %1597 = vmatpush1.msra.mxu0 0.0
      %1598 = vmatprep.subr.mxu0 0.0
      %1599 = vmatpush1.msra.mxu0 0.0
      %1600 = vmatprep.subr.mxu0 0.0
      %1601 = vmatpush1.msra.mxu0 0.0
      %1602 = vmatprep.subr.mxu0 0.0
      %1603 = vmatpush1.msra.mxu0 0.0
      %1604 = vmatprep.subr.mxu0 0.0
      %1605 = vmatpush1.msra.mxu0 0.0
      %1606 = vmatprep.subr.mxu0 0.0
      %1607 = vmatpush1.msra.mxu0 0.0
      %1608 = vmatprep.subr.mxu0 0.0
      %1609 = vmatpush1.msra.mxu0 0.0
      %1610 = vmatprep.subr.mxu0 0.0
      %1611 = vmatpush1.msra.mxu0 0.0
      %1612 = vmatprep.subr.mxu0 0.0
      %1613 = vmatpush1.msra.mxu0 0.0
      %1614 = vmatprep.subr.mxu0 0.0
      %1615 = vmatpush1.msra.mxu0 0.0
      %1616 = vmatprep.subr.mxu0 0.0
      %1617 = vmatpush1.msra.mxu0 0.0
      %1618 = vmatprep.subr.mxu0 0.0
      %1619 = vmatpush1.msra.mxu0 0.0
      %1620 = vmatprep.subr.mxu0 0.0
      %1621 = vmatpush1.msra.mxu0 0.0
      %1622 = vmatprep.subr.mxu0 0.0
      %1623 = vmatpush1.msra.mxu0 0.0
      %1624 = vmatprep.subr.mxu0 0.0
      %1625 = vmatpush1.msra.mxu0 0.0
      %1626 = vmatprep.subr.mxu0 0.0
      %1627 = vmatpush1.msra.mxu0 0.0
      %1628 = vmatprep.subr.mxu0 0.0
      %1629 = vmatpush1.msra.mxu0 0.0
      %1630 = vmatprep.mubr.f32.mxu0 0.0
      %1631 = vmatmul.mubr.f32.gmra.mrb[0].mxu0 %v1564
      %v1632 = vpop.f32.mrb[0].mxu0
      %v1633 = vadd.f32 %v1561, %v1632
      %v1634 = vpop.f32.mrb[0].mxu0
      %1635 = vdwg.mxu0
      %v1636 = vmax.f32 %v1633, 0.0
      %v1638 = vlaneseq
      %v1639 = vshrl.u32 %v1638, 7
      %v1640 = vsub.s32 0, %v1639
      %v1641 = vrot.slane %v714, %v1640
      %vm1643 = vcmask 523264
      %v1645 = vsel %vm1643, %v1636, 0
      %1647 = vmatprep.subr.mxu0 0.0
      %1648 = vmatpush1.msra.mxu0 %v706
      %1649 = vmatprep.subr.mxu0 0.0
      %1650 = vmatpush1.msra.mxu0 %v707
      %1651 = vmatprep.subr.mxu0 0.0
      %1652 = vmatpush1.msra.mxu0 %v708
      %1653 = vmatprep.subr.mxu0 0.0
      %1654 = vmatpush1.msra.mxu0 %v709
      %1655 = vmatprep.subr.mxu0 0.0
      %1656 = vmatpush1.msra.mxu0 %v710
      %1657 = vmatprep.subr.mxu0 0.0
      %1658 = vmatpush1.msra.mxu0 %v711
      %1659 = vmatprep.subr.mxu0 0.0
      %1660 = vmatpush1.msra.mxu0 %v712
      %1661 = vmatprep.subr.mxu0 0.0
      %1662 = vmatpush1.msra.mxu0 %v713
      %1663 = vmatprep.subr.mxu0 0.0
      %1664 = vmatpush1.msra.mxu0 0.0
      %1665 = vmatprep.subr.mxu0 0.0
      %1666 = vmatpush1.msra.mxu0 0.0
      %1667 = vmatprep.subr.mxu0 0.0
      %1668 = vmatpush1.msra.mxu0 0.0
      %1669 = vmatprep.subr.mxu0 0.0
      %1670 = vmatpush1.msra.mxu0 0.0
      %1671 = vmatprep.subr.mxu0 0.0
      %1672 = vmatpush1.msra.mxu0 0.0
      %1673 = vmatprep.subr.mxu0 0.0
      %1674 = vmatpush1.msra.mxu0 0.0
      %1675 = vmatprep.subr.mxu0 0.0
      %1676 = vmatpush1.msra.mxu0 0.0
      %1677 = vmatprep.subr.mxu0 0.0
      %1678 = vmatpush1.msra.mxu0 0.0
      %1679 = vmatprep.subr.mxu0 0.0
      %1680 = vmatpush1.msra.mxu0 0.0
      %1681 = vmatprep.subr.mxu0 0.0
      %1682 = vmatpush1.msra.mxu0 0.0
      %1683 = vmatprep.subr.mxu0 0.0
      %1684 = vmatpush1.msra.mxu0 0.0
      %1685 = vmatprep.subr.mxu0 0.0
      %1686 = vmatpush1.msra.mxu0 0.0
      %1687 = vmatprep.subr.mxu0 0.0
      %1688 = vmatpush1.msra.mxu0 0.0
      %1689 = vmatprep.subr.mxu0 0.0
      %1690 = vmatpush1.msra.mxu0 0.0
      %1691 = vmatprep.subr.mxu0 0.0
      %1692 = vmatpush1.msra.mxu0 0.0
      %1693 = vmatprep.subr.mxu0 0.0
      %1694 = vmatpush1.msra.mxu0 0.0
      %1695 = vmatprep.subr.mxu0 0.0
      %1696 = vmatpush1.msra.mxu0 0.0
      %1697 = vmatprep.subr.mxu0 0.0
      %1698 = vmatpush1.msra.mxu0 0.0
      %1699 = vmatprep.subr.mxu0 0.0
      %1700 = vmatpush1.msra.mxu0 0.0
      %1701 = vmatprep.subr.mxu0 0.0
      %1702 = vmatpush1.msra.mxu0 0.0
      %1703 = vmatprep.subr.mxu0 0.0
      %1704 = vmatpush1.msra.mxu0 0.0
      %1705 = vmatprep.subr.mxu0 0.0
      %1706 = vmatpush1.msra.mxu0 0.0
      %1707 = vmatprep.subr.mxu0 0.0
      %1708 = vmatpush1.msra.mxu0 0.0
      %1709 = vmatprep.subr.mxu0 0.0
      %1710 = vmatpush1.msra.mxu0 0.0
      %1711 = vmatprep.mubr.f32.mxu0 0.0
      %1712 = vmatmul.mubr.f32.gmra.mrb[0].mxu0 %v1645
      %v1713 = vpop.f32.mrb[0].mxu0
      %v1714 = vadd.f32 %v1641, %v1713
      %v1715 = vpop.f32.mrb[0].mxu0
      %1716 = vdwg.mxu0
      %v1717 = vmul.f32 %v1554, %v1714
      %v1718 = vadd.f32 %v1556, %v1717
      %1719 = vst.msk [vmem:[%s524] sm:$0xff] %vm535, %v1718
      %p1720 = scmp.lt.s32.totalorder %s27, 1
      %s1721 = scalar_select %p1720, %s27, 1
      %s1722 = smul.addr %s1721, 8
      %s1723 = scalar_lea.vmem %s15, %s1722
      // Predicated region
      $region81: #{unet_forward.6} parent=79 // pred_check
        %p1724 = pneg %p375
      $region82: #{unet_forward.6} parent=79 // pred_check_branch
        %1726 = sbr.rel (%p1724) target = $region84
      $region83: #{unet_forward.6} parent=79 // pred_region
        _
      $region84: #{unet_forward.6} parent=79 // pred_fallthru
        _
    $region80: #{unet_forward.6} parent=5 // pred_fallthru
      _
    %p1727 = scmp.le.s32.totalorder 2, %s22
    // Predicated region
    $region85: #{unet_forward.6} parent=5 // pred_check
      %p1728 = pneg %p1727
    $region86: #{unet_forward.6} parent=5 // pred_check_branch
      %1730 = sbr.rel (%p1728) target = $region88
    $region87: #{unet_forward.6} parent=5 // pred_region
      %s1731 = ssub.s32 %s22, 2
      // Predicated region
      $region89: #{unet_forward.6} parent=87 // pred_check
        %p1732 = pneg %p381
      $region90: #{unet_forward.6} parent=87 // pred_check_branch
        %1734 = sbr.rel (%p1732) target = $region92
      $region91: #{unet_forward.6} parent=87 // pred_region
        %p1735 = scmp.lt.s32.totalorder %s28, 1
        %s1736 = scalar_select %p1735, %s28, 1
        %s1737 = smul.addr %s1736, 8
        %s1738 = scalar_lea.vmem %s15, %s1737
      $region92: #{unet_forward.6} parent=87 // pred_fallthru
        _
    $region88: #{unet_forward.6} parent=5 // pred_fallthru
      _
  $region6: #{unet_forward.6} parent=0 // loop_footer
    %s26 = sadd.s32 1, %s22
  $region7: #{unet_forward.6} parent=0 // loop_footer_branch
    %21 = sbr.rel target = $region3
  $region8: #{unet_forward.6} parent=0 // loop_exit
    _

// kernel: unet_forward.4
$region0: #{unet_forward.4}
  #allocation0 [shape = 'u32[]', space=smem, size = 0x4, offset = 0x4, fixed_abs, tag = 'smem constant byte address 0x4 - core index']
  #allocation1 [shape = 'u32[144,128]{1,0:T(1,128)}', space=vmem, size = 0x12000, scoped, tag = 'internal scratch']
  #allocation2 [shape = 'f32[1,1]{1,0:T(1,128)S(6)}', space=smem, size = 0x200, scoped, tag = 'scoped memory for unet_forward.4']
  %s0 = inlined_call_operand.vmem [shape: f32[16,32], index: 0, kind: input, shape index: {}]
  %s1 = inlined_call_operand.vmem [shape: f32[16,32], index: 1, kind: input, shape index: {}]
  %s2 = inlined_call_operand.vmem [shape: f32[32,32], index: 2, kind: input, shape index: {}]
  %s3 = inlined_call_operand.vmem [shape: f32[1,32], index: 3, kind: input, shape index: {}]
  %s4 = inlined_call_operand.vmem [shape: f32[32,64], index: 4, kind: input, shape index: {}]
  %s5 = inlined_call_operand.vmem [shape: f32[1,64], index: 5, kind: input, shape index: {}]
  %s6 = inlined_call_operand.vmem [shape: f32[32,32], index: 6, kind: input, shape index: {}]
  %s7 = inlined_call_operand.vmem [shape: f32[1,32], index: 7, kind: input, shape index: {}]
  %s8 = inlined_call_operand.vmem [shape: f32[32,64], index: 8, kind: input, shape index: {}]
  %s9 = inlined_call_operand.vmem [shape: f32[1,64], index: 9, kind: input, shape index: {}]
  %s10 = inlined_call_operand.vmem [shape: f32[64,32], index: 10, kind: input, shape index: {}]
  %s11 = inlined_call_operand.vmem [shape: f32[1,32], index: 11, kind: input, shape index: {}]
  %s12 = inlined_call_operand.<no memory space> [shape: f32[1,1], index: 12, kind: input, shape index: {}]
  %s13 = inlined_call_operand.vmem [shape: f32[16,32], index: 13, kind: output, shape index: {}]
  %s14 = sld [smem:[#allocation0]]
  $region85: #{unet_forward.4} parent=0
    _
  %s16 = ssub.s32 1, %s14
  %s17 = scalar_select 0, %s16, %s14
  %18 = sst [smem:[#allocation2]] %s12
  loop: start=0, step=1, limit=4
  $region2: #{unet_forward.4} parent=0 // loop_pre_header
    _
  $region3: #{unet_forward.4} parent=0 // loop_header
    %s20 = sphi 0, %s24
    %p21 = scmp.ge.s32.totalorder %s20, 4
    %s30 = sphi 0, %s32
    %s33 = sphi 0, %s30
    %s34 = sphi 0, %s33
    %s50 = sphi 0, %s34
    %s56 = sphi 0, %s58
    %s59 = sphi 0, %s56
    %s60 = sphi 0, %s59
    %s76 = sphi 0, %s60
    %s80 = sphi 0, %s80
    %s82 = sphi 0, %s80
    %s83 = sphi 0, %s82
    %s97 = sphi 0, %s83
    %s101 = sphi 0, %s101
    %s103 = sphi 0, %s101
    %s104 = sphi 0, %s103
    %s118 = sphi 0, %s104
    %s122 = sphi 0, %s122
    %s124 = sphi 0, %s122
    %s125 = sphi 0, %s124
    %s139 = sphi 0, %s125
    %s143 = sphi 0, %s143
    %s145 = sphi 0, %s143
    %s146 = sphi 0, %s145
    %s160 = sphi 0, %s146
    %s164 = sphi 0, %s164
    %s166 = sphi 0, %s164
    %s167 = sphi 0, %s166
    %s181 = sphi 0, %s167
    %s185 = sphi 0, %s185
    %s187 = sphi 0, %s185
    %s188 = sphi 0, %s187
    %s202 = sphi 0, %s188
    %s206 = sphi 0, %s206
    %s208 = sphi 0, %s206
    %s209 = sphi 0, %s208
    %s223 = sphi 0, %s209
    %s227 = sphi 0, %s227
    %s229 = sphi 0, %s227
    %s230 = sphi 0, %s229
    %s244 = sphi 0, %s230
    %s248 = sphi 0, %s248
    %s250 = sphi 0, %s248
    %s251 = sphi 0, %s250
    %s265 = sphi 0, %s251
    %s269 = sphi 0, %s269
    %s271 = sphi 0, %s269
    %s272 = sphi 0, %s271
    %s286 = sphi 0, %s272
    %s290 = sphi 0, %s290
    %s292 = sphi 0, %s290
    %s293 = sphi 0, %s292
    %s307 = sphi 0, %s293
    %s313 = sphi 0, %s315
    %s316 = sphi 0, %s313
    %s317 = sphi 0, %s316
    %s333 = sphi 0, %s317
  $region4: #{unet_forward.4} parent=0 // loop_header_branch
    %23 = sbr.rel (%p21) target = $region8
  $region5: #{unet_forward.4} parent=0 // loop_body
    %s25 = ssub.s32 %s20, 1
    %s26 = ssub.s32 %s20, 2
    %s27 = sadd.s32 %s20, 1
    %s28 = ssub.s32 %s20, %s27
    %p29 = scmp.eq.s32.totalorder %s28, 0
    %s31 = sadd.s32 %s30, 1
    %s32 = scalar_select %p29, %s30, %s31
    %p35 = pneg %p29
    %p36 = scmp.eq.s32.totalorder %s20, 1
    %p37 = por %p35, %p36
    %p38 = scmp.ne.s32.totalorder %s30, %s33
    %p39 = scmp.eq.s32.totalorder %s20, 0
    %p40 = por %p38, %p39
    %p41 = scmp.ne.s32.totalorder %s30, %s33
    %p42 = scmp.eq.s32.totalorder %s25, 1
    %p43 = por %p41, %p42
    %p44 = scmp.ne.s32.totalorder %s33, %s34
    %p45 = scmp.eq.s32.totalorder %s25, 0
    %p46 = por %p44, %p45
    %p47 = scmp.ne.s32.totalorder %s33, %s34
    %p48 = scmp.eq.s32.totalorder %s26, 1
    %p49 = por %p47, %p48
    %p51 = scmp.ne.s32.totalorder %s34, %s50
    %p52 = scmp.eq.s32.totalorder %s26, 0
    %p53 = por %p51, %p52
    %s54 = ssub.s32 %s20, %s27
    %p55 = scmp.eq.s32.totalorder %s54, 0
    %s57 = sadd.s32 %s56, 1
    %s58 = scalar_select %p55, %s56, %s57
    %p61 = pneg %p55
    %p62 = scmp.eq.s32.totalorder %s20, 1
    %p63 = por %p61, %p62
    %p64 = scmp.ne.s32.totalorder %s56, %s59
    %p65 = scmp.eq.s32.totalorder %s20, 0
    %p66 = por %p64, %p65
    %p67 = scmp.ne.s32.totalorder %s56, %s59
    %p68 = scmp.eq.s32.totalorder %s25, 1
    %p69 = por %p67, %p68
    %p70 = scmp.ne.s32.totalorder %s59, %s60
    %p71 = scmp.eq.s32.totalorder %s25, 0
    %p72 = por %p70, %p71
    %p73 = scmp.ne.s32.totalorder %s59, %s60
    %p74 = scmp.eq.s32.totalorder %s26, 1
    %p75 = por %p73, %p74
    %p77 = scmp.ne.s32.totalorder %s60, %s76
    %p78 = scmp.eq.s32.totalorder %s26, 0
    %p79 = por %p77, %p78
    %s81 = sadd.s32 %s80, 1
    %p84 = scmp.eq.s32.totalorder %s20, 1
    %p85 = scmp.ne.s32.totalorder %s80, %s82
    %p86 = scmp.eq.s32.totalorder %s20, 0
    %p87 = por %p85, %p86
    %p88 = scmp.ne.s32.totalorder %s80, %s82
    %p89 = scmp.eq.s32.totalorder %s25, 1
    %p90 = por %p88, %p89
    %p91 = scmp.ne.s32.totalorder %s82, %s83
    %p92 = scmp.eq.s32.totalorder %s25, 0
    %p93 = por %p91, %p92
    %p94 = scmp.ne.s32.totalorder %s82, %s83
    %p95 = scmp.eq.s32.totalorder %s26, 1
    %p96 = por %p94, %p95
    %p98 = scmp.ne.s32.totalorder %s83, %s97
    %p99 = scmp.eq.s32.totalorder %s26, 0
    %p100 = por %p98, %p99
    %s102 = sadd.s32 %s101, 1
    %p105 = scmp.eq.s32.totalorder %s20, 1
    %p106 = scmp.ne.s32.totalorder %s101, %s103
    %p107 = scmp.eq.s32.totalorder %s20, 0
    %p108 = por %p106, %p107
    %p109 = scmp.ne.s32.totalorder %s101, %s103
    %p110 = scmp.eq.s32.totalorder %s25, 1
    %p111 = por %p109, %p110
    %p112 = scmp.ne.s32.totalorder %s103, %s104
    %p113 = scmp.eq.s32.totalorder %s25, 0
    %p114 = por %p112, %p113
    %p115 = scmp.ne.s32.totalorder %s103, %s104
    %p116 = scmp.eq.s32.totalorder %s26, 1
    %p117 = por %p115, %p116
    %p119 = scmp.ne.s32.totalorder %s104, %s118
    %p120 = scmp.eq.s32.totalorder %s26, 0
    %p121 = por %p119, %p120
    %s123 = sadd.s32 %s122, 1
    %p126 = scmp.eq.s32.totalorder %s20, 1
    %p127 = scmp.ne.s32.totalorder %s122, %s124
    %p128 = scmp.eq.s32.totalorder %s20, 0
    %p129 = por %p127, %p128
    %p130 = scmp.ne.s32.totalorder %s122, %s124
    %p131 = scmp.eq.s32.totalorder %s25, 1
    %p132 = por %p130, %p131
    %p133 = scmp.ne.s32.totalorder %s124, %s125
    %p134 = scmp.eq.s32.totalorder %s25, 0
    %p135 = por %p133, %p134
    %p136 = scmp.ne.s32.totalorder %s124, %s125
    %p137 = scmp.eq.s32.totalorder %s26, 1
    %p138 = por %p136, %p137
    %p140 = scmp.ne.s32.totalorder %s125, %s139
    %p141 = scmp.eq.s32.totalorder %s26, 0
    %p142 = por %p140, %p141
    %s144 = sadd.s32 %s143, 1
    %p147 = scmp.eq.s32.totalorder %s20, 1
    %p148 = scmp.ne.s32.totalorder %s143, %s145
    %p149 = scmp.eq.s32.totalorder %s20, 0
    %p150 = por %p148, %p149
    %p151 = scmp.ne.s32.totalorder %s143, %s145
    %p152 = scmp.eq.s32.totalorder %s25, 1
    %p153 = por %p151, %p152
    %p154 = scmp.ne.s32.totalorder %s145, %s146
    %p155 = scmp.eq.s32.totalorder %s25, 0
    %p156 = por %p154, %p155
    %p157 = scmp.ne.s32.totalorder %s145, %s146
    %p158 = scmp.eq.s32.totalorder %s26, 1
    %p159 = por %p157, %p158
    %p161 = scmp.ne.s32.totalorder %s146, %s160
    %p162 = scmp.eq.s32.totalorder %s26, 0
    %p163 = por %p161, %p162
    %s165 = sadd.s32 %s164, 1
    %p168 = scmp.eq.s32.totalorder %s20, 1
    %p169 = scmp.ne.s32.totalorder %s164, %s166
    %p170 = scmp.eq.s32.totalorder %s20, 0
    %p171 = por %p169, %p170
    %p172 = scmp.ne.s32.totalorder %s164, %s166
    %p173 = scmp.eq.s32.totalorder %s25, 1
    %p174 = por %p172, %p173
    %p175 = scmp.ne.s32.totalorder %s166, %s167
    %p176 = scmp.eq.s32.totalorder %s25, 0
    %p177 = por %p175, %p176
    %p178 = scmp.ne.s32.totalorder %s166, %s167
    %p179 = scmp.eq.s32.totalorder %s26, 1
    %p180 = por %p178, %p179
    %p182 = scmp.ne.s32.totalorder %s167, %s181
    %p183 = scmp.eq.s32.totalorder %s26, 0
    %p184 = por %p182, %p183
    %s186 = sadd.s32 %s185, 1
    %p189 = scmp.eq.s32.totalorder %s20, 1
    %p190 = scmp.ne.s32.totalorder %s185, %s187
    %p191 = scmp.eq.s32.totalorder %s20, 0
    %p192 = por %p190, %p191
    %p193 = scmp.ne.s32.totalorder %s185, %s187
    %p194 = scmp.eq.s32.totalorder %s25, 1
    %p195 = por %p193, %p194
    %p196 = scmp.ne.s32.totalorder %s187, %s188
    %p197 = scmp.eq.s32.totalorder %s25, 0
    %p198 = por %p196, %p197
    %p199 = scmp.ne.s32.totalorder %s187, %s188
    %p200 = scmp.eq.s32.totalorder %s26, 1
    %p201 = por %p199, %p200
    %p203 = scmp.ne.s32.totalorder %s188, %s202
    %p204 = scmp.eq.s32.totalorder %s26, 0
    %p205 = por %p203, %p204
    %s207 = sadd.s32 %s206, 1
    %p210 = scmp.eq.s32.totalorder %s20, 1
    %p211 = scmp.ne.s32.totalorder %s206, %s208
    %p212 = scmp.eq.s32.totalorder %s20, 0
    %p213 = por %p211, %p212
    %p214 = scmp.ne.s32.totalorder %s206, %s208
    %p215 = scmp.eq.s32.totalorder %s25, 1
    %p216 = por %p214, %p215
    %p217 = scmp.ne.s32.totalorder %s208, %s209
    %p218 = scmp.eq.s32.totalorder %s25, 0
    %p219 = por %p217, %p218
    %p220 = scmp.ne.s32.totalorder %s208, %s209
    %p221 = scmp.eq.s32.totalorder %s26, 1
    %p222 = por %p220, %p221
    %p224 = scmp.ne.s32.totalorder %s209, %s223
    %p225 = scmp.eq.s32.totalorder %s26, 0
    %p226 = por %p224, %p225
    %s228 = sadd.s32 %s227, 1
    %p231 = scmp.eq.s32.totalorder %s20, 1
    %p232 = scmp.ne.s32.totalorder %s227, %s229
    %p233 = scmp.eq.s32.totalorder %s20, 0
    %p234 = por %p232, %p233
    %p235 = scmp.ne.s32.totalorder %s227, %s229
    %p236 = scmp.eq.s32.totalorder %s25, 1
    %p237 = por %p235, %p236
    %p238 = scmp.ne.s32.totalorder %s229, %s230
    %p239 = scmp.eq.s32.totalorder %s25, 0
    %p240 = por %p238, %p239
    %p241 = scmp.ne.s32.totalorder %s229, %s230
    %p242 = scmp.eq.s32.totalorder %s26, 1
    %p243 = por %p241, %p242
    %p245 = scmp.ne.s32.totalorder %s230, %s244
    %p246 = scmp.eq.s32.totalorder %s26, 0
    %p247 = por %p245, %p246
    %s249 = sadd.s32 %s248, 1
    %p252 = scmp.eq.s32.totalorder %s20, 1
    %p253 = scmp.ne.s32.totalorder %s248, %s250
    %p254 = scmp.eq.s32.totalorder %s20, 0
    %p255 = por %p253, %p254
    %p256 = scmp.ne.s32.totalorder %s248, %s250
    %p257 = scmp.eq.s32.totalorder %s25, 1
    %p258 = por %p256, %p257
    %p259 = scmp.ne.s32.totalorder %s250, %s251
    %p260 = scmp.eq.s32.totalorder %s25, 0
    %p261 = por %p259, %p260
    %p262 = scmp.ne.s32.totalorder %s250, %s251
    %p263 = scmp.eq.s32.totalorder %s26, 1
    %p264 = por %p262, %p263
    %p266 = scmp.ne.s32.totalorder %s251, %s265
    %p267 = scmp.eq.s32.totalorder %s26, 0
    %p268 = por %p266, %p267
    %s270 = sadd.s32 %s269, 1
    %p273 = scmp.eq.s32.totalorder %s20, 1
    %p274 = scmp.ne.s32.totalorder %s269, %s271
    %p275 = scmp.eq.s32.totalorder %s20, 0
    %p276 = por %p274, %p275
    %p277 = scmp.ne.s32.totalorder %s269, %s271
    %p278 = scmp.eq.s32.totalorder %s25, 1
    %p279 = por %p277, %p278
    %p280 = scmp.ne.s32.totalorder %s271, %s272
    %p281 = scmp.eq.s32.totalorder %s25, 0
    %p282 = por %p280, %p281
    %p283 = scmp.ne.s32.totalorder %s271, %s272
    %p284 = scmp.eq.s32.totalorder %s26, 1
    %p285 = por %p283, %p284
    %p287 = scmp.ne.s32.totalorder %s272, %s286
    %p288 = scmp.eq.s32.totalorder %s26, 0
    %p289 = por %p287, %p288
    %s291 = sadd.s32 %s290, 1
    %p294 = scmp.eq.s32.totalorder %s20, 1
    %p295 = scmp.ne.s32.totalorder %s290, %s292
    %p296 = scmp.eq.s32.totalorder %s20, 0
    %p297 = por %p295, %p296
    %p298 = scmp.ne.s32.totalorder %s290, %s292
    %p299 = scmp.eq.s32.totalorder %s25, 1
    %p300 = por %p298, %p299
    %p301 = scmp.ne.s32.totalorder %s292, %s293
    %p302 = scmp.eq.s32.totalorder %s25, 0
    %p303 = por %p301, %p302
    %p304 = scmp.ne.s32.totalorder %s292, %s293
    %p305 = scmp.eq.s32.totalorder %s26, 1
    %p306 = por %p304, %p305
    %p308 = scmp.ne.s32.totalorder %s293, %s307
    %p309 = scmp.eq.s32.totalorder %s26, 0
    %p310 = por %p308, %p309
    %s311 = ssub.s32 %s20, %s27
    %p312 = scmp.eq.s32.totalorder %s311, 0
    %s314 = sadd.s32 %s313, 1
    %s315 = scalar_select %p312, %s313, %s314
    %p318 = pneg %p312
    %p319 = scmp.eq.s32.totalorder %s20, 1
    %p320 = por %p318, %p319
    %p321 = scmp.ne.s32.totalorder %s313, %s316
    %p322 = scmp.eq.s32.totalorder %s20, 0
    %p323 = por %p321, %p322
    %p324 = scmp.ne.s32.totalorder %s313, %s316
    %p325 = scmp.eq.s32.totalorder %s25, 1
    %p326 = por %p324, %p325
    %p327 = scmp.ne.s32.totalorder %s316, %s317
    %p328 = scmp.eq.s32.totalorder %s25, 0
    %p329 = por %p327, %p328
    %p330 = scmp.ne.s32.totalorder %s316, %s317
    %p331 = scmp.eq.s32.totalorder %s26, 1
    %p332 = por %p330, %p331
    %p334 = scmp.ne.s32.totalorder %s317, %s333
    %p335 = scmp.eq.s32.totalorder %s26, 0
    %p336 = por %p334, %p335
    %p337 = scmp.le.s32.totalorder 1, %s20
    %p338 = scmp.lt.s32.totalorder %s20, 3
    %p339 = pnand %p337, %p338
    %p340 = pneg %p339
    // Predicated region
    $region9: #{unet_forward.4} parent=5 // pred_check
      _
    $region10: #{unet_forward.4} parent=5 // pred_check_branch
      %342 = sbr.rel (%p339) target = $region12
    $region11: #{unet_forward.4} parent=5 // pred_region
      %s343 = ssub.s32 %s20, 1
      // Predicated region
      $region13: #{unet_forward.4} parent=11 // pred_check
        %p344 = pneg %p93
      $region14: #{unet_forward.4} parent=11 // pred_check_branch
        %346 = sbr.rel (%p344) target = $region16
      $region15: #{unet_forward.4} parent=11 // pred_region
        _
      $region16: #{unet_forward.4} parent=11 // pred_fallthru
        _
      // Predicated region
      $region17: #{unet_forward.4} parent=11 // pred_check
        %p347 = pneg %p114
      $region18: #{unet_forward.4} parent=11 // pred_check_branch
        %349 = sbr.rel (%p347) target = $region20
      $region19: #{unet_forward.4} parent=11 // pred_region
        _
      $region20: #{unet_forward.4} parent=11 // pred_fallthru
        _
      // Predicated region
      $region21: #{unet_forward.4} parent=11 // pred_check
        %p350 = pneg %p135
      $region22: #{unet_forward.4} parent=11 // pred_check_branch
        %352 = sbr.rel (%p350) target = $region24
      $region23: #{unet_forward.4} parent=11 // pred_region
        _
      $region24: #{unet_forward.4} parent=11 // pred_fallthru
        _
      // Predicated region
      $region25: #{unet_forward.4} parent=11 // pred_check
        %p353 = pneg %p156
      $region26: #{unet_forward.4} parent=11 // pred_check_branch
        %355 = sbr.rel (%p353) target = $region28
      $region27: #{unet_forward.4} parent=11 // pred_region
        _
      $region28: #{unet_forward.4} parent=11 // pred_fallthru
        _
      // Predicated region
      $region29: #{unet_forward.4} parent=11 // pred_check
        %p356 = pneg %p177
      $region30: #{unet_forward.4} parent=11 // pred_check_branch
        %358 = sbr.rel (%p356) target = $region32
      $region31: #{unet_forward.4} parent=11 // pred_region
        _
      $region32: #{unet_forward.4} parent=11 // pred_fallthru
        _
      // Predicated region
      $region33: #{unet_forward.4} parent=11 // pred_check
        %p359 = pneg %p198
      $region34: #{unet_forward.4} parent=11 // pred_check_branch
        %361 = sbr.rel (%p359) target = $region36
      $region35: #{unet_forward.4} parent=11 // pred_region
        _
      $region36: #{unet_forward.4} parent=11 // pred_fallthru
        _
      // Predicated region
      $region37: #{unet_forward.4} parent=11 // pred_check
        %p362 = pneg %p219
      $region38: #{unet_forward.4} parent=11 // pred_check_branch
        %364 = sbr.rel (%p362) target = $region40
      $region39: #{unet_forward.4} parent=11 // pred_region
        _
      $region40: #{unet_forward.4} parent=11 // pred_fallthru
        _
      // Predicated region
      $region41: #{unet_forward.4} parent=11 // pred_check
        %p365 = pneg %p240
      $region42: #{unet_forward.4} parent=11 // pred_check_branch
        %367 = sbr.rel (%p365) target = $region44
      $region43: #{unet_forward.4} parent=11 // pred_region
        _
      $region44: #{unet_forward.4} parent=11 // pred_fallthru
        _
      // Predicated region
      $region45: #{unet_forward.4} parent=11 // pred_check
        %p368 = pneg %p261
      $region46: #{unet_forward.4} parent=11 // pred_check_branch
        %370 = sbr.rel (%p368) target = $region48
      $region47: #{unet_forward.4} parent=11 // pred_region
        _
      $region48: #{unet_forward.4} parent=11 // pred_fallthru
        _
      // Predicated region
      $region49: #{unet_forward.4} parent=11 // pred_check
        %p371 = pneg %p282
      $region50: #{unet_forward.4} parent=11 // pred_check_branch
        %373 = sbr.rel (%p371) target = $region52
      $region51: #{unet_forward.4} parent=11 // pred_region
        _
      $region52: #{unet_forward.4} parent=11 // pred_fallthru
        _
      // Predicated region
      $region53: #{unet_forward.4} parent=11 // pred_check
        %p374 = pneg %p303
      $region54: #{unet_forward.4} parent=11 // pred_check_branch
        %376 = sbr.rel (%p374) target = $region56
      $region55: #{unet_forward.4} parent=11 // pred_region
        _
      $region56: #{unet_forward.4} parent=11 // pred_fallthru
        _
    $region12: #{unet_forward.4} parent=5 // pred_fallthru
      _
    %p377 = scmp.lt.s32.totalorder %s20, 2
    // Predicated region
    $region57: #{unet_forward.4} parent=5 // pred_check
      %p378 = pneg %p377
    $region58: #{unet_forward.4} parent=5 // pred_check_branch
      %380 = sbr.rel (%p378) target = $region60
    $region59: #{unet_forward.4} parent=5 // pred_region
      // Predicated region
      $region61: #{unet_forward.4} parent=59 // pred_check
        %p381 = pneg %p40
      $region62: #{unet_forward.4} parent=59 // pred_check_branch
        %383 = sbr.rel (%p381) target = $region64
      $region63: #{unet_forward.4} parent=59 // pred_region
        %p384 = scmp.lt.s32.totalorder %s20, 1
        %s385 = scalar_select %p384, %s20, 1
        %s386 = smul.addr %s385, 8
        %s387 = scalar_lea.vmem %s0, %s386
      $region64: #{unet_forward.4} parent=59 // pred_fallthru
        _
      // Predicated region
      $region65: #{unet_forward.4} parent=59 // pred_check
        %p388 = pneg %p66
      $region66: #{unet_forward.4} parent=59 // pred_check_branch
        %390 = sbr.rel (%p388) target = $region68
      $region67: #{unet_forward.4} parent=59 // pred_region
        %p391 = scmp.lt.s32.totalorder %s20, 1
        %s392 = scalar_select %p391, %s20, 1
        %s393 = smul.addr %s392, 8
        %s394 = scalar_lea.vmem %s1, %s393
      $region68: #{unet_forward.4} parent=59 // pred_fallthru
        _
    $region60: #{unet_forward.4} parent=5 // pred_fallthru
      _
    %p395 = scmp.le.s32.totalorder 1, %s20
    %p396 = scmp.lt.s32.totalorder %s20, 3
    %p397 = pnand %p395, %p396
    %p398 = pneg %p397
    // Predicated region
    $region69: #{unet_forward.4} parent=5 // pred_check
      _
    $region70: #{unet_forward.4} parent=5 // pred_check_branch
      %400 = sbr.rel (%p397) target = $region72
    $region71: #{unet_forward.4} parent=5 // pred_region
      %s401 = ssub.s32 %s20, 1
      %p402 = scmp.lt.s32.totalorder %s25, 1
      %s403 = scalar_select %p402, %s25, 1
      %s404 = smul.addr %s403, 8
      %s405 = scalar_lea.vmem %s0, %s404
      %p406 = pneg %p46
      %p407 = pneg %p43
      %p408 = scmp.lt.s32.totalorder %s25, 1
      %s409 = scalar_select %p408, %s25, 1
      %s410 = smul.addr %s409, 8
      %s411 = scalar_lea.vmem %s1, %s410
      %p412 = pneg %p72
      %p413 = pneg %p69
      %p414 = pneg %p93
      %p415 = pneg %p90
      %p416 = pneg %p114
      %p417 = pneg %p111
      %p418 = pneg %p135
      %p419 = pneg %p132
      %p420 = pneg %p156
      %p421 = pneg %p153
      %p422 = pneg %p177
      %p423 = pneg %p174
      %p424 = pneg %p198
      %p425 = pneg %p195
      %p426 = pneg %p219
      %p427 = pneg %p216
      %p428 = pneg %p240
      %p429 = pneg %p237
      %p430 = pneg %p261
      %p431 = pneg %p258
      %p432 = pneg %p282
      %p433 = pneg %p279
      %p434 = pneg %p303
      %p435 = pneg %p300
      %p436 = pneg %p329
      %p437 = pneg %p326
      %p438 = scmp.lt.s32.totalorder %s25, 1
      %s439 = scalar_select %p438, %s25, 1
      %s440 = smul.addr %s439, 8
      %s441 = scalar_lea.vmem %s13, %s440
      %p442 = scmp.lt.s32.totalorder %s25, 1
      %s443 = scalar_select %p442, %s25, 1
      %s444 = smul.addr %s443, 8
      %s445 = scalar_lea.vmem %s0, %s444
      %p446 = scmp.lt.s32.totalorder %s25, 1
      %s447 = scalar_select %p446, %s25, 1
      %s448 = smul.addr %s447, 8
      %s449 = scalar_lea.vmem %s1, %s448
      %p450 = scmp.lt.s32.totalorder %s25, 1
      %s451 = scalar_select %p450, %s25, 1
      %s452 = smul.addr %s451, 8
      %s453 = scalar_lea.vmem %s13, %s452
      %v454 = vld [vmem:[%s449] sm:$0xff]
      %v455 = vld [vmem:[%s4] sm:$0xff]
      %v456 = vld [vmem:[%s4 + $0x8] sm:$0xff]
      %v457 = vld [vmem:[%s4 + $0x10] sm:$0xff]
      %v458 = vld [vmem:[%s4 + $0x18] sm:$0xff]
      %v459 = vld [vmem:[%s5] sm:$0x1]
      %v461 = vlaneseq
      %v462 = vshrl.u32 %v461, 7
      %v463 = vsub.s32 0, %v462
      %v464 = vrot.slane %v459, %v463
      %vm466 = vcmask 261120
      %v468 = vsel %vm466, %v454, 0
      %470 = vmatprep.subr.mxu0 0.0
      %471 = vmatpush1.msra.mxu0 %v455
      %472 = vmatprep.subr.mxu0 0.0
      %473 = vmatpush1.msra.mxu0 %v456
      %474 = vmatprep.subr.mxu0 0.0
      %475 = vmatpush1.msra.mxu0 %v457
      %476 = vmatprep.subr.mxu0 0.0
      %477 = vmatpush1.msra.mxu0 %v458
      %478 = vmatprep.subr.mxu0 0.0
      %479 = vmatpush1.msra.mxu0 0.0
      %480 = vmatprep.subr.mxu0 0.0
      %481 = vmatpush1.msra.mxu0 0.0
      %482 = vmatprep.subr.mxu0 0.0
      %483 = vmatpush1.msra.mxu0 0.0
      %484 = vmatprep.subr.mxu0 0.0
      %485 = vmatpush1.msra.mxu0 0.0
      %486 = vmatprep.subr.mxu0 0.0
      %487 = vmatpush1.msra.mxu0 0.0
      %488 = vmatprep.subr.mxu0 0.0
      %489 = vmatpush1.msra.mxu0 0.0
      %490 = vmatprep.subr.mxu0 0.0
      %491 = vmatpush1.msra.mxu0 0.0
      %492 = vmatprep.subr.mxu0 0.0
      %493 = vmatpush1.msra.mxu0 0.0
      %494 = vmatprep.subr.mxu0 0.0
      %495 = vmatpush1.msra.mxu0 0.0
      %496 = vmatprep.subr.mxu0 0.0
      %497 = vmatpush1.msra.mxu0 0.0
      %498 = vmatprep.subr.mxu0 0.0
      %499 = vmatpush1.msra.mxu0 0.0
      %500 = vmatprep.subr.mxu0 0.0
      %501 = vmatpush1.msra.mxu0 0.0
      %502 = vmatprep.subr.mxu0 0.0
      %503 = vmatpush1.msra.mxu0 0.0
      %504 = vmatprep.subr.mxu0 0.0
      %505 = vmatpush1.msra.mxu0 0.0
      %506 = vmatprep.subr.mxu0 0.0
      %507 = vmatpush1.msra.mxu0 0.0
      %508 = vmatprep.subr.mxu0 0.0
      %509 = vmatpush1.msra.mxu0 0.0
      %510 = vmatprep.subr.mxu0 0.0
      %511 = vmatpush1.msra.mxu0 0.0
      %512 = vmatprep.subr.mxu0 0.0
      %513 = vmatpush1.msra.mxu0 0.0
      %514 = vmatprep.subr.mxu0 0.0
      %515 = vmatpush1.msra.mxu0 0.0
      %516 = vmatprep.subr.mxu0 0.0
      %517 = vmatpush1.msra.mxu0 0.0
      %518 = vmatprep.subr.mxu0 0.0
      %519 = vmatpush1.msra.mxu0 0.0
      %520 = vmatprep.subr.mxu0 0.0
      %521 = vmatpush1.msra.mxu0 0.0
      %522 = vmatprep.subr.mxu0 0.0
      %523 = vmatpush1.msra.mxu0 0.0
      %524 = vmatprep.subr.mxu0 0.0
      %525 = vmatpush1.msra.mxu0 0.0
      %526 = vmatprep.subr.mxu0 0.0
      %527 = vmatpush1.msra.mxu0 0.0
      %528 = vmatprep.subr.mxu0 0.0
      %529 = vmatpush1.msra.mxu0 0.0
      %530 = vmatprep.subr.mxu0 0.0
      %531 = vmatpush1.msra.mxu0 0.0
      %532 = vmatprep.subr.mxu0 0.0
      %533 = vmatpush1.msra.mxu0 0.0
      %534 = vmatprep.mubr.f32.mxu0 0.0
      %535 = vmatmul.mubr.f32.gmra.mrb[0].mxu0 %v468
      %v536 = vpop.f32.mrb[0].mxu0
      %v537 = vadd.f32 %v464, %v536
      %v538 = vpop.f32.mrb[0].mxu0
      %539 = vdwg.mxu0
      %v540 = vld [vmem:[%s445] sm:$0xff]
      %v541 = vld [vmem:[%s2] sm:$0xff]
      %v542 = vld [vmem:[%s2 + $0x8] sm:$0xff]
      %v543 = vld [vmem:[%s2 + $0x10] sm:$0xff]
      %v544 = vld [vmem:[%s2 + $0x18] sm:$0xff]
      %v545 = vld [vmem:[%s3] sm:$0x1]
      %v546 = vld [vmem:[%s6] sm:$0xff]
      %v547 = vld [vmem:[%s6 + $0x8] sm:$0xff]
      %v548 = vld [vmem:[%s6 + $0x10] sm:$0xff]
      %v549 = vld [vmem:[%s6 + $0x18] sm:$0xff]
      %v550 = vld [vmem:[%s7] sm:$0x1]
      %v551 = vld [vmem:[%s8] sm:$0xff]
      %v552 = vld [vmem:[%s8 + $0x8] sm:$0xff]
      %v553 = vld [vmem:[%s8 + $0x10] sm:$0xff]
      %v554 = vld [vmem:[%s8 + $0x18] sm:$0xff]
      %v555 = vld [vmem:[%s9] sm:$0x1]
      %v556 = vld [vmem:[%s10] sm:$0xff]
      %v557 = vld [vmem:[%s10 + $0x8] sm:$0xff]
      %v558 = vld [vmem:[%s10 + $0x10] sm:$0xff]
      %v559 = vld [vmem:[%s10 + $0x18] sm:$0xff]
      %v560 = vld [vmem:[%s10 + $0x20] sm:$0xff]
      %v561 = vld [vmem:[%s10 + $0x28] sm:$0xff]
      %v562 = vld [vmem:[%s10 + $0x30] sm:$0xff]
      %v563 = vld [vmem:[%s10 + $0x38] sm:$0xff]
      %v564 = vld [vmem:[%s11] sm:$0x1]
      %s565 = sld [smem:[#allocation2]]
      %v567 = vlaneseq
      %v568 = vshrl.u32 %v567, 7
      %v569 = vsub.s32 0, %v568
      %v570 = vrot.slane %v545, %v569
      %v573 = vsel %vm466, %v540, 0
      %575 = vmatprep.subr.mxu0 0.0
      %576 = vmatpush1.msra.mxu0 %v541
      %577 = vmatprep.subr.mxu0 0.0
      %578 = vmatpush1.msra.mxu0 %v542
      %579 = vmatprep.subr.mxu0 0.0
      %580 = vmatpush1.msra.mxu0 %v543
      %581 = vmatprep.subr.mxu0 0.0
      %582 = vmatpush1.msra.mxu0 %v544
      %583 = vmatprep.subr.mxu0 0.0
      %584 = vmatpush1.msra.mxu0 0.0
      %585 = vmatprep.subr.mxu0 0.0
      %586 = vmatpush1.msra.mxu0 0.0
      %587 = vmatprep.subr.mxu0 0.0
      %588 = vmatpush1.msra.mxu0 0.0
      %589 = vmatprep.subr.mxu0 0.0
      %590 = vmatpush1.msra.mxu0 0.0
      %591 = vmatprep.subr.mxu0 0.0
      %592 = vmatpush1.msra.mxu0 0.0
      %593 = vmatprep.subr.mxu0 0.0
      %594 = vmatpush1.msra.mxu0 0.0
      %595 = vmatprep.subr.mxu0 0.0
      %596 = vmatpush1.msra.mxu0 0.0
      %597 = vmatprep.subr.mxu0 0.0
      %598 = vmatpush1.msra.mxu0 0.0
      %599 = vmatprep.subr.mxu0 0.0
      %600 = vmatpush1.msra.mxu0 0.0
      %601 = vmatprep.subr.mxu0 0.0
      %602 = vmatpush1.msra.mxu0 0.0
      %603 = vmatprep.subr.mxu0 0.0
      %604 = vmatpush1.msra.mxu0 0.0
      %605 = vmatprep.subr.mxu0 0.0
      %606 = vmatpush1.msra.mxu0 0.0
      %607 = vmatprep.subr.mxu0 0.0
      %608 = vmatpush1.msra.mxu0 0.0
      %609 = vmatprep.subr.mxu0 0.0
      %610 = vmatpush1.msra.mxu0 0.0
      %611 = vmatprep.subr.mxu0 0.0
      %612 = vmatpush1.msra.mxu0 0.0
      %613 = vmatprep.subr.mxu0 0.0
      %614 = vmatpush1.msra.mxu0 0.0
      %615 = vmatprep.subr.mxu0 0.0
      %616 = vmatpush1.msra.mxu0 0.0
      %617 = vmatprep.subr.mxu0 0.0
      %618 = vmatpush1.msra.mxu0 0.0
      %619 = vmatprep.subr.mxu0 0.0
      %620 = vmatpush1.msra.mxu0 0.0
      %621 = vmatprep.subr.mxu0 0.0
      %622 = vmatpush1.msra.mxu0 0.0
      %623 = vmatprep.subr.mxu0 0.0
      %624 = vmatpush1.msra.mxu0 0.0
      %625 = vmatprep.subr.mxu0 0.0
      %626 = vmatpush1.msra.mxu0 0.0
      %627 = vmatprep.subr.mxu0 0.0
      %628 = vmatpush1.msra.mxu0 0.0
      %629 = vmatprep.subr.mxu0 0.0
      %630 = vmatpush1.msra.mxu0 0.0
      %631 = vmatprep.subr.mxu0 0.0
      %632 = vmatpush1.msra.mxu0 0.0
      %633 = vmatprep.subr.mxu0 0.0
      %634 = vmatpush1.msra.mxu0 0.0
      %635 = vmatprep.subr.mxu0 0.0
      %636 = vmatpush1.msra.mxu0 0.0
      %637 = vmatprep.subr.mxu0 0.0
      %638 = vmatpush1.msra.mxu0 0.0
      %639 = vmatprep.mubr.f32.mxu0 0.0
      %640 = vmatmul.mubr.f32.gmra.mrb[0].mxu0 %v573
      %v641 = vpop.f32.mrb[0].mxu0
      %v642 = vadd.f32 %v570, %v641
      %v643 = vpop.f32.mrb[0].mxu0
      %644 = vdwg.mxu0
      %vm645 = vcmask 64512
      %v647 = vsel %vm645, %v642, 0
      %v650 = vsel %vm645, %v537, 0
      %652 = vmatprep.subr.mxu0 0.0
      %653 = vmatpush1.xpose.msra.mxu0 %v650
      %654 = vmatprep.subr.mxu0 0.0
      %655 = vmatpush1.xpose.msra.mxu0 0.0
      %656 = vmatprep.subr.mxu0 0.0
      %657 = vmatpush1.xpose.msra.mxu0 0.0
      %658 = vmatprep.subr.mxu0 0.0
      %659 = vmatpush1.xpose.msra.mxu0 0.0
      %660 = vmatprep.subr.mxu0 0.0
      %661 = vmatpush1.xpose.msra.mxu0 0.0
      %662 = vmatprep.subr.mxu0 0.0
      %663 = vmatpush1.xpose.msra.mxu0 0.0
      %664 = vmatprep.subr.mxu0 0.0
      %665 = vmatpush1.xpose.msra.mxu0 0.0
      %666 = vmatprep.subr.mxu0 0.0
      %667 = vmatpush1.xpose.msra.mxu0 0.0
      %668 = vmatprep.subr.mxu0 0.0
      %669 = vmatpush1.xpose.msra.mxu0 0.0
      %670 = vmatprep.subr.mxu0 0.0
      %671 = vmatpush1.xpose.msra.mxu0 0.0
      %672 = vmatprep.subr.mxu0 0.0
      %673 = vmatpush1.xpose.msra.mxu0 0.0
      %674 = vmatprep.subr.mxu0 0.0
      %675 = vmatpush1.xpose.msra.mxu0 0.0
      %676 = vmatprep.subr.mxu0 0.0
      %677 = vmatpush1.xpose.msra.mxu0 0.0
      %678 = vmatprep.subr.mxu0 0.0
      %679 = vmatpush1.xpose.msra.mxu0 0.0
      %680 = vmatprep.subr.mxu0 0.0
      %681 = vmatpush1.xpose.msra.mxu0 0.0
      %682 = vmatprep.subr.mxu0 0.0
      %683 = vmatpush1.xpose.msra.mxu0 0.0
      %684 = vmatprep.subr.mxu0 0.0
      %685 = vmatpush1.xpose.msra.mxu0 0.0
      %686 = vmatprep.subr.mxu0 0.0
      %687 = vmatpush1.xpose.msra.mxu0 0.0
      %688 = vmatprep.subr.mxu0 0.0
      %689 = vmatpush1.xpose.msra.mxu0 0.0
      %690 = vmatprep.subr.mxu0 0.0
      %691 = vmatpush1.xpose.msra.mxu0 0.0
      %692 = vmatprep.subr.mxu0 0.0
      %693 = vmatpush1.xpose.msra.mxu0 0.0
      %694 = vmatprep.subr.mxu0 0.0
      %695 = vmatpush1.xpose.msra.mxu0 0.0
      %696 = vmatprep.subr.mxu0 0.0
      %697 = vmatpush1.xpose.msra.mxu0 0.0
      %698 = vmatprep.subr.mxu0 0.0
      %699 = vmatpush1.xpose.msra.mxu0 0.0
      %700 = vmatprep.subr.mxu0 0.0
      %701 = vmatpush1.xpose.msra.mxu0 0.0
      %702 = vmatprep.subr.mxu0 0.0
      %703 = vmatpush1.xpose.msra.mxu0 0.0
      %704 = vmatprep.subr.mxu0 0.0
      %705 = vmatpush1.xpose.msra.mxu0 0.0
      %706 = vmatprep.subr.mxu0 0.0
      %707 = vmatpush1.xpose.msra.mxu0 0.0
      %708 = vmatprep.subr.mxu0 0.0
      %709 = vmatpush1.xpose.msra.mxu0 0.0
      %710 = vmatprep.subr.mxu0 0.0
      %711 = vmatpush1.xpose.msra.mxu0 0.0
      %712 = vmatprep.subr.mxu0 0.0
      %713 = vmatpush1.xpose.msra.mxu0 0.0
      %714 = vmatprep.subr.mxu0 0.0
      %715 = vmatpush1.xpose.msra.mxu0 0.0
      %716 = vmatprep.mubr.f32.mxu0 0.0
      %717 = vmatmul.mubr.f32.gmra.mrb[0].mxu0 %v647
      %v718 = vpop.f32.mrb[0].mxu0
      %v719 = vadd.f32 0.0, %v718
      %v720 = vpop.f32.mrb[0].mxu0
      %721 = vdwg.mxu0
      %v722 = vmul.f32 %v719, 0.35355338
      %v723 = vsel %vm645, %v722, -inf
      %724 = vmax.xlane.f32.xlu0 %v723
      %v725 = vpop.xlane.xlu0 %724
      %v726 = vsub.f32 %v722, %v725
      %v727 = vmul.f32 %v726, 1.442695
      %v728 = vpow.pop %v727
      %v729 = vsel %vm645, %v728, 0.0
      %730 = vadd.xlane.f32.xlu0 %v729
      %v731 = vpop.xlane.xlu0 %730
      %v732 = vrcp.pop %v731
      %v733 = vmul.f32 %v728, %v732
      %734 = vrot.lane.b32.xlu0 %v537, 96
      %v735 = vpop.permute.xlu0 %734
      %v738 = vsel %vm645, %v733, 0
      %740 = vmatprep.subr.mxu0 0.0
      %741 = vmatpush1.msra.mxu0 %v735
      %742 = vmatprep.subr.mxu0 0.0
      %743 = vmatpush1.msra.mxu0 0.0
      %744 = vmatprep.subr.mxu0 0.0
      %745 = vmatpush1.msra.mxu0 0.0
      %746 = vmatprep.subr.mxu0 0.0
      %747 = vmatpush1.msra.mxu0 0.0
      %748 = vmatprep.subr.mxu0 0.0
      %749 = vmatpush1.msra.mxu0 0.0
      %750 = vmatprep.subr.mxu0 0.0
      %751 = vmatpush1.msra.mxu0 0.0
      %752 = vmatprep.subr.mxu0 0.0
      %753 = vmatpush1.msra.mxu0 0.0
      %754 = vmatprep.subr.mxu0 0.0
      %755 = vmatpush1.msra.mxu0 0.0
      %756 = vmatprep.subr.mxu0 0.0
      %757 = vmatpush1.msra.mxu0 0.0
      %758 = vmatprep.subr.mxu0 0.0
      %759 = vmatpush1.msra.mxu0 0.0
      %760 = vmatprep.subr.mxu0 0.0
      %761 = vmatpush1.msra.mxu0 0.0
      %762 = vmatprep.subr.mxu0 0.0
      %763 = vmatpush1.msra.mxu0 0.0
      %764 = vmatprep.subr.mxu0 0.0
      %765 = vmatpush1.msra.mxu0 0.0
      %766 = vmatprep.subr.mxu0 0.0
      %767 = vmatpush1.msra.mxu0 0.0
      %768 = vmatprep.subr.mxu0 0.0
      %769 = vmatpush1.msra.mxu0 0.0
      %770 = vmatprep.subr.mxu0 0.0
      %771 = vmatpush1.msra.mxu0 0.0
      %772 = vmatprep.subr.mxu0 0.0
      %773 = vmatpush1.msra.mxu0 0.0
      %774 = vmatprep.subr.mxu0 0.0
      %775 = vmatpush1.msra.mxu0 0.0
      %776 = vmatprep.subr.mxu0 0.0
      %777 = vmatpush1.msra.mxu0 0.0
      %778 = vmatprep.subr.mxu0 0.0
      %779 = vmatpush1.msra.mxu0 0.0
      %780 = vmatprep.subr.mxu0 0.0
      %781 = vmatpush1.msra.mxu0 0.0
      %782 = vmatprep.subr.mxu0 0.0
      %783 = vmatpush1.msra.mxu0 0.0
      %784 = vmatprep.subr.mxu0 0.0
      %785 = vmatpush1.msra.mxu0 0.0
      %786 = vmatprep.subr.mxu0 0.0
      %787 = vmatpush1.msra.mxu0 0.0
      %788 = vmatprep.subr.mxu0 0.0
      %789 = vmatpush1.msra.mxu0 0.0
      %790 = vmatprep.subr.mxu0 0.0
      %791 = vmatpush1.msra.mxu0 0.0
      %792 = vmatprep.subr.mxu0 0.0
      %793 = vmatpush1.msra.mxu0 0.0
      %794 = vmatprep.subr.mxu0 0.0
      %795 = vmatpush1.msra.mxu0 0.0
      %796 = vmatprep.subr.mxu0 0.0
      %797 = vmatpush1.msra.mxu0 0.0
      %798 = vmatprep.subr.mxu0 0.0
      %799 = vmatpush1.msra.mxu0 0.0
      %800 = vmatprep.subr.mxu0 0.0
      %801 = vmatpush1.msra.mxu0 0.0
      %802 = vmatprep.subr.mxu0 0.0
      %803 = vmatpush1.msra.mxu0 0.0
      %804 = vmatprep.mubr.f32.mxu0 0.0
      %805 = vmatmul.mubr.f32.gmra.mrb[0].mxu0 %v738
      %v806 = vpop.f32.mrb[0].mxu0
      %v807 = vadd.f32 0.0, %v806
      %v808 = vpop.f32.mrb[0].mxu0
      %809 = vdwg.mxu0
      %810 = vrot.lane.b32.xlu0 %v642, 120
      %v811 = vpop.permute.xlu0 %810
      %812 = vrot.lane.b32.xlu0 %v537, 120
      %v813 = vpop.permute.xlu0 %812
      %v814 = vsel %vm645, %v811, 0
      %v816 = vsel %vm645, %v813, 0
      %818 = vmatprep.subr.mxu0 0.0
      %819 = vmatpush1.xpose.msra.mxu0 %v816
      %820 = vmatprep.subr.mxu0 0.0
      %821 = vmatpush1.xpose.msra.mxu0 0.0
      %822 = vmatprep.subr.mxu0 0.0
      %823 = vmatpush1.xpose.msra.mxu0 0.0
      %824 = vmatprep.subr.mxu0 0.0
      %825 = vmatpush1.xpose.msra.mxu0 0.0
      %826 = vmatprep.subr.mxu0 0.0
      %827 = vmatpush1.xpose.msra.mxu0 0.0
      %828 = vmatprep.subr.mxu0 0.0
      %829 = vmatpush1.xpose.msra.mxu0 0.0
      %830 = vmatprep.subr.mxu0 0.0
      %831 = vmatpush1.xpose.msra.mxu0 0.0
      %832 = vmatprep.subr.mxu0 0.0
      %833 = vmatpush1.xpose.msra.mxu0 0.0
      %834 = vmatprep.subr.mxu0 0.0
      %835 = vmatpush1.xpose.msra.mxu0 0.0
      %836 = vmatprep.subr.mxu0 0.0
      %837 = vmatpush1.xpose.msra.mxu0 0.0
      %838 = vmatprep.subr.mxu0 0.0
      %839 = vmatpush1.xpose.msra.mxu0 0.0
      %840 = vmatprep.subr.mxu0 0.0
      %841 = vmatpush1.xpose.msra.mxu0 0.0
      %842 = vmatprep.subr.mxu0 0.0
      %843 = vmatpush1.xpose.msra.mxu0 0.0
      %844 = vmatprep.subr.mxu0 0.0
      %845 = vmatpush1.xpose.msra.mxu0 0.0
      %846 = vmatprep.subr.mxu0 0.0
      %847 = vmatpush1.xpose.msra.mxu0 0.0
      %848 = vmatprep.subr.mxu0 0.0
      %849 = vmatpush1.xpose.msra.mxu0 0.0
      %850 = vmatprep.subr.mxu0 0.0
      %851 = vmatpush1.xpose.msra.mxu0 0.0
      %852 = vmatprep.subr.mxu0 0.0
      %853 = vmatpush1.xpose.msra.mxu0 0.0
      %854 = vmatprep.subr.mxu0 0.0
      %855 = vmatpush1.xpose.msra.mxu0 0.0
      %856 = vmatprep.subr.mxu0 0.0
      %857 = vmatpush1.xpose.msra.mxu0 0.0
      %858 = vmatprep.subr.mxu0 0.0
      %859 = vmatpush1.xpose.msra.mxu0 0.0
      %860 = vmatprep.subr.mxu0 0.0
      %861 = vmatpush1.xpose.msra.mxu0 0.0
      %862 = vmatprep.subr.mxu0 0.0
      %863 = vmatpush1.xpose.msra.mxu0 0.0
      %864 = vmatprep.subr.mxu0 0.0
      %865 = vmatpush1.xpose.msra.mxu0 0.0
      %866 = vmatprep.subr.mxu0 0.0
      %867 = vmatpush1.xpose.msra.mxu0 0.0
      %868 = vmatprep.subr.mxu0 0.0
      %869 = vmatpush1.xpose.msra.mxu0 0.0
      %870 = vmatprep.subr.mxu0 0.0
      %871 = vmatpush1.xpose.msra.mxu0 0.0
      %872 = vmatprep.subr.mxu0 0.0
      %873 = vmatpush1.xpose.msra.mxu0 0.0
      %874 = vmatprep.subr.mxu0 0.0
      %875 = vmatpush1.xpose.msra.mxu0 0.0
      %876 = vmatprep.subr.mxu0 0.0
      %877 = vmatpush1.xpose.msra.mxu0 0.0
      %878 = vmatprep.subr.mxu0 0.0
      %879 = vmatpush1.xpose.msra.mxu0 0.0
      %880 = vmatprep.subr.mxu0 0.0
      %881 = vmatpush1.xpose.msra.mxu0 0.0
      %882 = vmatprep.mubr.f32.mxu0 0.0
      %883 = vmatmul.mubr.f32.gmra.mrb[0].mxu0 %v814
      %v884 = vpop.f32.mrb[0].mxu0
      %v885 = vadd.f32 0.0, %v884
      %v886 = vpop.f32.mrb[0].mxu0
      %887 = vdwg.mxu0
      %v888 = vmul.f32 %v885, 0.35355338
      %v889 = vsel %vm645, %v888, -inf
      %890 = vmax.xlane.f32.xlu0 %v889
      %v891 = vpop.xlane.xlu0 %890
      %v892 = vsub.f32 %v888, %v891
      %v893 = vmul.f32 %v892, 1.442695
      %v894 = vpow.pop %v893
      %v895 = vsel %vm645, %v894, 0.0
      %896 = vadd.xlane.f32.xlu0 %v895
      %v897 = vpop.xlane.xlu0 %896
      %v898 = vrcp.pop %v897
      %v899 = vmul.f32 %v894, %v898
      %900 = vrot.lane.b32.xlu0 %v537, 88
      %v901 = vpop.permute.xlu0 %900
      %v904 = vsel %vm645, %v899, 0
      %906 = vmatprep.subr.mxu0 0.0
      %907 = vmatpush1.msra.mxu0 %v901
      %908 = vmatprep.subr.mxu0 0.0
      %909 = vmatpush1.msra.mxu0 0.0
      %910 = vmatprep.subr.mxu0 0.0
      %911 = vmatpush1.msra.mxu0 0.0
      %912 = vmatprep.subr.mxu0 0.0
      %913 = vmatpush1.msra.mxu0 0.0
      %914 = vmatprep.subr.mxu0 0.0
      %915 = vmatpush1.msra.mxu0 0.0
      %916 = vmatprep.subr.mxu0 0.0
      %917 = vmatpush1.msra.mxu0 0.0
      %918 = vmatprep.subr.mxu0 0.0
      %919 = vmatpush1.msra.mxu0 0.0
      %920 = vmatprep.subr.mxu0 0.0
      %921 = vmatpush1.msra.mxu0 0.0
      %922 = vmatprep.subr.mxu0 0.0
      %923 = vmatpush1.msra.mxu0 0.0
      %924 = vmatprep.subr.mxu0 0.0
      %925 = vmatpush1.msra.mxu0 0.0
      %926 = vmatprep.subr.mxu0 0.0
      %927 = vmatpush1.msra.mxu0 0.0
      %928 = vmatprep.subr.mxu0 0.0
      %929 = vmatpush1.msra.mxu0 0.0
      %930 = vmatprep.subr.mxu0 0.0
      %931 = vmatpush1.msra.mxu0 0.0
      %932 = vmatprep.subr.mxu0 0.0
      %933 = vmatpush1.msra.mxu0 0.0
      %934 = vmatprep.subr.mxu0 0.0
      %935 = vmatpush1.msra.mxu0 0.0
      %936 = vmatprep.subr.mxu0 0.0
      %937 = vmatpush1.msra.mxu0 0.0
      %938 = vmatprep.subr.mxu0 0.0
      %939 = vmatpush1.msra.mxu0 0.0
      %940 = vmatprep.subr.mxu0 0.0
      %941 = vmatpush1.msra.mxu0 0.0
      %942 = vmatprep.subr.mxu0 0.0
      %943 = vmatpush1.msra.mxu0 0.0
      %944 = vmatprep.subr.mxu0 0.0
      %945 = vmatpush1.msra.mxu0 0.0
      %946 = vmatprep.subr.mxu0 0.0
      %947 = vmatpush1.msra.mxu0 0.0
      %948 = vmatprep.subr.mxu0 0.0
      %949 = vmatpush1.msra.mxu0 0.0
      %950 = vmatprep.subr.mxu0 0.0
      %951 = vmatpush1.msra.mxu0 0.0
      %952 = vmatprep.subr.mxu0 0.0
      %953 = vmatpush1.msra.mxu0 0.0
      %954 = vmatprep.subr.mxu0 0.0
      %955 = vmatpush1.msra.mxu0 0.0
      %956 = vmatprep.subr.mxu0 0.0
      %957 = vmatpush1.msra.mxu0 0.0
      %958 = vmatprep.subr.mxu0 0.0
      %959 = vmatpush1.msra.mxu0 0.0
      %960 = vmatprep.subr.mxu0 0.0
      %961 = vmatpush1.msra.mxu0 0.0
      %962 = vmatprep.subr.mxu0 0.0
      %963 = vmatpush1.msra.mxu0 0.0
      %964 = vmatprep.subr.mxu0 0.0
      %965 = vmatpush1.msra.mxu0 0.0
      %966 = vmatprep.subr.mxu0 0.0
      %967 = vmatpush1.msra.mxu0 0.0
      %968 = vmatprep.subr.mxu0 0.0
      %969 = vmatpush1.msra.mxu0 0.0
      %970 = vmatprep.mubr.f32.mxu0 0.0
      %971 = vmatmul.mubr.f32.gmra.mrb[0].mxu0 %v904
      %v972 = vpop.f32.mrb[0].mxu0
      %v973 = vadd.f32 0.0, %v972
      %v974 = vpop.f32.mrb[0].mxu0
      %975 = vdwg.mxu0
      %976 = vrot.lane.b32.xlu0 %v642, 112
      %v977 = vpop.permute.xlu0 %976
      %978 = vrot.lane.b32.xlu0 %v537, 112
      %v979 = vpop.permute.xlu0 %978
      %v980 = vsel %vm645, %v977, 0
      %v982 = vsel %vm645, %v979, 0
      %984 = vmatprep.subr.mxu0 0.0
      %985 = vmatpush1.xpose.msra.mxu0 %v982
      %986 = vmatprep.subr.mxu0 0.0
      %987 = vmatpush1.xpose.msra.mxu0 0.0
      %988 = vmatprep.subr.mxu0 0.0
      %989 = vmatpush1.xpose.msra.mxu0 0.0
      %990 = vmatprep.subr.mxu0 0.0
      %991 = vmatpush1.xpose.msra.mxu0 0.0
      %992 = vmatprep.subr.mxu0 0.0
      %993 = vmatpush1.xpose.msra.mxu0 0.0
      %994 = vmatprep.subr.mxu0 0.0
      %995 = vmatpush1.xpose.msra.mxu0 0.0
      %996 = vmatprep.subr.mxu0 0.0
      %997 = vmatpush1.xpose.msra.mxu0 0.0
      %998 = vmatprep.subr.mxu0 0.0
      %999 = vmatpush1.xpose.msra.mxu0 0.0
      %1000 = vmatprep.subr.mxu0 0.0
      %1001 = vmatpush1.xpose.msra.mxu0 0.0
      %1002 = vmatprep.subr.mxu0 0.0
      %1003 = vmatpush1.xpose.msra.mxu0 0.0
      %1004 = vmatprep.subr.mxu0 0.0
      %1005 = vmatpush1.xpose.msra.mxu0 0.0
      %1006 = vmatprep.subr.mxu0 0.0
      %1007 = vmatpush1.xpose.msra.mxu0 0.0
      %1008 = vmatprep.subr.mxu0 0.0
      %1009 = vmatpush1.xpose.msra.mxu0 0.0
      %1010 = vmatprep.subr.mxu0 0.0
      %1011 = vmatpush1.xpose.msra.mxu0 0.0
      %1012 = vmatprep.subr.mxu0 0.0
      %1013 = vmatpush1.xpose.msra.mxu0 0.0
      %1014 = vmatprep.subr.mxu0 0.0
      %1015 = vmatpush1.xpose.msra.mxu0 0.0
      %1016 = vmatprep.subr.mxu0 0.0
      %1017 = vmatpush1.xpose.msra.mxu0 0.0
      %1018 = vmatprep.subr.mxu0 0.0
      %1019 = vmatpush1.xpose.msra.mxu0 0.0
      %1020 = vmatprep.subr.mxu0 0.0
      %1021 = vmatpush1.xpose.msra.mxu0 0.0
      %1022 = vmatprep.subr.mxu0 0.0
      %1023 = vmatpush1.xpose.msra.mxu0 0.0
      %1024 = vmatprep.subr.mxu0 0.0
      %1025 = vmatpush1.xpose.msra.mxu0 0.0
      %1026 = vmatprep.subr.mxu0 0.0
      %1027 = vmatpush1.xpose.msra.mxu0 0.0
      %1028 = vmatprep.subr.mxu0 0.0
      %1029 = vmatpush1.xpose.msra.mxu0 0.0
      %1030 = vmatprep.subr.mxu0 0.0
      %1031 = vmatpush1.xpose.msra.mxu0 0.0
      %1032 = vmatprep.subr.mxu0 0.0
      %1033 = vmatpush1.xpose.msra.mxu0 0.0
      %1034 = vmatprep.subr.mxu0 0.0
      %1035 = vmatpush1.xpose.msra.mxu0 0.0
      %1036 = vmatprep.subr.mxu0 0.0
      %1037 = vmatpush1.xpose.msra.mxu0 0.0
      %1038 = vmatprep.subr.mxu0 0.0
      %1039 = vmatpush1.xpose.msra.mxu0 0.0
      %1040 = vmatprep.subr.mxu0 0.0
      %1041 = vmatpush1.xpose.msra.mxu0 0.0
      %1042 = vmatprep.subr.mxu0 0.0
      %1043 = vmatpush1.xpose.msra.mxu0 0.0
      %1044 = vmatprep.subr.mxu0 0.0
      %1045 = vmatpush1.xpose.msra.mxu0 0.0
      %1046 = vmatprep.subr.mxu0 0.0
      %1047 = vmatpush1.xpose.msra.mxu0 0.0
      %1048 = vmatprep.mubr.f32.mxu0 0.0
      %1049 = vmatmul.mubr.f32.gmra.mrb[0].mxu0 %v980
      %v1050 = vpop.f32.mrb[0].mxu0
      %v1051 = vadd.f32 0.0, %v1050
      %v1052 = vpop.f32.mrb[0].mxu0
      %1053 = vdwg.mxu0
      %v1054 = vmul.f32 %v1051, 0.35355338
      %v1055 = vsel %vm645, %v1054, -inf
      %1056 = vmax.xlane.f32.xlu0 %v1055
      %v1057 = vpop.xlane.xlu0 %1056
      %v1058 = vsub.f32 %v1054, %v1057
      %v1059 = vmul.f32 %v1058, 1.442695
      %v1060 = vpow.pop %v1059
      %v1061 = vsel %vm645, %v1060, 0.0
      %1062 = vadd.xlane.f32.xlu0 %v1061
      %v1063 = vpop.xlane.xlu0 %1062
      %v1064 = vrcp.pop %v1063
      %v1065 = vmul.f32 %v1060, %v1064
      %1066 = vrot.lane.b32.xlu0 %v537, 80
      %v1067 = vpop.permute.xlu0 %1066
      %v1070 = vsel %vm645, %v1065, 0
      %1072 = vmatprep.subr.mxu0 0.0
      %1073 = vmatpush1.msra.mxu0 %v1067
      %1074 = vmatprep.subr.mxu0 0.0
      %1075 = vmatpush1.msra.mxu0 0.0
      %1076 = vmatprep.subr.mxu0 0.0
      %1077 = vmatpush1.msra.mxu0 0.0
      %1078 = vmatprep.subr.mxu0 0.0
      %1079 = vmatpush1.msra.mxu0 0.0
      %1080 = vmatprep.subr.mxu0 0.0
      %1081 = vmatpush1.msra.mxu0 0.0
      %1082 = vmatprep.subr.mxu0 0.0
      %1083 = vmatpush1.msra.mxu0 0.0
      %1084 = vmatprep.subr.mxu0 0.0
      %1085 = vmatpush1.msra.mxu0 0.0
      %1086 = vmatprep.subr.mxu0 0.0
      %1087 = vmatpush1.msra.mxu0 0.0
      %1088 = vmatprep.subr.mxu0 0.0
      %1089 = vmatpush1.msra.mxu0 0.0
      %1090 = vmatprep.subr.mxu0 0.0
      %1091 = vmatpush1.msra.mxu0 0.0
      %1092 = vmatprep.subr.mxu0 0.0
      %1093 = vmatpush1.msra.mxu0 0.0
      %1094 = vmatprep.subr.mxu0 0.0
      %1095 = vmatpush1.msra.mxu0 0.0
      %1096 = vmatprep.subr.mxu0 0.0
      %1097 = vmatpush1.msra.mxu0 0.0
      %1098 = vmatprep.subr.mxu0 0.0
      %1099 = vmatpush1.msra.mxu0 0.0
      %1100 = vmatprep.subr.mxu0 0.0
      %1101 = vmatpush1.msra.mxu0 0.0
      %1102 = vmatprep.subr.mxu0 0.0
      %1103 = vmatpush1.msra.mxu0 0.0
      %1104 = vmatprep.subr.mxu0 0.0
      %1105 = vmatpush1.msra.mxu0 0.0
      %1106 = vmatprep.subr.mxu0 0.0
      %1107 = vmatpush1.msra.mxu0 0.0
      %1108 = vmatprep.subr.mxu0 0.0
      %1109 = vmatpush1.msra.mxu0 0.0
      %1110 = vmatprep.subr.mxu0 0.0
      %1111 = vmatpush1.msra.mxu0 0.0
      %1112 = vmatprep.subr.mxu0 0.0
      %1113 = vmatpush1.msra.mxu0 0.0
      %1114 = vmatprep.subr.mxu0 0.0
      %1115 = vmatpush1.msra.mxu0 0.0
      %1116 = vmatprep.subr.mxu0 0.0
      %1117 = vmatpush1.msra.mxu0 0.0
      %1118 = vmatprep.subr.mxu0 0.0
      %1119 = vmatpush1.msra.mxu0 0.0
      %1120 = vmatprep.subr.mxu0 0.0
      %1121 = vmatpush1.msra.mxu0 0.0
      %1122 = vmatprep.subr.mxu0 0.0
      %1123 = vmatpush1.msra.mxu0 0.0
      %1124 = vmatprep.subr.mxu0 0.0
      %1125 = vmatpush1.msra.mxu0 0.0
      %1126 = vmatprep.subr.mxu0 0.0
      %1127 = vmatpush1.msra.mxu0 0.0
      %1128 = vmatprep.subr.mxu0 0.0
      %1129 = vmatpush1.msra.mxu0 0.0
      %1130 = vmatprep.subr.mxu0 0.0
      %1131 = vmatpush1.msra.mxu0 0.0
      %1132 = vmatprep.subr.mxu0 0.0
      %1133 = vmatpush1.msra.mxu0 0.0
      %1134 = vmatprep.subr.mxu0 0.0
      %1135 = vmatpush1.msra.mxu0 0.0
      %1136 = vmatprep.mubr.f32.mxu0 0.0
      %1137 = vmatmul.mubr.f32.gmra.mrb[0].mxu0 %v1070
      %v1138 = vpop.f32.mrb[0].mxu0
      %v1139 = vadd.f32 0.0, %v1138
      %v1140 = vpop.f32.mrb[0].mxu0
      %1141 = vdwg.mxu0
      %1142 = vrot.lane.b32.xlu0 %v642, 104
      %v1143 = vpop.permute.xlu0 %1142
      %1144 = vrot.lane.b32.xlu0 %v537, 104
      %v1145 = vpop.permute.xlu0 %1144
      %v1146 = vsel %vm645, %v1143, 0
      %v1148 = vsel %vm645, %v1145, 0
      %1150 = vmatprep.subr.mxu0 0.0
      %1151 = vmatpush1.xpose.msra.mxu0 %v1148
      %1152 = vmatprep.subr.mxu0 0.0
      %1153 = vmatpush1.xpose.msra.mxu0 0.0
      %1154 = vmatprep.subr.mxu0 0.0
      %1155 = vmatpush1.xpose.msra.mxu0 0.0
      %1156 = vmatprep.subr.mxu0 0.0
      %1157 = vmatpush1.xpose.msra.mxu0 0.0
      %1158 = vmatprep.subr.mxu0 0.0
      %1159 = vmatpush1.xpose.msra.mxu0 0.0
      %1160 = vmatprep.subr.mxu0 0.0
      %1161 = vmatpush1.xpose.msra.mxu0 0.0
      %1162 = vmatprep.subr.mxu0 0.0
      %1163 = vmatpush1.xpose.msra.mxu0 0.0
      %1164 = vmatprep.subr.mxu0 0.0
      %1165 = vmatpush1.xpose.msra.mxu0 0.0
      %1166 = vmatprep.subr.mxu0 0.0
      %1167 = vmatpush1.xpose.msra.mxu0 0.0
      %1168 = vmatprep.subr.mxu0 0.0
      %1169 = vmatpush1.xpose.msra.mxu0 0.0
      %1170 = vmatprep.subr.mxu0 0.0
      %1171 = vmatpush1.xpose.msra.mxu0 0.0
      %1172 = vmatprep.subr.mxu0 0.0
      %1173 = vmatpush1.xpose.msra.mxu0 0.0
      %1174 = vmatprep.subr.mxu0 0.0
      %1175 = vmatpush1.xpose.msra.mxu0 0.0
      %1176 = vmatprep.subr.mxu0 0.0
      %1177 = vmatpush1.xpose.msra.mxu0 0.0
      %1178 = vmatprep.subr.mxu0 0.0
      %1179 = vmatpush1.xpose.msra.mxu0 0.0
      %1180 = vmatprep.subr.mxu0 0.0
      %1181 = vmatpush1.xpose.msra.mxu0 0.0
      %1182 = vmatprep.subr.mxu0 0.0
      %1183 = vmatpush1.xpose.msra.mxu0 0.0
      %1184 = vmatprep.subr.mxu0 0.0
      %1185 = vmatpush1.xpose.msra.mxu0 0.0
      %1186 = vmatprep.subr.mxu0 0.0
      %1187 = vmatpush1.xpose.msra.mxu0 0.0
      %1188 = vmatprep.subr.mxu0 0.0
      %1189 = vmatpush1.xpose.msra.mxu0 0.0
      %1190 = vmatprep.subr.mxu0 0.0
      %1191 = vmatpush1.xpose.msra.mxu0 0.0
      %1192 = vmatprep.subr.mxu0 0.0
      %1193 = vmatpush1.xpose.msra.mxu0 0.0
      %1194 = vmatprep.subr.mxu0 0.0
      %1195 = vmatpush1.xpose.msra.mxu0 0.0
      %1196 = vmatprep.subr.mxu0 0.0
      %1197 = vmatpush1.xpose.msra.mxu0 0.0
      %1198 = vmatprep.subr.mxu0 0.0
      %1199 = vmatpush1.xpose.msra.mxu0 0.0
      %1200 = vmatprep.subr.mxu0 0.0
      %1201 = vmatpush1.xpose.msra.mxu0 0.0
      %1202 = vmatprep.subr.mxu0 0.0
      %1203 = vmatpush1.xpose.msra.mxu0 0.0
      %1204 = vmatprep.subr.mxu0 0.0
      %1205 = vmatpush1.xpose.msra.mxu0 0.0
      %1206 = vmatprep.subr.mxu0 0.0
      %1207 = vmatpush1.xpose.msra.mxu0 0.0
      %1208 = vmatprep.subr.mxu0 0.0
      %1209 = vmatpush1.xpose.msra.mxu0 0.0
      %1210 = vmatprep.subr.mxu0 0.0
      %1211 = vmatpush1.xpose.msra.mxu0 0.0
      %1212 = vmatprep.subr.mxu0 0.0
      %1213 = vmatpush1.xpose.msra.mxu0 0.0
      %1214 = vmatprep.mubr.f32.mxu0 0.0
      %1215 = vmatmul.mubr.f32.gmra.mrb[0].mxu0 %v1146
      %v1216 = vpop.f32.mrb[0].mxu0
      %v1217 = vadd.f32 0.0, %v1216
      %v1218 = vpop.f32.mrb[0].mxu0
      %1219 = vdwg.mxu0
      %v1220 = vmul.f32 %v1217, 0.35355338
      %v1221 = vsel %vm645, %v1220, -inf
      %1222 = vmax.xlane.f32.xlu0 %v1221
      %v1223 = vpop.xlane.xlu0 %1222
      %v1224 = vsub.f32 %v1220, %v1223
      %v1225 = vmul.f32 %v1224, 1.442695
      %v1226 = vpow.pop %v1225
      %v1227 = vsel %vm645, %v1226, 0.0
      %1228 = vadd.xlane.f32.xlu0 %v1227
      %v1229 = vpop.xlane.xlu0 %1228
      %v1230 = vrcp.pop %v1229
      %v1231 = vmul.f32 %v1226, %v1230
      %1232 = vrot.lane.b32.xlu0 %v537, 72
      %v1233 = vpop.permute.xlu0 %1232
      %v1236 = vsel %vm645, %v1231, 0
      %1238 = vmatprep.subr.mxu0 0.0
      %1239 = vmatpush1.msra.mxu0 %v1233
      %1240 = vmatprep.subr.mxu0 0.0
      %1241 = vmatpush1.msra.mxu0 0.0
      %1242 = vmatprep.subr.mxu0 0.0
      %1243 = vmatpush1.msra.mxu0 0.0
      %1244 = vmatprep.subr.mxu0 0.0
      %1245 = vmatpush1.msra.mxu0 0.0
      %1246 = vmatprep.subr.mxu0 0.0
      %1247 = vmatpush1.msra.mxu0 0.0
      %1248 = vmatprep.subr.mxu0 0.0
      %1249 = vmatpush1.msra.mxu0 0.0
      %1250 = vmatprep.subr.mxu0 0.0
      %1251 = vmatpush1.msra.mxu0 0.0
      %1252 = vmatprep.subr.mxu0 0.0
      %1253 = vmatpush1.msra.mxu0 0.0
      %1254 = vmatprep.subr.mxu0 0.0
      %1255 = vmatpush1.msra.mxu0 0.0
      %1256 = vmatprep.subr.mxu0 0.0
      %1257 = vmatpush1.msra.mxu0 0.0
      %1258 = vmatprep.subr.mxu0 0.0
      %1259 = vmatpush1.msra.mxu0 0.0
      %1260 = vmatprep.subr.mxu0 0.0
      %1261 = vmatpush1.msra.mxu0 0.0
      %1262 = vmatprep.subr.mxu0 0.0
      %1263 = vmatpush1.msra.mxu0 0.0
      %1264 = vmatprep.subr.mxu0 0.0
      %1265 = vmatpush1.msra.mxu0 0.0
      %1266 = vmatprep.subr.mxu0 0.0
      %1267 = vmatpush1.msra.mxu0 0.0
      %1268 = vmatprep.subr.mxu0 0.0
      %1269 = vmatpush1.msra.mxu0 0.0
      %1270 = vmatprep.subr.mxu0 0.0
      %1271 = vmatpush1.msra.mxu0 0.0
      %1272 = vmatprep.subr.mxu0 0.0
      %1273 = vmatpush1.msra.mxu0 0.0
      %1274 = vmatprep.subr.mxu0 0.0
      %1275 = vmatpush1.msra.mxu0 0.0
      %1276 = vmatprep.subr.mxu0 0.0
      %1277 = vmatpush1.msra.mxu0 0.0
      %1278 = vmatprep.subr.mxu0 0.0
      %1279 = vmatpush1.msra.mxu0 0.0
      %1280 = vmatprep.subr.mxu0 0.0
      %1281 = vmatpush1.msra.mxu0 0.0
      %1282 = vmatprep.subr.mxu0 0.0
      %1283 = vmatpush1.msra.mxu0 0.0
      %1284 = vmatprep.subr.mxu0 0.0
      %1285 = vmatpush1.msra.mxu0 0.0
      %1286 = vmatprep.subr.mxu0 0.0
      %1287 = vmatpush1.msra.mxu0 0.0
      %1288 = vmatprep.subr.mxu0 0.0
      %1289 = vmatpush1.msra.mxu0 0.0
      %1290 = vmatprep.subr.mxu0 0.0
      %1291 = vmatpush1.msra.mxu0 0.0
      %1292 = vmatprep.subr.mxu0 0.0
      %1293 = vmatpush1.msra.mxu0 0.0
      %1294 = vmatprep.subr.mxu0 0.0
      %1295 = vmatpush1.msra.mxu0 0.0
      %1296 = vmatprep.subr.mxu0 0.0
      %1297 = vmatpush1.msra.mxu0 0.0
      %1298 = vmatprep.subr.mxu0 0.0
      %1299 = vmatpush1.msra.mxu0 0.0
      %1300 = vmatprep.subr.mxu0 0.0
      %1301 = vmatpush1.msra.mxu0 0.0
      %1302 = vmatprep.mubr.f32.mxu0 0.0
      %1303 = vmatmul.mubr.f32.gmra.mrb[0].mxu0 %v1236
      %v1304 = vpop.f32.mrb[0].mxu0
      %v1305 = vadd.f32 0.0, %v1304
      %v1306 = vpop.f32.mrb[0].mxu0
      %1307 = vdwg.mxu0
      %1309 = vrot.lane.b32.xlu0 %v973, 8
      %v1310 = vpop.permute.xlu0 %1309
      %1313 = vrot.lane.b32.xlu0 %v1139, 16
      %v1314 = vpop.permute.xlu0 %1313
      %1317 = vrot.lane.b32.xlu0 %v1305, 24
      %v1318 = vpop.permute.xlu0 %1317
      %v1320 = vsel %vm645, %v807, %v1310
      %vm1321 = vcmask 130048
      %v1322 = vsel %vm1321, %v1320, %v1314
      %vm1323 = vcmask 195584
      %v1324 = vsel %vm1323, %v1322, %v1318
      %v1326 = vlaneseq
      %v1327 = vshrl.u32 %v1326, 7
      %v1328 = vsub.s32 0, %v1327
      %v1329 = vrot.slane %v550, %v1328
      %v1332 = vsel %vm466, %v1324, 0
      %1334 = vmatprep.subr.mxu0 0.0
      %1335 = vmatpush1.msra.mxu0 %v546
      %1336 = vmatprep.subr.mxu0 0.0
      %1337 = vmatpush1.msra.mxu0 %v547
      %1338 = vmatprep.subr.mxu0 0.0
      %1339 = vmatpush1.msra.mxu0 %v548
      %1340 = vmatprep.subr.mxu0 0.0
      %1341 = vmatpush1.msra.mxu0 %v549
      %1342 = vmatprep.subr.mxu0 0.0
      %1343 = vmatpush1.msra.mxu0 0.0
      %1344 = vmatprep.subr.mxu0 0.0
      %1345 = vmatpush1.msra.mxu0 0.0
      %1346 = vmatprep.subr.mxu0 0.0
      %1347 = vmatpush1.msra.mxu0 0.0
      %1348 = vmatprep.subr.mxu0 0.0
      %1349 = vmatpush1.msra.mxu0 0.0
      %1350 = vmatprep.subr.mxu0 0.0
      %1351 = vmatpush1.msra.mxu0 0.0
      %1352 = vmatprep.subr.mxu0 0.0
      %1353 = vmatpush1.msra.mxu0 0.0
      %1354 = vmatprep.subr.mxu0 0.0
      %1355 = vmatpush1.msra.mxu0 0.0
      %1356 = vmatprep.subr.mxu0 0.0
      %1357 = vmatpush1.msra.mxu0 0.0
      %1358 = vmatprep.subr.mxu0 0.0
      %1359 = vmatpush1.msra.mxu0 0.0
      %1360 = vmatprep.subr.mxu0 0.0
      %1361 = vmatpush1.msra.mxu0 0.0
      %1362 = vmatprep.subr.mxu0 0.0
      %1363 = vmatpush1.msra.mxu0 0.0
      %1364 = vmatprep.subr.mxu0 0.0
      %1365 = vmatpush1.msra.mxu0 0.0
      %1366 = vmatprep.subr.mxu0 0.0
      %1367 = vmatpush1.msra.mxu0 0.0
      %1368 = vmatprep.subr.mxu0 0.0
      %1369 = vmatpush1.msra.mxu0 0.0
      %1370 = vmatprep.subr.mxu0 0.0
      %1371 = vmatpush1.msra.mxu0 0.0
      %1372 = vmatprep.subr.mxu0 0.0
      %1373 = vmatpush1.msra.mxu0 0.0
      %1374 = vmatprep.subr.mxu0 0.0
      %1375 = vmatpush1.msra.mxu0 0.0
      %1376 = vmatprep.subr.mxu0 0.0
      %1377 = vmatpush1.msra.mxu0 0.0
      %1378 = vmatprep.subr.mxu0 0.0
      %1379 = vmatpush1.msra.mxu0 0.0
      %1380 = vmatprep.subr.mxu0 0.0
      %1381 = vmatpush1.msra.mxu0 0.0
      %1382 = vmatprep.subr.mxu0 0.0
      %1383 = vmatpush1.msra.mxu0 0.0
      %1384 = vmatprep.subr.mxu0 0.0
      %1385 = vmatpush1.msra.mxu0 0.0
      %1386 = vmatprep.subr.mxu0 0.0
      %1387 = vmatpush1.msra.mxu0 0.0
      %1388 = vmatprep.subr.mxu0 0.0
      %1389 = vmatpush1.msra.mxu0 0.0
      %1390 = vmatprep.subr.mxu0 0.0
      %1391 = vmatpush1.msra.mxu0 0.0
      %1392 = vmatprep.subr.mxu0 0.0
      %1393 = vmatpush1.msra.mxu0 0.0
      %1394 = vmatprep.subr.mxu0 0.0
      %1395 = vmatpush1.msra.mxu0 0.0
      %1396 = vmatprep.subr.mxu0 0.0
      %1397 = vmatpush1.msra.mxu0 0.0
      %1398 = vmatprep.mubr.f32.mxu0 0.0
      %1399 = vmatmul.mubr.f32.gmra.mrb[0].mxu0 %v1332
      %v1400 = vpop.f32.mrb[0].mxu0
      %v1401 = vadd.f32 %v1329, %v1400
      %v1402 = vpop.f32.mrb[0].mxu0
      %1403 = vdwg.mxu0
      %v1404 = vstv %s565
      %v1405 = vmul.f32 %v1404, %v1401
      %v1406 = vadd.f32 %v454, %v1405
      %v1408 = vlaneseq
      %v1409 = vshrl.u32 %v1408, 7
      %v1410 = vsub.s32 0, %v1409
      %v1411 = vrot.slane %v555, %v1410
      %v1414 = vsel %vm466, %v1406, 0
      %1416 = vmatprep.subr.mxu0 0.0
      %1417 = vmatpush1.msra.mxu0 %v551
      %1418 = vmatprep.subr.mxu0 0.0
      %1419 = vmatpush1.msra.mxu0 %v552
      %1420 = vmatprep.subr.mxu0 0.0
      %1421 = vmatpush1.msra.mxu0 %v553
      %1422 = vmatprep.subr.mxu0 0.0
      %1423 = vmatpush1.msra.mxu0 %v554
      %1424 = vmatprep.subr.mxu0 0.0
      %1425 = vmatpush1.msra.mxu0 0.0
      %1426 = vmatprep.subr.mxu0 0.0
      %1427 = vmatpush1.msra.mxu0 0.0
      %1428 = vmatprep.subr.mxu0 0.0
      %1429 = vmatpush1.msra.mxu0 0.0
      %1430 = vmatprep.subr.mxu0 0.0
      %1431 = vmatpush1.msra.mxu0 0.0
      %1432 = vmatprep.subr.mxu0 0.0
      %1433 = vmatpush1.msra.mxu0 0.0
      %1434 = vmatprep.subr.mxu0 0.0
      %1435 = vmatpush1.msra.mxu0 0.0
      %1436 = vmatprep.subr.mxu0 0.0
      %1437 = vmatpush1.msra.mxu0 0.0
      %1438 = vmatprep.subr.mxu0 0.0
      %1439 = vmatpush1.msra.mxu0 0.0
      %1440 = vmatprep.subr.mxu0 0.0
      %1441 = vmatpush1.msra.mxu0 0.0
      %1442 = vmatprep.subr.mxu0 0.0
      %1443 = vmatpush1.msra.mxu0 0.0
      %1444 = vmatprep.subr.mxu0 0.0
      %1445 = vmatpush1.msra.mxu0 0.0
      %1446 = vmatprep.subr.mxu0 0.0
      %1447 = vmatpush1.msra.mxu0 0.0
      %1448 = vmatprep.subr.mxu0 0.0
      %1449 = vmatpush1.msra.mxu0 0.0
      %1450 = vmatprep.subr.mxu0 0.0
      %1451 = vmatpush1.msra.mxu0 0.0
      %1452 = vmatprep.subr.mxu0 0.0
      %1453 = vmatpush1.msra.mxu0 0.0
      %1454 = vmatprep.subr.mxu0 0.0
      %1455 = vmatpush1.msra.mxu0 0.0
      %1456 = vmatprep.subr.mxu0 0.0
      %1457 = vmatpush1.msra.mxu0 0.0
      %1458 = vmatprep.subr.mxu0 0.0
      %1459 = vmatpush1.msra.mxu0 0.0
      %1460 = vmatprep.subr.mxu0 0.0
      %1461 = vmatpush1.msra.mxu0 0.0
      %1462 = vmatprep.subr.mxu0 0.0
      %1463 = vmatpush1.msra.mxu0 0.0
      %1464 = vmatprep.subr.mxu0 0.0
      %1465 = vmatpush1.msra.mxu0 0.0
      %1466 = vmatprep.subr.mxu0 0.0
      %1467 = vmatpush1.msra.mxu0 0.0
      %1468 = vmatprep.subr.mxu0 0.0
      %1469 = vmatpush1.msra.mxu0 0.0
      %1470 = vmatprep.subr.mxu0 0.0
      %1471 = vmatpush1.msra.mxu0 0.0
      %1472 = vmatprep.subr.mxu0 0.0
      %1473 = vmatpush1.msra.mxu0 0.0
      %1474 = vmatprep.subr.mxu0 0.0
      %1475 = vmatpush1.msra.mxu0 0.0
      %1476 = vmatprep.subr.mxu0 0.0
      %1477 = vmatpush1.msra.mxu0 0.0
      %1478 = vmatprep.subr.mxu0 0.0
      %1479 = vmatpush1.msra.mxu0 0.0
      %1480 = vmatprep.mubr.f32.mxu0 0.0
      %1481 = vmatmul.mubr.f32.gmra.mrb[0].mxu0 %v1414
      %v1482 = vpop.f32.mrb[0].mxu0
      %v1483 = vadd.f32 %v1411, %v1482
      %v1484 = vpop.f32.mrb[0].mxu0
      %1485 = vdwg.mxu0
      %v1486 = vmax.f32 %v1483, 0.0
      %v1488 = vlaneseq
      %v1489 = vshrl.u32 %v1488, 7
      %v1490 = vsub.s32 0, %v1489
      %v1491 = vrot.slane %v564, %v1490
      %vm1493 = vcmask 523264
      %v1495 = vsel %vm1493, %v1486, 0
      %1497 = vmatprep.subr.mxu0 0.0
      %1498 = vmatpush1.msra.mxu0 %v556
      %1499 = vmatprep.subr.mxu0 0.0
      %1500 = vmatpush1.msra.mxu0 %v557
      %1501 = vmatprep.subr.mxu0 0.0
      %1502 = vmatpush1.msra.mxu0 %v558
      %1503 = vmatprep.subr.mxu0 0.0
      %1504 = vmatpush1.msra.mxu0 %v559
      %1505 = vmatprep.subr.mxu0 0.0
      %1506 = vmatpush1.msra.mxu0 %v560
      %1507 = vmatprep.subr.mxu0 0.0
      %1508 = vmatpush1.msra.mxu0 %v561
      %1509 = vmatprep.subr.mxu0 0.0
      %1510 = vmatpush1.msra.mxu0 %v562
      %1511 = vmatprep.subr.mxu0 0.0
      %1512 = vmatpush1.msra.mxu0 %v563
      %1513 = vmatprep.subr.mxu0 0.0
      %1514 = vmatpush1.msra.mxu0 0.0
      %1515 = vmatprep.subr.mxu0 0.0
      %1516 = vmatpush1.msra.mxu0 0.0
      %1517 = vmatprep.subr.mxu0 0.0
      %1518 = vmatpush1.msra.mxu0 0.0
      %1519 = vmatprep.subr.mxu0 0.0
      %1520 = vmatpush1.msra.mxu0 0.0
      %1521 = vmatprep.subr.mxu0 0.0
      %1522 = vmatpush1.msra.mxu0 0.0
      %1523 = vmatprep.subr.mxu0 0.0
      %1524 = vmatpush1.msra.mxu0 0.0
      %1525 = vmatprep.subr.mxu0 0.0
      %1526 = vmatpush1.msra.mxu0 0.0
      %1527 = vmatprep.subr.mxu0 0.0
      %1528 = vmatpush1.msra.mxu0 0.0
      %1529 = vmatprep.subr.mxu0 0.0
      %1530 = vmatpush1.msra.mxu0 0.0
      %1531 = vmatprep.subr.mxu0 0.0
      %1532 = vmatpush1.msra.mxu0 0.0
      %1533 = vmatprep.subr.mxu0 0.0
      %1534 = vmatpush1.msra.mxu0 0.0
      %1535 = vmatprep.subr.mxu0 0.0
      %1536 = vmatpush1.msra.mxu0 0.0
      %1537 = vmatprep.subr.mxu0 0.0
      %1538 = vmatpush1.msra.mxu0 0.0
      %1539 = vmatprep.subr.mxu0 0.0
      %1540 = vmatpush1.msra.mxu0 0.0
      %1541 = vmatprep.subr.mxu0 0.0
      %1542 = vmatpush1.msra.mxu0 0.0
      %1543 = vmatprep.subr.mxu0 0.0
      %1544 = vmatpush1.msra.mxu0 0.0
      %1545 = vmatprep.subr.mxu0 0.0
      %1546 = vmatpush1.msra.mxu0 0.0
      %1547 = vmatprep.subr.mxu0 0.0
      %1548 = vmatpush1.msra.mxu0 0.0
      %1549 = vmatprep.subr.mxu0 0.0
      %1550 = vmatpush1.msra.mxu0 0.0
      %1551 = vmatprep.subr.mxu0 0.0
      %1552 = vmatpush1.msra.mxu0 0.0
      %1553 = vmatprep.subr.mxu0 0.0
      %1554 = vmatpush1.msra.mxu0 0.0
      %1555 = vmatprep.subr.mxu0 0.0
      %1556 = vmatpush1.msra.mxu0 0.0
      %1557 = vmatprep.subr.mxu0 0.0
      %1558 = vmatpush1.msra.mxu0 0.0
      %1559 = vmatprep.subr.mxu0 0.0
      %1560 = vmatpush1.msra.mxu0 0.0
      %1561 = vmatprep.mubr.f32.mxu0 0.0
      %1562 = vmatmul.mubr.f32.gmra.mrb[0].mxu0 %v1495
      %v1563 = vpop.f32.mrb[0].mxu0
      %v1564 = vadd.f32 %v1491, %v1563
      %v1565 = vpop.f32.mrb[0].mxu0
      %1566 = vdwg.mxu0
      %v1567 = vmul.f32 %v1404, %v1564
      %v1568 = vadd.f32 %v1406, %v1567
      %1569 = vst.msk [vmem:[%s453] sm:$0xff] %vm466, %v1568
      %p1570 = scmp.lt.s32.totalorder %s25, 1
      %s1571 = scalar_select %p1570, %s25, 1
      %s1572 = smul.addr %s1571, 8
      %s1573 = scalar_lea.vmem %s13, %s1572
      // Predicated region
      $region73: #{unet_forward.4} parent=71 // pred_check
        %p1574 = pneg %p326
      $region74: #{unet_forward.4} parent=71 // pred_check_branch
        %1576 = sbr.rel (%p1574) target = $region76
      $region75: #{unet_forward.4} parent=71 // pred_region
        _
      $region76: #{unet_forward.4} parent=71 // pred_fallthru
        _
    $region72: #{unet_forward.4} parent=5 // pred_fallthru
      _
    %p1577 = scmp.le.s32.totalorder 2, %s20
    // Predicated region
    $region77: #{unet_forward.4} parent=5 // pred_check
      %p1578 = pneg %p1577
    $region78: #{unet_forward.4} parent=5 // pred_check_branch
      %1580 = sbr.rel (%p1578) target = $region80
    $region79: #{unet_forward.4} parent=5 // pred_region
      %s1581 = ssub.s32 %s20, 2
      // Predicated region
      $region81: #{unet_forward.4} parent=79 // pred_check
        %p1582 = pneg %p332
      $region82: #{unet_forward.4} parent=79 // pred_check_branch
        %1584 = sbr.rel (%p1582) target = $region84
      $region83: #{unet_forward.4} parent=79 // pred_region
        %p1585 = scmp.lt.s32.totalorder %s26, 1
        %s1586 = scalar_select %p1585, %s26, 1
        %s1587 = smul.addr %s1586, 8
        %s1588 = scalar_lea.vmem %s13, %s1587
      $region84: #{unet_forward.4} parent=79 // pred_fallthru
        _
    $region80: #{unet_forward.4} parent=5 // pred_fallthru
      _
  $region6: #{unet_forward.4} parent=0 // loop_footer
    %s24 = sadd.s32 1, %s20
  $region7: #{unet_forward.4} parent=0 // loop_footer_branch
    %19 = sbr.rel target = $region3
  $region8: #{unet_forward.4} parent=0 // loop_exit
    _

</llo_original>
